<compile_context>
chip_gen: v6e
topology: v6e:2x2x1
jax: 0.10.0
libtpu: 0.0.40
codegen_flags: <defaults>
</compile_context>

<pallas_src>
import functools

import jax
import jax.numpy as jnp
from jax.experimental import pallas as pl
from jax.experimental.pallas import tpu as pltpu


# ----------------------------------------------------------------------------
# One 3x3 / stride-1 / zero-pad-1 / bias-free conv on a flattened channel-major
# slab, as a single MXU matmul with the taps folded into the contraction dim.
# ----------------------------------------------------------------------------
def _conv3x3_on_slab(x_bf16, w_ref, *, height, width, col_idx):
    """x_bf16: (Cin, H*W) bf16; w_ref: (Cout, 9*Cin) bf16 ref (K = kh, kw, ci);
    col_idx: (1, H*W) int32 lane-position % width.  Returns (Cout, H*W) f32."""
    cin, m = x_bf16.shape
    # Zero-extend by (width+1) lanes on each side: a shift of the flat spatial
    # index by dy*width + dx then reads zeros for the dy = +/-1 halo rows at
    # the image top / bottom automatically.
    zpad = jnp.zeros((cin, width + 1), x_bf16.dtype)
    xext = jnp.concatenate([zpad, x_bf16, zpad], axis=1)   # (Cin, M + 2W + 2)

    taps = []
    for dy in (-1, 0, 1):                       # kh - 1
        for dx in (-1, 0, 1):                   # kw - 1
            off = (width + 1) + dy * width + dx
            t = xext[:, off:off + m]            # value at p = x_flat[p + dy*W + dx]
            # Mask column wrap-around across rows of the flattened layout.
            if dx == -1:
                t = jnp.where(col_idx != 0, t, jnp.zeros_like(t))
            elif dx == 1:
                t = jnp.where(col_idx != width - 1, t, jnp.zeros_like(t))
            taps.append(t)
    patches = jnp.concatenate(taps, axis=0)     # (9*Cin, M): K-folded im2col in VMEM
    # One deep MXU matmul: (Cout, 9*Cin) @ (9*Cin, M) -> (Cout, M), f32 acc.
    return jnp.dot(w_ref[...], patches, preferred_element_type=jnp.float32)


# ----------------------------------------------------------------------------
# Fused ResBlock kernel: operates on one (1, C, H*W) channel-major tile.
# ----------------------------------------------------------------------------
def _resblock_kernel(x_ref, w1_ref, w2_ref, o_ref, *, height, width, neg_slope):
    m = height * width
    col_idx = jax.lax.broadcasted_iota(jnp.int32, (1, m), 1) % width

    x_f32 = x_ref[0].astype(jnp.float32)                    # (C, M) identity
    lrelu = lambda v: jnp.where(v >= 0, v, jnp.float32(neg_slope) * v)

    # conv1 + LeakyReLU (intermediate stays in VMEM, never touches HBM)
    h = _conv3x3_on_slab(x_f32.astype(jnp.bfloat16), w1_ref,
                         height=height, width=width, col_idx=col_idx)
    h = lrelu(h)
    # conv2 + residual add (f32) + LeakyReLU
    out = _conv3x3_on_slab(h.astype(jnp.bfloat16), w2_ref,
                           height=height, width=width, col_idx=col_idx)
    out = lrelu(out + x_f32)
    o_ref[0] = out.astype(o_ref.dtype)


def _weights_to_mat(w_oihw):
    """PyTorch OIHW (Cout, Cin, 3, 3) -> (Cout, 9*Cin) bf16, K ordered (kh, kw, ci)."""
    cout, cin, kh, kw = w_oihw.shape
    return (jnp.transpose(w_oihw, (0, 2, 3, 1))
            .reshape(cout, kh * kw * cin).astype(jnp.bfloat16))


# ----------------------------------------------------------------------------
# ResBlock forward:  out = lrelu( conv2( lrelu( conv1(x) ) ) + x ), NCHW in/out.
# ----------------------------------------------------------------------------
def resblock_forward(params, x_nchw):
    n, c, h, w = x_nchw.shape
    m = h * w
    w1 = _weights_to_mat(params["w1"])
    w2 = _weights_to_mat(params["w2"])
    x_flat = x_nchw.reshape(n, c, m)     # free: NCHW is already channel-major

    # TODO(synk): for large images whose fused per-step working set exceeds the
    # v7x ~28 MiB scoped-VMEM budget, add a row-tiled (halo-recompute) grid axis.
    out_flat = pl.pallas_call(
        functools.partial(_resblock_kernel, height=h, width=w, neg_slope=0.1),
        out_shape=jax.ShapeDtypeStruct((n, c, m), x_nchw.dtype),
        grid=(n,),
        in_specs=[
            pl.BlockSpec((1, c, m), lambda i: (i, 0, 0)),
            pl.BlockSpec((c, 9 * c), lambda i: (0, 0)),
            pl.BlockSpec((c, 9 * c), lambda i: (0, 0)),
        ],
        out_specs=pl.BlockSpec((1, c, m), lambda i: (i, 0, 0)),
        compiler_params=pltpu.CompilerParams(
            dimension_semantics=("parallel",)),
    )(x_flat, w1, w2)
    return out_flat.reshape(n, c, h, w)


# Pure-JAX reference (f32) for a numerical sanity check.
def _resblock_reference(params, x_nchw):
    def conv(inp, w):
        return jax.lax.conv_general_dilated(
            inp, w, (1, 1), ((1, 1), (1, 1)),
            dimension_numbers=("NCHW", "OIHW", "NCHW"))

    lrelu = lambda t: jnp.where(t >= 0, t, 0.1 * t)
    y = lrelu(conv(x_nchw, params["w1"]))
    y = conv(y, params["w2"]) + x_nchw
    return lrelu(y)


if __name__ == "__main__":
    key = jax.random.PRNGKey(0)

    # Small shapes consistent with the module: batch=2, nf=32, spatial=32.
    N, nf, H, W = 2, 32, 32, 32

    k1, k2, kx = jax.random.split(key, 3)
    bound = 1.0 / (nf * 9) ** 0.5          # PyTorch Conv2d default init scale
    # Weights kept in PyTorch OIHW layout: (Cout, Cin, 3, 3).
    w1 = jax.random.uniform(k1, (nf, nf, 3, 3), jnp.float32, -bound, bound)
    w2 = jax.random.uniform(k2, (nf, nf, 3, 3), jnp.float32, -bound, bound)
    params = {"w1": w1, "w2": w2}

    x = jax.random.normal(kx, (N, nf, H, W), jnp.float32)

    fwd = jax.jit(resblock_forward)
    out = jax.block_until_ready(fwd(params, x))

    assert out.shape == (N, nf, H, W)
    assert bool(jnp.all(jnp.isfinite(out)))

    # Numerical check vs pure-JAX reference (tolerance loose: bf16 MXU operands).
    ref = jax.block_until_ready(_resblock_reference(params, x))
    err = float(jnp.max(jnp.abs(out - ref)))
    assert err < 0.1, f"max abs error vs reference: {err}"

    print("KERNEL_OK")
</pallas_src>

<mosaic_0001>
module attributes {stable_mosaic.version = 11 : i64} {
  func.func @_resblock_kernel(%arg0: i32, %arg1: memref<1x32x1024xf32, #tpu.memory_space<vmem>>, %arg2: memref<32x288xbf16, #tpu.memory_space<vmem>>, %arg3: memref<32x288xbf16, #tpu.memory_space<vmem>>, %arg4: memref<1x32x1024xf32, #tpu.memory_space<vmem>>) attributes {dimension_semantics = [#tpu.dimension_semantics<parallel>], iteration_bounds = array<i64: 2>, scalar_prefetch = 0 : i64, scratch_operands = 0 : i64, tpu.core_type = #tpu.core_type<tc>, window_params = [{transform_indices = @transform_0, window_bounds = array<i64: 1, 32, 1024>}, {pipeline_mode = #tpu.pipeline_mode<synchronous>, transform_indices = @transform_1, window_bounds = array<i64: 32, 288>}, {pipeline_mode = #tpu.pipeline_mode<synchronous>, transform_indices = @transform_2, window_bounds = array<i64: 32, 288>}, {transform_indices = @transform_3, window_bounds = array<i64: 1, 32, 1024>}]} {
    %0 = tpu.iota {dimensions = array<i32: 1>} : vector<1x1024xi32>
    %c32_i32 = arith.constant 32 : i32
    %c0_i32 = arith.constant 0 : i32
    %1 = arith.cmpi eq, %c32_i32, %c0_i32 : i32
    %c1_i32 = arith.constant 1 : i32
    %2 = arith.select %1, %c1_i32, %c32_i32 : i32
    %3 = vector.broadcast %2 : i32 to vector<1x1024xi32>
    %4 = arith.remsi %0, %3 : vector<1x1024xi32>
    %c0_i32_0 = arith.constant 0 : i32
    %5 = vector.broadcast %c0_i32_0 : i32 to vector<1x1024xi32>
    %6 = arith.cmpi ne, %4, %5 : vector<1x1024xi32>
    %c0_i32_1 = arith.constant 0 : i32
    %7 = vector.broadcast %c0_i32_1 : i32 to vector<1x1024xi32>
    %8 = arith.cmpi slt, %4, %7 : vector<1x1024xi32>
    %c0_i32_2 = arith.constant 0 : i32
    %9 = arith.cmpi slt, %2, %c0_i32_2 : i32
    %10 = vector.broadcast %9 : i1 to vector<1x1024xi1>
    %11 = vector.broadcast %10 : vector<1x1024xi1> to vector<1x1024xi1>
    %12 = arith.xori %8, %11 : vector<1x1024xi1>
    %13 = arith.andi %12, %6 : vector<1x1024xi1>
    %14 = vector.broadcast %2 : i32 to vector<1x1024xi32>
    %15 = arith.addi %4, %14 : vector<1x1024xi32>
    %16 = arith.select %13, %15, %4 : vector<1x1024xi1>, vector<1x1024xi32>
    %c0 = arith.constant 0 : index
    %c0_3 = arith.constant 0 : index
    %c0_4 = arith.constant 0 : index
    %17 = vector.load %arg1[%c0, %c0_3, %c0_4] : memref<1x32x1024xf32, #tpu.memory_space<vmem>>, vector<1x32x1024xf32>
    %18 = vector.shape_cast %17 : vector<1x32x1024xf32> to vector<32x1024xf32>
    %19 = arith.truncf %18 : vector<32x1024xf32> to vector<32x1024xbf16>
    %cst = arith.constant 0.000000e+00 : bf16
    %20 = vector.broadcast %cst : bf16 to vector<32x33xbf16>
    %21 = tpu.concatenate %20, %19, %20 in 1 : vector<32x33xbf16>, vector<32x1024xbf16>, vector<32x33xbf16> -> vector<32x1090xbf16>
    %22 = vector.extract_strided_slice %21 {offsets = [0, 0], sizes = [32, 1024], strides = [1, 1]} : vector<32x1090xbf16> to vector<32x1024xbf16>
    %c0_i32_5 = arith.constant 0 : i32
    %23 = vector.broadcast %c0_i32_5 : i32 to vector<1x1024xi32>
    %24 = arith.cmpi ne, %16, %23 : vector<1x1024xi32>
    %cst_6 = arith.constant 0.000000e+00 : bf16
    %25 = vector.broadcast %cst_6 : bf16 to vector<32x1024xbf16>
    %26 = vector.shape_cast %24 : vector<1x1024xi1> to vector<1x1024xi1>
    %27 = vector.broadcast %26 : vector<1x1024xi1> to vector<32x1024xi1>
    %28 = arith.select %27, %22, %25 : vector<32x1024xi1>, vector<32x1024xbf16>
    %29 = vector.extract_strided_slice %21 {offsets = [0, 1], sizes = [32, 1024], strides = [1, 1]} : vector<32x1090xbf16> to vector<32x1024xbf16>
    %30 = vector.extract_strided_slice %21 {offsets = [0, 2], sizes = [32, 1024], strides = [1, 1]} : vector<32x1090xbf16> to vector<32x1024xbf16>
    %c31_i32 = arith.constant 31 : i32
    %31 = vector.broadcast %c31_i32 : i32 to vector<1x1024xi32>
    %32 = arith.cmpi ne, %16, %31 : vector<1x1024xi32>
    %cst_7 = arith.constant 0.000000e+00 : bf16
    %33 = vector.broadcast %cst_7 : bf16 to vector<32x1024xbf16>
    %34 = vector.shape_cast %32 : vector<1x1024xi1> to vector<1x1024xi1>
    %35 = vector.broadcast %34 : vector<1x1024xi1> to vector<32x1024xi1>
    %36 = arith.select %35, %30, %33 : vector<32x1024xi1>, vector<32x1024xbf16>
    %37 = vector.extract_strided_slice %21 {offsets = [0, 32], sizes = [32, 1024], strides = [1, 1]} : vector<32x1090xbf16> to vector<32x1024xbf16>
    %c0_i32_8 = arith.constant 0 : i32
    %38 = vector.broadcast %c0_i32_8 : i32 to vector<1x1024xi32>
    %39 = arith.cmpi ne, %16, %38 : vector<1x1024xi32>
    %cst_9 = arith.constant 0.000000e+00 : bf16
    %40 = vector.broadcast %cst_9 : bf16 to vector<32x1024xbf16>
    %41 = vector.shape_cast %39 : vector<1x1024xi1> to vector<1x1024xi1>
    %42 = vector.broadcast %41 : vector<1x1024xi1> to vector<32x1024xi1>
    %43 = arith.select %42, %37, %40 : vector<32x1024xi1>, vector<32x1024xbf16>
    %44 = vector.extract_strided_slice %21 {offsets = [0, 33], sizes = [32, 1024], strides = [1, 1]} : vector<32x1090xbf16> to vector<32x1024xbf16>
    %45 = vector.extract_strided_slice %21 {offsets = [0, 34], sizes = [32, 1024], strides = [1, 1]} : vector<32x1090xbf16> to vector<32x1024xbf16>
    %c31_i32_10 = arith.constant 31 : i32
    %46 = vector.broadcast %c31_i32_10 : i32 to vector<1x1024xi32>
    %47 = arith.cmpi ne, %16, %46 : vector<1x1024xi32>
    %cst_11 = arith.constant 0.000000e+00 : bf16
    %48 = vector.broadcast %cst_11 : bf16 to vector<32x1024xbf16>
    %49 = vector.shape_cast %47 : vector<1x1024xi1> to vector<1x1024xi1>
    %50 = vector.broadcast %49 : vector<1x1024xi1> to vector<32x1024xi1>
    %51 = arith.select %50, %45, %48 : vector<32x1024xi1>, vector<32x1024xbf16>
    %52 = vector.extract_strided_slice %21 {offsets = [0, 64], sizes = [32, 1024], strides = [1, 1]} : vector<32x1090xbf16> to vector<32x1024xbf16>
    %c0_i32_12 = arith.constant 0 : i32
    %53 = vector.broadcast %c0_i32_12 : i32 to vector<1x1024xi32>
    %54 = arith.cmpi ne, %16, %53 : vector<1x1024xi32>
    %cst_13 = arith.constant 0.000000e+00 : bf16
    %55 = vector.broadcast %cst_13 : bf16 to vector<32x1024xbf16>
    %56 = vector.shape_cast %54 : vector<1x1024xi1> to vector<1x1024xi1>
    %57 = vector.broadcast %56 : vector<1x1024xi1> to vector<32x1024xi1>
    %58 = arith.select %57, %52, %55 : vector<32x1024xi1>, vector<32x1024xbf16>
    %59 = vector.extract_strided_slice %21 {offsets = [0, 65], sizes = [32, 1024], strides = [1, 1]} : vector<32x1090xbf16> to vector<32x1024xbf16>
    %60 = vector.extract_strided_slice %21 {offsets = [0, 66], sizes = [32, 1024], strides = [1, 1]} : vector<32x1090xbf16> to vector<32x1024xbf16>
    %c31_i32_14 = arith.constant 31 : i32
    %61 = vector.broadcast %c31_i32_14 : i32 to vector<1x1024xi32>
    %62 = arith.cmpi ne, %16, %61 : vector<1x1024xi32>
    %cst_15 = arith.constant 0.000000e+00 : bf16
    %63 = vector.broadcast %cst_15 : bf16 to vector<32x1024xbf16>
    %64 = vector.shape_cast %62 : vector<1x1024xi1> to vector<1x1024xi1>
    %65 = vector.broadcast %64 : vector<1x1024xi1> to vector<32x1024xi1>
    %66 = arith.select %65, %60, %63 : vector<32x1024xi1>, vector<32x1024xbf16>
    %67 = tpu.concatenate %28, %29, %36, %43, %44, %51, %58, %59, %66 in 0 : vector<32x1024xbf16>, vector<32x1024xbf16>, vector<32x1024xbf16>, vector<32x1024xbf16>, vector<32x1024xbf16>, vector<32x1024xbf16>, vector<32x1024xbf16>, vector<32x1024xbf16>, vector<32x1024xbf16> -> vector<288x1024xbf16>
    %c0_16 = arith.constant 0 : index
    %c0_17 = arith.constant 0 : index
    %68 = vector.load %arg2[%c0_16, %c0_17] : memref<32x288xbf16, #tpu.memory_space<vmem>>, vector<32x288xbf16>
    %cst_18 = arith.constant dense<0.000000e+00> : vector<32x1024xf32>
    %69 = tpu.matmul %68, %67, %cst_18 {dimension_numbers = #tpu.dot_dimension_numbers<[1], [0], [0], [1], [0, 0, 1, 1], [], []>} : vector<32x288xbf16>, vector<288x1024xbf16>, vector<32x1024xf32> -> vector<32x1024xf32>
    %cst_19 = arith.constant 0.000000e+00 : f32
    %70 = vector.broadcast %cst_19 : f32 to vector<32x1024xf32>
    %71 = arith.cmpf oge, %69, %70 : vector<32x1024xf32>
    %cst_20 = arith.constant 1.000000e-01 : f32
    %72 = vector.broadcast %cst_20 : f32 to vector<32x1024xf32>
    %73 = arith.mulf %72, %69 : vector<32x1024xf32>
    %74 = arith.select %71, %69, %73 : vector<32x1024xi1>, vector<32x1024xf32>
    %75 = arith.truncf %74 : vector<32x1024xf32> to vector<32x1024xbf16>
    %cst_21 = arith.constant 0.000000e+00 : bf16
    %76 = vector.broadcast %cst_21 : bf16 to vector<32x33xbf16>
    %77 = tpu.concatenate %76, %75, %76 in 1 : vector<32x33xbf16>, vector<32x1024xbf16>, vector<32x33xbf16> -> vector<32x1090xbf16>
    %78 = vector.extract_strided_slice %77 {offsets = [0, 0], sizes = [32, 1024], strides = [1, 1]} : vector<32x1090xbf16> to vector<32x1024xbf16>
    %c0_i32_22 = arith.constant 0 : i32
    %79 = vector.broadcast %c0_i32_22 : i32 to vector<1x1024xi32>
    %80 = arith.cmpi ne, %16, %79 : vector<1x1024xi32>
    %cst_23 = arith.constant 0.000000e+00 : bf16
    %81 = vector.broadcast %cst_23 : bf16 to vector<32x1024xbf16>
    %82 = vector.shape_cast %80 : vector<1x1024xi1> to vector<1x1024xi1>
    %83 = vector.broadcast %82 : vector<1x1024xi1> to vector<32x1024xi1>
    %84 = arith.select %83, %78, %81 : vector<32x1024xi1>, vector<32x1024xbf16>
    %85 = vector.extract_strided_slice %77 {offsets = [0, 1], sizes = [32, 1024], strides = [1, 1]} : vector<32x1090xbf16> to vector<32x1024xbf16>
    %86 = vector.extract_strided_slice %77 {offsets = [0, 2], sizes = [32, 1024], strides = [1, 1]} : vector<32x1090xbf16> to vector<32x1024xbf16>
    %c31_i32_24 = arith.constant 31 : i32
    %87 = vector.broadcast %c31_i32_24 : i32 to vector<1x1024xi32>
    %88 = arith.cmpi ne, %16, %87 : vector<1x1024xi32>
    %cst_25 = arith.constant 0.000000e+00 : bf16
    %89 = vector.broadcast %cst_25 : bf16 to vector<32x1024xbf16>
    %90 = vector.shape_cast %88 : vector<1x1024xi1> to vector<1x1024xi1>
    %91 = vector.broadcast %90 : vector<1x1024xi1> to vector<32x1024xi1>
    %92 = arith.select %91, %86, %89 : vector<32x1024xi1>, vector<32x1024xbf16>
    %93 = vector.extract_strided_slice %77 {offsets = [0, 32], sizes = [32, 1024], strides = [1, 1]} : vector<32x1090xbf16> to vector<32x1024xbf16>
    %c0_i32_26 = arith.constant 0 : i32
    %94 = vector.broadcast %c0_i32_26 : i32 to vector<1x1024xi32>
    %95 = arith.cmpi ne, %16, %94 : vector<1x1024xi32>
    %cst_27 = arith.constant 0.000000e+00 : bf16
    %96 = vector.broadcast %cst_27 : bf16 to vector<32x1024xbf16>
    %97 = vector.shape_cast %95 : vector<1x1024xi1> to vector<1x1024xi1>
    %98 = vector.broadcast %97 : vector<1x1024xi1> to vector<32x1024xi1>
    %99 = arith.select %98, %93, %96 : vector<32x1024xi1>, vector<32x1024xbf16>
    %100 = vector.extract_strided_slice %77 {offsets = [0, 33], sizes = [32, 1024], strides = [1, 1]} : vector<32x1090xbf16> to vector<32x1024xbf16>
    %101 = vector.extract_strided_slice %77 {offsets = [0, 34], sizes = [32, 1024], strides = [1, 1]} : vector<32x1090xbf16> to vector<32x1024xbf16>
    %c31_i32_28 = arith.constant 31 : i32
    %102 = vector.broadcast %c31_i32_28 : i32 to vector<1x1024xi32>
    %103 = arith.cmpi ne, %16, %102 : vector<1x1024xi32>
    %cst_29 = arith.constant 0.000000e+00 : bf16
    %104 = vector.broadcast %cst_29 : bf16 to vector<32x1024xbf16>
    %105 = vector.shape_cast %103 : vector<1x1024xi1> to vector<1x1024xi1>
    %106 = vector.broadcast %105 : vector<1x1024xi1> to vector<32x1024xi1>
    %107 = arith.select %106, %101, %104 : vector<32x1024xi1>, vector<32x1024xbf16>
    %108 = vector.extract_strided_slice %77 {offsets = [0, 64], sizes = [32, 1024], strides = [1, 1]} : vector<32x1090xbf16> to vector<32x1024xbf16>
    %c0_i32_30 = arith.constant 0 : i32
    %109 = vector.broadcast %c0_i32_30 : i32 to vector<1x1024xi32>
    %110 = arith.cmpi ne, %16, %109 : vector<1x1024xi32>
    %cst_31 = arith.constant 0.000000e+00 : bf16
    %111 = vector.broadcast %cst_31 : bf16 to vector<32x1024xbf16>
    %112 = vector.shape_cast %110 : vector<1x1024xi1> to vector<1x1024xi1>
    %113 = vector.broadcast %112 : vector<1x1024xi1> to vector<32x1024xi1>
    %114 = arith.select %113, %108, %111 : vector<32x1024xi1>, vector<32x1024xbf16>
    %115 = vector.extract_strided_slice %77 {offsets = [0, 65], sizes = [32, 1024], strides = [1, 1]} : vector<32x1090xbf16> to vector<32x1024xbf16>
    %116 = vector.extract_strided_slice %77 {offsets = [0, 66], sizes = [32, 1024], strides = [1, 1]} : vector<32x1090xbf16> to vector<32x1024xbf16>
    %c31_i32_32 = arith.constant 31 : i32
    %117 = vector.broadcast %c31_i32_32 : i32 to vector<1x1024xi32>
    %118 = arith.cmpi ne, %16, %117 : vector<1x1024xi32>
    %cst_33 = arith.constant 0.000000e+00 : bf16
    %119 = vector.broadcast %cst_33 : bf16 to vector<32x1024xbf16>
    %120 = vector.shape_cast %118 : vector<1x1024xi1> to vector<1x1024xi1>
    %121 = vector.broadcast %120 : vector<1x1024xi1> to vector<32x1024xi1>
    %122 = arith.select %121, %116, %119 : vector<32x1024xi1>, vector<32x1024xbf16>
    %123 = tpu.concatenate %84, %85, %92, %99, %100, %107, %114, %115, %122 in 0 : vector<32x1024xbf16>, vector<32x1024xbf16>, vector<32x1024xbf16>, vector<32x1024xbf16>, vector<32x1024xbf16>, vector<32x1024xbf16>, vector<32x1024xbf16>, vector<32x1024xbf16>, vector<32x1024xbf16> -> vector<288x1024xbf16>
    %c0_34 = arith.constant 0 : index
    %c0_35 = arith.constant 0 : index
    %124 = vector.load %arg3[%c0_34, %c0_35] : memref<32x288xbf16, #tpu.memory_space<vmem>>, vector<32x288xbf16>
    %cst_36 = arith.constant dense<0.000000e+00> : vector<32x1024xf32>
    %125 = tpu.matmul %124, %123, %cst_36 {dimension_numbers = #tpu.dot_dimension_numbers<[1], [0], [0], [1], [0, 0, 1, 1], [], []>} : vector<32x288xbf16>, vector<288x1024xbf16>, vector<32x1024xf32> -> vector<32x1024xf32>
    %126 = arith.addf %125, %18 : vector<32x1024xf32>
    %cst_37 = arith.constant 0.000000e+00 : f32
    %127 = vector.broadcast %cst_37 : f32 to vector<32x1024xf32>
    %128 = arith.cmpf oge, %126, %127 : vector<32x1024xf32>
    %cst_38 = arith.constant 1.000000e-01 : f32
    %129 = vector.broadcast %cst_38 : f32 to vector<32x1024xf32>
    %130 = arith.mulf %129, %126 : vector<32x1024xf32>
    %131 = arith.select %128, %126, %130 : vector<32x1024xi1>, vector<32x1024xf32>
    %c0_39 = arith.constant 0 : index
    %c0_40 = arith.constant 0 : index
    %c0_41 = arith.constant 0 : index
    %132 = vector.load %arg4[%c0_39, %c0_40, %c0_41] : memref<1x32x1024xf32, #tpu.memory_space<vmem>>, vector<1x32x1024xf32>
    %133 = vector.shape_cast %132 : vector<1x32x1024xf32> to vector<32x1024xf32>
    %134 = vector.shape_cast %131 : vector<32x1024xf32> to vector<1x32x1024xf32>
    tpu.vector_store %arg4[%c0_39, %c0_40, %c0_41], %134 {strides = array<i32>} : memref<1x32x1024xf32, #tpu.memory_space<vmem>>, vector<1x32x1024xf32>,
    return
  }
  func.func @transform_0(%arg0: i32) -> (i32, i32, i32) {
    %c0_i32 = arith.constant 0 : i32
    %c0_i32_0 = arith.constant 0 : i32
    %c0_i32_1 = arith.constant 0 : i32
    return %arg0, %c0_i32, %c0_i32_0 : i32, i32, i32
  }
  func.func @transform_1(%arg0: i32) -> (i32, i32) {
    %c0_i32 = arith.constant 0 : i32
    %c0_i32_0 = arith.constant 0 : i32
    %c0_i32_1 = arith.constant 0 : i32
    return %c0_i32, %c0_i32_0 : i32, i32
  }
  func.func @transform_2(%arg0: i32) -> (i32, i32) {
    %c0_i32 = arith.constant 0 : i32
    %c0_i32_0 = arith.constant 0 : i32
    %c0_i32_1 = arith.constant 0 : i32
    return %c0_i32, %c0_i32_0 : i32, i32
  }
  func.func @transform_3(%arg0: i32) -> (i32, i32, i32) {
    %c0_i32 = arith.constant 0 : i32
    %c0_i32_0 = arith.constant 0 : i32
    %c0_i32_1 = arith.constant 0 : i32
    return %arg0, %c0_i32, %c0_i32_0 : i32, i32, i32
  }
}

</mosaic_0001>

<llo_original>
// kernel: resblock_forward.1
$region0: #{resblock_forward.1}
  #allocation0 [shape = 'u32[]', space=smem, size = 0x4, offset = 0x4, fixed_abs, tag = 'smem constant byte address 0x4 - core index']
  #allocation1 [shape = 'u32[144,128]{1,0:T(1,128)}', space=vmem, size = 0x12000, scoped, tag = 'internal scratch']
  %s0 = inlined_call_operand.vmem [shape: f32[2,32,1024], index: 0, kind: input, shape index: {}]
  %s1 = inlined_call_operand.vmem [shape: bf16[32,288], index: 1, kind: input, shape index: {}]
  %s2 = inlined_call_operand.vmem [shape: bf16[32,288], index: 2, kind: input, shape index: {}]
  %s3 = inlined_call_operand.vmem [shape: f32[2,32,1024], index: 3, kind: output, shape index: {}]
  %s4 = sld [smem:[#allocation0]]
  $region45: #{resblock_forward.1} parent=0
    _
  %s6 = ssub.s32 1, %s4
  %s7 = scalar_select 0, %s6, %s4
  loop: start=0, step=1, limit=4
  $region2: #{resblock_forward.1} parent=0 // loop_pre_header
    _
  $region3: #{resblock_forward.1} parent=0 // loop_header
    %s9 = sphi 0, %s13
    %p10 = scmp.ge.s32.totalorder %s9, 4
    %s19 = sphi 0, %s21
    %s22 = sphi 0, %s19
    %s23 = sphi 0, %s22
    %s39 = sphi 0, %s23
    %s43 = sphi 0, %s43
    %s45 = sphi 0, %s43
    %s46 = sphi 0, %s45
    %s60 = sphi 0, %s46
    %s64 = sphi 0, %s64
    %s66 = sphi 0, %s64
    %s67 = sphi 0, %s66
    %s81 = sphi 0, %s67
    %s87 = sphi 0, %s89
    %s90 = sphi 0, %s87
    %s91 = sphi 0, %s90
    %s107 = sphi 0, %s91
  $region4: #{resblock_forward.1} parent=0 // loop_header_branch
    %12 = sbr.rel (%p10) target = $region8
  $region5: #{resblock_forward.1} parent=0 // loop_body
    %s14 = ssub.s32 %s9, 1
    %s15 = ssub.s32 %s9, 2
    %s16 = sadd.s32 %s9, 1
    %s17 = ssub.s32 %s9, %s16
    %p18 = scmp.eq.s32.totalorder %s17, 0
    %s20 = sadd.s32 %s19, 1
    %s21 = scalar_select %p18, %s19, %s20
    %p24 = pneg %p18
    %p25 = scmp.eq.s32.totalorder %s9, 1
    %p26 = por %p24, %p25
    %p27 = scmp.ne.s32.totalorder %s19, %s22
    %p28 = scmp.eq.s32.totalorder %s9, 0
    %p29 = por %p27, %p28
    %p30 = scmp.ne.s32.totalorder %s19, %s22
    %p31 = scmp.eq.s32.totalorder %s14, 1
    %p32 = por %p30, %p31
    %p33 = scmp.ne.s32.totalorder %s22, %s23
    %p34 = scmp.eq.s32.totalorder %s14, 0
    %p35 = por %p33, %p34
    %p36 = scmp.ne.s32.totalorder %s22, %s23
    %p37 = scmp.eq.s32.totalorder %s15, 1
    %p38 = por %p36, %p37
    %p40 = scmp.ne.s32.totalorder %s23, %s39
    %p41 = scmp.eq.s32.totalorder %s15, 0
    %p42 = por %p40, %p41
    %s44 = sadd.s32 %s43, 1
    %p47 = scmp.eq.s32.totalorder %s9, 1
    %p48 = scmp.ne.s32.totalorder %s43, %s45
    %p49 = scmp.eq.s32.totalorder %s9, 0
    %p50 = por %p48, %p49
    %p51 = scmp.ne.s32.totalorder %s43, %s45
    %p52 = scmp.eq.s32.totalorder %s14, 1
    %p53 = por %p51, %p52
    %p54 = scmp.ne.s32.totalorder %s45, %s46
    %p55 = scmp.eq.s32.totalorder %s14, 0
    %p56 = por %p54, %p55
    %p57 = scmp.ne.s32.totalorder %s45, %s46
    %p58 = scmp.eq.s32.totalorder %s15, 1
    %p59 = por %p57, %p58
    %p61 = scmp.ne.s32.totalorder %s46, %s60
    %p62 = scmp.eq.s32.totalorder %s15, 0
    %p63 = por %p61, %p62
    %s65 = sadd.s32 %s64, 1
    %p68 = scmp.eq.s32.totalorder %s9, 1
    %p69 = scmp.ne.s32.totalorder %s64, %s66
    %p70 = scmp.eq.s32.totalorder %s9, 0
    %p71 = por %p69, %p70
    %p72 = scmp.ne.s32.totalorder %s64, %s66
    %p73 = scmp.eq.s32.totalorder %s14, 1
    %p74 = por %p72, %p73
    %p75 = scmp.ne.s32.totalorder %s66, %s67
    %p76 = scmp.eq.s32.totalorder %s14, 0
    %p77 = por %p75, %p76
    %p78 = scmp.ne.s32.totalorder %s66, %s67
    %p79 = scmp.eq.s32.totalorder %s15, 1
    %p80 = por %p78, %p79
    %p82 = scmp.ne.s32.totalorder %s67, %s81
    %p83 = scmp.eq.s32.totalorder %s15, 0
    %p84 = por %p82, %p83
    %s85 = ssub.s32 %s9, %s16
    %p86 = scmp.eq.s32.totalorder %s85, 0
    %s88 = sadd.s32 %s87, 1
    %s89 = scalar_select %p86, %s87, %s88
    %p92 = pneg %p86
    %p93 = scmp.eq.s32.totalorder %s9, 1
    %p94 = por %p92, %p93
    %p95 = scmp.ne.s32.totalorder %s87, %s90
    %p96 = scmp.eq.s32.totalorder %s9, 0
    %p97 = por %p95, %p96
    %p98 = scmp.ne.s32.totalorder %s87, %s90
    %p99 = scmp.eq.s32.totalorder %s14, 1
    %p100 = por %p98, %p99
    %p101 = scmp.ne.s32.totalorder %s90, %s91
    %p102 = scmp.eq.s32.totalorder %s14, 0
    %p103 = por %p101, %p102
    %p104 = scmp.ne.s32.totalorder %s90, %s91
    %p105 = scmp.eq.s32.totalorder %s15, 1
    %p106 = por %p104, %p105
    %p108 = scmp.ne.s32.totalorder %s91, %s107
    %p109 = scmp.eq.s32.totalorder %s15, 0
    %p110 = por %p108, %p109
    %p111 = scmp.le.s32.totalorder 1, %s9
    %p112 = scmp.lt.s32.totalorder %s9, 3
    %p113 = pnand %p111, %p112
    %p114 = pneg %p113
    // Predicated region
    $region9: #{resblock_forward.1} parent=5 // pred_check
      _
    $region10: #{resblock_forward.1} parent=5 // pred_check_branch
      %116 = sbr.rel (%p113) target = $region12
    $region11: #{resblock_forward.1} parent=5 // pred_region
      %s117 = ssub.s32 %s9, 1
      // Predicated region
      $region13: #{resblock_forward.1} parent=11 // pred_check
        %p118 = pneg %p56
      $region14: #{resblock_forward.1} parent=11 // pred_check_branch
        %120 = sbr.rel (%p118) target = $region16
      $region15: #{resblock_forward.1} parent=11 // pred_region
        _
      $region16: #{resblock_forward.1} parent=11 // pred_fallthru
        _
      // Predicated region
      $region17: #{resblock_forward.1} parent=11 // pred_check
        %p121 = pneg %p77
      $region18: #{resblock_forward.1} parent=11 // pred_check_branch
        %123 = sbr.rel (%p121) target = $region20
      $region19: #{resblock_forward.1} parent=11 // pred_region
        _
      $region20: #{resblock_forward.1} parent=11 // pred_fallthru
        _
    $region12: #{resblock_forward.1} parent=5 // pred_fallthru
      _
    %p124 = scmp.lt.s32.totalorder %s9, 2
    // Predicated region
    $region21: #{resblock_forward.1} parent=5 // pred_check
      %p125 = pneg %p124
    $region22: #{resblock_forward.1} parent=5 // pred_check_branch
      %127 = sbr.rel (%p125) target = $region24
    $region23: #{resblock_forward.1} parent=5 // pred_region
      // Predicated region
      $region25: #{resblock_forward.1} parent=23 // pred_check
        %p128 = pneg %p29
      $region26: #{resblock_forward.1} parent=23 // pred_check_branch
        %130 = sbr.rel (%p128) target = $region28
      $region27: #{resblock_forward.1} parent=23 // pred_region
        %p131 = scmp.lt.s32.totalorder %s9, 1
        %s132 = scalar_select %p131, %s9, 1
        %s133 = smul.addr %s132, 32
        %s134 = smul.addr %s133, 8
        %s135 = scalar_lea.vmem %s0, %s134
      $region28: #{resblock_forward.1} parent=23 // pred_fallthru
        _
    $region24: #{resblock_forward.1} parent=5 // pred_fallthru
      _
    %p136 = scmp.le.s32.totalorder 1, %s9
    %p137 = scmp.lt.s32.totalorder %s9, 3
    %p138 = pnand %p136, %p137
    %p139 = pneg %p138
    // Predicated region
    $region29: #{resblock_forward.1} parent=5 // pred_check
      _
    $region30: #{resblock_forward.1} parent=5 // pred_check_branch
      %141 = sbr.rel (%p138) target = $region32
    $region31: #{resblock_forward.1} parent=5 // pred_region
      %s142 = ssub.s32 %s9, 1
      %p143 = scmp.lt.s32.totalorder %s14, 1
      %s144 = scalar_select %p143, %s14, 1
      %s145 = smul.addr %s144, 32
      %s146 = smul.addr %s145, 8
      %s147 = scalar_lea.vmem %s0, %s146
      %p148 = pneg %p35
      %p149 = pneg %p32
      %p150 = pneg %p56
      %p151 = pneg %p53
      %p152 = pneg %p77
      %p153 = pneg %p74
      %p154 = pneg %p103
      %p155 = pneg %p100
      %p156 = scmp.lt.s32.totalorder %s14, 1
      %s157 = scalar_select %p156, %s14, 1
      %s158 = smul.addr %s157, 32
      %s159 = smul.addr %s158, 8
      %s160 = scalar_lea.vmem %s3, %s159
      %p161 = scmp.lt.s32.totalorder %s14, 1
      %s162 = scalar_select %p161, %s14, 1
      %s163 = smul.addr %s162, 32
      %s164 = smul.addr %s163, 8
      %s165 = scalar_lea.vmem %s0, %s164
      %p166 = scmp.lt.s32.totalorder %s14, 1
      %s167 = scalar_select %p166, %s14, 1
      %s168 = smul.addr %s167, 32
      %s169 = smul.addr %s168, 8
      %s170 = scalar_lea.vmem %s3, %s169
      %v174 = vlaneseq
      %v175 = vand.u32 %v174, 127
      %v176 = vadd.s32 %v175, 128
      %v177 = vadd.s32 %v175, 256
      %v178 = vadd.s32 %v175, 384
      %v179 = vadd.s32 %v175, 512
      %v180 = vadd.s32 %v175, 640
      %v181 = vadd.s32 %v175, 768
      %v182 = vadd.s32 %v175, 896
      %vm183 = vcmp.lt.s32.totalorder %v175, 0
      %v184 = vsub.s32 0, %v175
      %v185 = vsel %vm183, %v184, %v175
      %v186 = vshrl.u32 %v185, 5
      %v187 = vand.u32 %v185, 31
      %v188 = vsub.s32 0, %v187
      %v189 = vsel %vm183, %v188, %v187
      %vm190 = vcmp.lt.s32.totalorder %v176, 0
      %v191 = vsub.s32 0, %v176
      %v192 = vsel %vm190, %v191, %v176
      %v193 = vshrl.u32 %v192, 5
      %v194 = vand.u32 %v192, 31
      %v195 = vsub.s32 0, %v194
      %v196 = vsel %vm190, %v195, %v194
      %vm197 = vcmp.lt.s32.totalorder %v177, 0
      %v198 = vsub.s32 0, %v177
      %v199 = vsel %vm197, %v198, %v177
      %v200 = vshrl.u32 %v199, 5
      %v201 = vand.u32 %v199, 31
      %v202 = vsub.s32 0, %v201
      %v203 = vsel %vm197, %v202, %v201
      %vm204 = vcmp.lt.s32.totalorder %v178, 0
      %v205 = vsub.s32 0, %v178
      %v206 = vsel %vm204, %v205, %v178
      %v207 = vshrl.u32 %v206, 5
      %v208 = vand.u32 %v206, 31
      %v209 = vsub.s32 0, %v208
      %v210 = vsel %vm204, %v209, %v208
      %vm211 = vcmp.lt.s32.totalorder %v179, 0
      %v212 = vsub.s32 0, %v179
      %v213 = vsel %vm211, %v212, %v179
      %v214 = vshrl.u32 %v213, 5
      %v215 = vand.u32 %v213, 31
      %v216 = vsub.s32 0, %v215
      %v217 = vsel %vm211, %v216, %v215
      %vm218 = vcmp.lt.s32.totalorder %v180, 0
      %v219 = vsub.s32 0, %v180
      %v220 = vsel %vm218, %v219, %v180
      %v221 = vshrl.u32 %v220, 5
      %v222 = vand.u32 %v220, 31
      %v223 = vsub.s32 0, %v222
      %v224 = vsel %vm218, %v223, %v222
      %vm225 = vcmp.lt.s32.totalorder %v181, 0
      %v226 = vsub.s32 0, %v181
      %v227 = vsel %vm225, %v226, %v181
      %v228 = vshrl.u32 %v227, 5
      %v229 = vand.u32 %v227, 31
      %v230 = vsub.s32 0, %v229
      %v231 = vsel %vm225, %v230, %v229
      %vm232 = vcmp.lt.s32.totalorder %v182, 0
      %v233 = vsub.s32 0, %v182
      %v234 = vsel %vm232, %v233, %v182
      %v235 = vshrl.u32 %v234, 5
      %v236 = vand.u32 %v234, 31
      %v237 = vsub.s32 0, %v236
      %v238 = vsel %vm232, %v237, %v236
      %vm239 = vcmp.ne.s32.totalorder %v189, 0
      %vm240 = vcmp.ne.s32.totalorder %v196, 0
      %vm241 = vcmp.ne.s32.totalorder %v203, 0
      %vm242 = vcmp.ne.s32.totalorder %v210, 0
      %vm243 = vcmp.ne.s32.totalorder %v217, 0
      %vm244 = vcmp.ne.s32.totalorder %v224, 0
      %vm245 = vcmp.ne.s32.totalorder %v231, 0
      %vm246 = vcmp.ne.s32.totalorder %v238, 0
      %vm247 = vcmp.lt.s32.totalorder %v189, 0
      %vm248 = vcmp.lt.s32.totalorder %v196, 0
      %vm249 = vcmp.lt.s32.totalorder %v203, 0
      %vm250 = vcmp.lt.s32.totalorder %v210, 0
      %vm251 = vcmp.lt.s32.totalorder %v217, 0
      %vm252 = vcmp.lt.s32.totalorder %v224, 0
      %vm253 = vcmp.lt.s32.totalorder %v231, 0
      %vm254 = vcmp.lt.s32.totalorder %v238, 0
      %vm255 = vmand %vm247, %vm239
      %vm256 = vmand %vm248, %vm240
      %vm257 = vmand %vm249, %vm241
      %vm258 = vmand %vm250, %vm242
      %vm259 = vmand %vm251, %vm243
      %vm260 = vmand %vm252, %vm244
      %vm261 = vmand %vm253, %vm245
      %vm262 = vmand %vm254, %vm246
      %v263 = vadd.s32 %v189, 32
      %v264 = vadd.s32 %v196, 32
      %v265 = vadd.s32 %v203, 32
      %v266 = vadd.s32 %v210, 32
      %v267 = vadd.s32 %v217, 32
      %v268 = vadd.s32 %v224, 32
      %v269 = vadd.s32 %v231, 32
      %v270 = vadd.s32 %v238, 32
      %v271 = vsel %vm255, %v263, %v189
      %v272 = vsel %vm256, %v264, %v196
      %v273 = vsel %vm257, %v265, %v203
      %v274 = vsel %vm258, %v266, %v210
      %v275 = vsel %vm259, %v267, %v217
      %v276 = vsel %vm260, %v268, %v224
      %v277 = vsel %vm261, %v269, %v231
      %v278 = vsel %vm262, %v270, %v238
      %v279 = vld [vmem:[%s165] sm:$0xff]
      %v280 = vld [vmem:[%s165 + $0x8] sm:$0xff]
      %v281 = vld [vmem:[%s165 + $0x10] sm:$0xff]
      %v282 = vld [vmem:[%s165 + $0x18] sm:$0xff]
      %v283 = vld [vmem:[%s165 + $0x20] sm:$0xff]
      %v284 = vld [vmem:[%s165 + $0x28] sm:$0xff]
      %v285 = vld [vmem:[%s165 + $0x30] sm:$0xff]
      %v286 = vld [vmem:[%s165 + $0x38] sm:$0xff]
      %v287 = vld [vmem:[%s165 + $0x40] sm:$0xff]
      %v288 = vld [vmem:[%s165 + $0x48] sm:$0xff]
      %v289 = vld [vmem:[%s165 + $0x50] sm:$0xff]
      %v290 = vld [vmem:[%s165 + $0x58] sm:$0xff]
      %v291 = vld [vmem:[%s165 + $0x60] sm:$0xff]
      %v292 = vld [vmem:[%s165 + $0x68] sm:$0xff]
      %v293 = vld [vmem:[%s165 + $0x70] sm:$0xff]
      %v294 = vld [vmem:[%s165 + $0x78] sm:$0xff]
      %v295 = vld [vmem:[%s165 + $0x80] sm:$0xff]
      %v296 = vld [vmem:[%s165 + $0x88] sm:$0xff]
      %v297 = vld [vmem:[%s165 + $0x90] sm:$0xff]
      %v298 = vld [vmem:[%s165 + $0x98] sm:$0xff]
      %v299 = vld [vmem:[%s165 + $0xa0] sm:$0xff]
      %v300 = vld [vmem:[%s165 + $0xa8] sm:$0xff]
      %v301 = vld [vmem:[%s165 + $0xb0] sm:$0xff]
      %v302 = vld [vmem:[%s165 + $0xb8] sm:$0xff]
      %v303 = vld [vmem:[%s165 + $0xc0] sm:$0xff]
      %v304 = vld [vmem:[%s165 + $0xc8] sm:$0xff]
      %v305 = vld [vmem:[%s165 + $0xd0] sm:$0xff]
      %v306 = vld [vmem:[%s165 + $0xd8] sm:$0xff]
      %v307 = vld [vmem:[%s165 + $0xe0] sm:$0xff]
      %v308 = vld [vmem:[%s165 + $0xe8] sm:$0xff]
      %v309 = vld [vmem:[%s165 + $0xf0] sm:$0xff]
      %v310 = vld [vmem:[%s165 + $0xf8] sm:$0xff]
      %v311 = vpack.c.bf16 %v287, %v279
      %v312 = vpack.c.bf16 %v288, %v280
      %v313 = vpack.c.bf16 %v289, %v281
      %v314 = vpack.c.bf16 %v290, %v282
      %v315 = vpack.c.bf16 %v291, %v283
      %v316 = vpack.c.bf16 %v292, %v284
      %v317 = vpack.c.bf16 %v293, %v285
      %v318 = vpack.c.bf16 %v294, %v286
      %v319 = vpack.c.bf16 %v303, %v295
      %v320 = vpack.c.bf16 %v304, %v296
      %v321 = vpack.c.bf16 %v305, %v297
      %v322 = vpack.c.bf16 %v306, %v298
      %v323 = vpack.c.bf16 %v307, %v299
      %v324 = vpack.c.bf16 %v308, %v300
      %v325 = vpack.c.bf16 %v309, %v301
      %v326 = vpack.c.bf16 %v310, %v302
      %343 = vrot.lane.b32.xlu0 %v311, 33
      %v344 = vpop.permute.xlu0 %343
      %345 = vrot.lane.b32.xlu0 %v312, 33
      %v346 = vpop.permute.xlu0 %345
      %347 = vrot.lane.b32.xlu0 %v313, 33
      %v348 = vpop.permute.xlu0 %347
      %349 = vrot.lane.b32.xlu0 %v314, 33
      %v350 = vpop.permute.xlu0 %349
      %351 = vrot.lane.b32.xlu0 %v315, 33
      %v352 = vpop.permute.xlu0 %351
      %353 = vrot.lane.b32.xlu0 %v316, 33
      %v354 = vpop.permute.xlu0 %353
      %355 = vrot.lane.b32.xlu0 %v317, 33
      %v356 = vpop.permute.xlu0 %355
      %357 = vrot.lane.b32.xlu0 %v318, 33
      %v358 = vpop.permute.xlu0 %357
      %359 = vrot.lane.b32.xlu0 %v319, 33
      %v360 = vpop.permute.xlu0 %359
      %361 = vrot.lane.b32.xlu0 %v320, 33
      %v362 = vpop.permute.xlu0 %361
      %363 = vrot.lane.b32.xlu0 %v321, 33
      %v364 = vpop.permute.xlu0 %363
      %365 = vrot.lane.b32.xlu0 %v322, 33
      %v366 = vpop.permute.xlu0 %365
      %367 = vrot.lane.b32.xlu0 %v323, 33
      %v368 = vpop.permute.xlu0 %367
      %369 = vrot.lane.b32.xlu0 %v324, 33
      %v370 = vpop.permute.xlu0 %369
      %371 = vrot.lane.b32.xlu0 %v325, 33
      %v372 = vpop.permute.xlu0 %371
      %373 = vrot.lane.b32.xlu0 %v326, 33
      %v374 = vpop.permute.xlu0 %373
      %vm375 = vcmask 269312
      %v376 = vsel %vm375, %v344, %v346
      %v377 = vsel %vm375, %v346, %v348
      %v378 = vsel %vm375, %v348, %v350
      %v379 = vsel %vm375, %v350, %v352
      %v380 = vsel %vm375, %v352, %v354
      %v381 = vsel %vm375, %v354, %v356
      %v382 = vsel %vm375, %v356, %v358
      %v383 = vsel %vm375, %v360, %v362
      %v384 = vsel %vm375, %v362, %v364
      %v385 = vsel %vm375, %v364, %v366
      %v386 = vsel %vm375, %v366, %v368
      %v387 = vsel %vm375, %v368, %v370
      %v388 = vsel %vm375, %v370, %v372
      %v389 = vsel %vm375, %v372, %v374
      %vm404 = vcmask 269312
      %v407 = vsel %vm404, 0, %v344
      %v410 = vsel %vm404, 0, %v360
      %v413 = vsel %vm404, %v358, 0
      %v416 = vsel %vm404, %v374, 0
      %vm418 = vcmp.ne.s32.totalorder %v271, 0
      %vm419 = vcmp.ne.s32.totalorder %v272, 0
      %vm420 = vcmp.ne.s32.totalorder %v273, 0
      %vm421 = vcmp.ne.s32.totalorder %v274, 0
      %vm422 = vcmp.ne.s32.totalorder %v275, 0
      %vm423 = vcmp.ne.s32.totalorder %v276, 0
      %vm424 = vcmp.ne.s32.totalorder %v277, 0
      %vm425 = vcmp.ne.s32.totalorder %v278, 0
      %v426 = vsel %vm418, 1, 0
      %v427 = vsel %vm419, 1, 0
      %v428 = vsel %vm420, 1, 0
      %v429 = vsel %vm421, 1, 0
      %v430 = vsel %vm422, 1, 0
      %v431 = vsel %vm423, 1, 0
      %v432 = vsel %vm424, 1, 0
      %v433 = vsel %vm425, 1, 0
      %vm434 = vcmp.eq.s32.totalorder %v426, 1
      %vm435 = vcmp.eq.s32.totalorder %v427, 1
      %vm436 = vcmp.eq.s32.totalorder %v428, 1
      %vm437 = vcmp.eq.s32.totalorder %v429, 1
      %vm438 = vcmp.eq.s32.totalorder %v430, 1
      %vm439 = vcmp.eq.s32.totalorder %v431, 1
      %vm440 = vcmp.eq.s32.totalorder %v432, 1
      %vm441 = vcmp.eq.s32.totalorder %v433, 1
      %vm442 = vmpackc.low %vm435, %vm434
      %vm443 = vmpackc.low %vm437, %vm436
      %vm444 = vmpackc.low %vm439, %vm438
      %vm445 = vmpackc.low %vm441, %vm440
      %v446 = vsel %vm442, 65537, 0
      %v447 = vsel %vm443, 65537, 0
      %v448 = vsel %vm444, 65537, 0
      %v449 = vsel %vm445, 65537, 0
      %v450 = vlaneseq
      %v451 = vshrl.u32 %v450, 7
      %v452 = vsub.s32 0, %v451
      %v453 = vrot.slane %v446, %v452
      %v454 = vlaneseq
      %v455 = vshrl.u32 %v454, 7
      %v456 = vsub.s32 4, %v455
      %v457 = vrot.slane %v446, %v456
      %v458 = vlaneseq
      %v459 = vshrl.u32 %v458, 7
      %v460 = vsub.s32 0, %v459
      %v461 = vrot.slane %v447, %v460
      %v462 = vlaneseq
      %v463 = vshrl.u32 %v462, 7
      %v464 = vsub.s32 4, %v463
      %v465 = vrot.slane %v447, %v464
      %v466 = vlaneseq
      %v467 = vshrl.u32 %v466, 7
      %v468 = vsub.s32 0, %v467
      %v469 = vrot.slane %v448, %v468
      %v470 = vlaneseq
      %v471 = vshrl.u32 %v470, 7
      %v472 = vsub.s32 4, %v471
      %v473 = vrot.slane %v448, %v472
      %v474 = vlaneseq
      %v475 = vshrl.u32 %v474, 7
      %v476 = vsub.s32 0, %v475
      %v477 = vrot.slane %v449, %v476
      %v478 = vlaneseq
      %v479 = vshrl.u32 %v478, 7
      %v480 = vsub.s32 4, %v479
      %v481 = vrot.slane %v449, %v480
      %vm482 = vcmp.ne.s16.totalorder %v453, 0
      %vm483 = vcmp.ne.s16.totalorder %v457, 0
      %vm484 = vcmp.ne.s16.totalorder %v461, 0
      %vm485 = vcmp.ne.s16.totalorder %v465, 0
      %vm486 = vcmp.ne.s16.totalorder %v469, 0
      %vm487 = vcmp.ne.s16.totalorder %v473, 0
      %vm488 = vcmp.ne.s16.totalorder %v477, 0
      %vm489 = vcmp.ne.s16.totalorder %v481, 0
      %v490 = vsel %vm482, %v407, 0
      %v491 = vsel %vm483, %v376, 0
      %v492 = vsel %vm484, %v377, 0
      %v493 = vsel %vm485, %v378, 0
      %v494 = vsel %vm486, %v379, 0
      %v495 = vsel %vm487, %v380, 0
      %v496 = vsel %vm488, %v381, 0
      %v497 = vsel %vm489, %v382, 0
      %v498 = vsel %vm482, %v410, 0
      %v499 = vsel %vm483, %v383, 0
      %v500 = vsel %vm484, %v384, 0
      %v501 = vsel %vm485, %v385, 0
      %v502 = vsel %vm486, %v386, 0
      %v503 = vsel %vm487, %v387, 0
      %v504 = vsel %vm488, %v388, 0
      %v505 = vsel %vm489, %v389, 0
      %vm506 = vcmp.ne.s32.totalorder %v271, 31
      %vm507 = vcmp.ne.s32.totalorder %v272, 31
      %vm508 = vcmp.ne.s32.totalorder %v273, 31
      %vm509 = vcmp.ne.s32.totalorder %v274, 31
      %vm510 = vcmp.ne.s32.totalorder %v275, 31
      %vm511 = vcmp.ne.s32.totalorder %v276, 31
      %vm512 = vcmp.ne.s32.totalorder %v277, 31
      %vm513 = vcmp.ne.s32.totalorder %v278, 31
      %v514 = vsel %vm506, 1, 0
      %v515 = vsel %vm507, 1, 0
      %v516 = vsel %vm508, 1, 0
      %v517 = vsel %vm509, 1, 0
      %v518 = vsel %vm510, 1, 0
      %v519 = vsel %vm511, 1, 0
      %v520 = vsel %vm512, 1, 0
      %v521 = vsel %vm513, 1, 0
      %vm522 = vcmp.eq.s32.totalorder %v514, 1
      %vm523 = vcmp.eq.s32.totalorder %v515, 1
      %vm524 = vcmp.eq.s32.totalorder %v516, 1
      %vm525 = vcmp.eq.s32.totalorder %v517, 1
      %vm526 = vcmp.eq.s32.totalorder %v518, 1
      %vm527 = vcmp.eq.s32.totalorder %v519, 1
      %vm528 = vcmp.eq.s32.totalorder %v520, 1
      %vm529 = vcmp.eq.s32.totalorder %v521, 1
      %vm530 = vmpackc.low %vm523, %vm522
      %vm531 = vmpackc.low %vm525, %vm524
      %vm532 = vmpackc.low %vm527, %vm526
      %vm533 = vmpackc.low %vm529, %vm528
      %v534 = vsel %vm530, 65537, 0
      %v535 = vsel %vm531, 65537, 0
      %v536 = vsel %vm532, 65537, 0
      %v537 = vsel %vm533, 65537, 0
      %v538 = vlaneseq
      %v539 = vshrl.u32 %v538, 7
      %v540 = vsub.s32 0, %v539
      %v541 = vrot.slane %v534, %v540
      %v542 = vlaneseq
      %v543 = vshrl.u32 %v542, 7
      %v544 = vsub.s32 4, %v543
      %v545 = vrot.slane %v534, %v544
      %v546 = vlaneseq
      %v547 = vshrl.u32 %v546, 7
      %v548 = vsub.s32 0, %v547
      %v549 = vrot.slane %v535, %v548
      %v550 = vlaneseq
      %v551 = vshrl.u32 %v550, 7
      %v552 = vsub.s32 4, %v551
      %v553 = vrot.slane %v535, %v552
      %v554 = vlaneseq
      %v555 = vshrl.u32 %v554, 7
      %v556 = vsub.s32 0, %v555
      %v557 = vrot.slane %v536, %v556
      %v558 = vlaneseq
      %v559 = vshrl.u32 %v558, 7
      %v560 = vsub.s32 4, %v559
      %v561 = vrot.slane %v536, %v560
      %v562 = vlaneseq
      %v563 = vshrl.u32 %v562, 7
      %v564 = vsub.s32 0, %v563
      %v565 = vrot.slane %v537, %v564
      %v566 = vlaneseq
      %v567 = vshrl.u32 %v566, 7
      %v568 = vsub.s32 4, %v567
      %v569 = vrot.slane %v537, %v568
      %570 = vrot.lane.b32.xlu0 %v541, 2
      %v571 = vpop.permute.xlu0 %570
      %572 = vrot.lane.b32.xlu0 %v545, 2
      %v573 = vpop.permute.xlu0 %572
      %574 = vrot.lane.b32.xlu0 %v549, 2
      %v575 = vpop.permute.xlu0 %574
      %576 = vrot.lane.b32.xlu0 %v553, 2
      %v577 = vpop.permute.xlu0 %576
      %578 = vrot.lane.b32.xlu0 %v557, 2
      %v579 = vpop.permute.xlu0 %578
      %580 = vrot.lane.b32.xlu0 %v561, 2
      %v581 = vpop.permute.xlu0 %580
      %582 = vrot.lane.b32.xlu0 %v565, 2
      %v583 = vpop.permute.xlu0 %582
      %584 = vrot.lane.b32.xlu0 %v569, 2
      %v585 = vpop.permute.xlu0 %584
      %vm586 = vcmask 15360
      %v587 = vsel %vm586, %v571, %v573
      %v588 = vsel %vm586, %v573, %v575
      %v589 = vsel %vm586, %v575, %v577
      %v590 = vsel %vm586, %v577, %v579
      %v591 = vsel %vm586, %v579, %v581
      %v592 = vsel %vm586, %v581, %v583
      %v593 = vsel %vm586, %v583, %v585
      %vm594 = vcmp.ne.s16.totalorder %v571, 0
      %vm595 = vcmp.ne.s16.totalorder %v587, 0
      %vm596 = vcmp.ne.s16.totalorder %v588, 0
      %vm597 = vcmp.ne.s16.totalorder %v589, 0
      %vm598 = vcmp.ne.s16.totalorder %v590, 0
      %vm599 = vcmp.ne.s16.totalorder %v591, 0
      %vm600 = vcmp.ne.s16.totalorder %v592, 0
      %vm601 = vcmp.ne.s16.totalorder %v593, 0
      %vm602 = vcmp.ne.s16.totalorder %v585, 0
      %v603 = vsel %vm594, %v407, 0
      %v604 = vsel %vm595, %v376, 0
      %v605 = vsel %vm596, %v377, 0
      %v606 = vsel %vm597, %v378, 0
      %v607 = vsel %vm598, %v379, 0
      %v608 = vsel %vm599, %v380, 0
      %v609 = vsel %vm600, %v381, 0
      %v610 = vsel %vm601, %v382, 0
      %v611 = vsel %vm602, %v413, 0
      %v612 = vsel %vm594, %v410, 0
      %v613 = vsel %vm595, %v383, 0
      %v614 = vsel %vm596, %v384, 0
      %v615 = vsel %vm597, %v385, 0
      %v616 = vsel %vm598, %v386, 0
      %v617 = vsel %vm599, %v387, 0
      %v618 = vsel %vm600, %v388, 0
      %v619 = vsel %vm601, %v389, 0
      %v620 = vsel %vm602, %v416, 0
      %621 = vrot.lane.b32.xlu0 %v453, 32
      %v622 = vpop.permute.xlu0 %621
      %623 = vrot.lane.b32.xlu0 %v457, 32
      %v624 = vpop.permute.xlu0 %623
      %625 = vrot.lane.b32.xlu0 %v461, 32
      %v626 = vpop.permute.xlu0 %625
      %627 = vrot.lane.b32.xlu0 %v465, 32
      %v628 = vpop.permute.xlu0 %627
      %629 = vrot.lane.b32.xlu0 %v469, 32
      %v630 = vpop.permute.xlu0 %629
      %631 = vrot.lane.b32.xlu0 %v473, 32
      %v632 = vpop.permute.xlu0 %631
      %633 = vrot.lane.b32.xlu0 %v477, 32
      %v634 = vpop.permute.xlu0 %633
      %635 = vrot.lane.b32.xlu0 %v481, 32
      %v636 = vpop.permute.xlu0 %635
      %vm637 = vcmask 261120
      %v638 = vsel %vm637, %v622, %v624
      %v639 = vsel %vm637, %v624, %v626
      %v640 = vsel %vm637, %v626, %v628
      %v641 = vsel %vm637, %v628, %v630
      %v642 = vsel %vm637, %v630, %v632
      %v643 = vsel %vm637, %v632, %v634
      %v644 = vsel %vm637, %v634, %v636
      %vm645 = vcmp.ne.s16.totalorder %v622, 0
      %vm646 = vcmp.ne.s16.totalorder %v638, 0
      %vm647 = vcmp.ne.s16.totalorder %v639, 0
      %vm648 = vcmp.ne.s16.totalorder %v640, 0
      %vm649 = vcmp.ne.s16.totalorder %v641, 0
      %vm650 = vcmp.ne.s16.totalorder %v642, 0
      %vm651 = vcmp.ne.s16.totalorder %v643, 0
      %vm652 = vcmp.ne.s16.totalorder %v644, 0
      %vm653 = vcmp.ne.s16.totalorder %v636, 0
      %v654 = vsel %vm645, %v407, 0
      %v655 = vsel %vm646, %v376, 0
      %v656 = vsel %vm647, %v377, 0
      %v657 = vsel %vm648, %v378, 0
      %v658 = vsel %vm649, %v379, 0
      %v659 = vsel %vm650, %v380, 0
      %v660 = vsel %vm651, %v381, 0
      %v661 = vsel %vm652, %v382, 0
      %v662 = vsel %vm653, %v413, 0
      %v663 = vsel %vm645, %v410, 0
      %v664 = vsel %vm646, %v383, 0
      %v665 = vsel %vm647, %v384, 0
      %v666 = vsel %vm648, %v385, 0
      %v667 = vsel %vm649, %v386, 0
      %v668 = vsel %vm650, %v387, 0
      %v669 = vsel %vm651, %v388, 0
      %v670 = vsel %vm652, %v389, 0
      %v671 = vsel %vm653, %v416, 0
      %672 = vrot.lane.b32.xlu0 %v541, 34
      %v673 = vpop.permute.xlu0 %672
      %674 = vrot.lane.b32.xlu0 %v545, 34
      %v675 = vpop.permute.xlu0 %674
      %676 = vrot.lane.b32.xlu0 %v549, 34
      %v677 = vpop.permute.xlu0 %676
      %678 = vrot.lane.b32.xlu0 %v553, 34
      %v679 = vpop.permute.xlu0 %678
      %680 = vrot.lane.b32.xlu0 %v557, 34
      %v681 = vpop.permute.xlu0 %680
      %682 = vrot.lane.b32.xlu0 %v561, 34
      %v683 = vpop.permute.xlu0 %682
      %684 = vrot.lane.b32.xlu0 %v565, 34
      %v685 = vpop.permute.xlu0 %684
      %686 = vrot.lane.b32.xlu0 %v569, 34
      %v687 = vpop.permute.xlu0 %686
      %vm688 = vcmask 277504
      %v689 = vsel %vm688, %v673, %v675
      %v690 = vsel %vm688, %v675, %v677
      %v691 = vsel %vm688, %v677, %v679
      %v692 = vsel %vm688, %v679, %v681
      %v693 = vsel %vm688, %v681, %v683
      %v694 = vsel %vm688, %v683, %v685
      %v695 = vsel %vm688, %v685, %v687
      %vm696 = vcmp.ne.s16.totalorder %v673, 0
      %vm697 = vcmp.ne.s16.totalorder %v689, 0
      %vm698 = vcmp.ne.s16.totalorder %v690, 0
      %vm699 = vcmp.ne.s16.totalorder %v691, 0
      %vm700 = vcmp.ne.s16.totalorder %v692, 0
      %vm701 = vcmp.ne.s16.totalorder %v693, 0
      %vm702 = vcmp.ne.s16.totalorder %v694, 0
      %vm703 = vcmp.ne.s16.totalorder %v695, 0
      %vm704 = vcmp.ne.s16.totalorder %v687, 0
      %v705 = vsel %vm696, %v407, 0
      %v706 = vsel %vm697, %v376, 0
      %v707 = vsel %vm698, %v377, 0
      %v708 = vsel %vm699, %v378, 0
      %v709 = vsel %vm700, %v379, 0
      %v710 = vsel %vm701, %v380, 0
      %v711 = vsel %vm702, %v381, 0
      %v712 = vsel %vm703, %v382, 0
      %v713 = vsel %vm704, %v413, 0
      %v714 = vsel %vm696, %v410, 0
      %v715 = vsel %vm697, %v383, 0
      %v716 = vsel %vm698, %v384, 0
      %v717 = vsel %vm699, %v385, 0
      %v718 = vsel %vm700, %v386, 0
      %v719 = vsel %vm701, %v387, 0
      %v720 = vsel %vm702, %v388, 0
      %v721 = vsel %vm703, %v389, 0
      %v722 = vsel %vm704, %v416, 0
      %723 = vrot.lane.b32.xlu0 %v453, 64
      %v724 = vpop.permute.xlu0 %723
      %725 = vrot.lane.b32.xlu0 %v457, 64
      %v726 = vpop.permute.xlu0 %725
      %727 = vrot.lane.b32.xlu0 %v461, 64
      %v728 = vpop.permute.xlu0 %727
      %729 = vrot.lane.b32.xlu0 %v465, 64
      %v730 = vpop.permute.xlu0 %729
      %731 = vrot.lane.b32.xlu0 %v469, 64
      %v732 = vpop.permute.xlu0 %731
      %733 = vrot.lane.b32.xlu0 %v473, 64
      %v734 = vpop.permute.xlu0 %733
      %735 = vrot.lane.b32.xlu0 %v477, 64
      %v736 = vpop.permute.xlu0 %735
      %737 = vrot.lane.b32.xlu0 %v481, 64
      %v738 = vpop.permute.xlu0 %737
      %vm739 = vcmask 523264
      %v740 = vsel %vm739, %v724, %v726
      %v741 = vsel %vm739, %v726, %v728
      %v742 = vsel %vm739, %v728, %v730
      %v743 = vsel %vm739, %v730, %v732
      %v744 = vsel %vm739, %v732, %v734
      %v745 = vsel %vm739, %v734, %v736
      %v746 = vsel %vm739, %v736, %v738
      %vm747 = vcmp.ne.s16.totalorder %v724, 0
      %vm748 = vcmp.ne.s16.totalorder %v740, 0
      %vm749 = vcmp.ne.s16.totalorder %v741, 0
      %vm750 = vcmp.ne.s16.totalorder %v742, 0
      %vm751 = vcmp.ne.s16.totalorder %v743, 0
      %vm752 = vcmp.ne.s16.totalorder %v744, 0
      %vm753 = vcmp.ne.s16.totalorder %v745, 0
      %vm754 = vcmp.ne.s16.totalorder %v746, 0
      %vm755 = vcmp.ne.s16.totalorder %v738, 0
      %v756 = vsel %vm747, %v407, 0
      %v757 = vsel %vm748, %v376, 0
      %v758 = vsel %vm749, %v377, 0
      %v759 = vsel %vm750, %v378, 0
      %v760 = vsel %vm751, %v379, 0
      %v761 = vsel %vm752, %v380, 0
      %v762 = vsel %vm753, %v381, 0
      %v763 = vsel %vm754, %v382, 0
      %v764 = vsel %vm755, %v413, 0
      %v765 = vsel %vm747, %v410, 0
      %v766 = vsel %vm748, %v383, 0
      %v767 = vsel %vm749, %v384, 0
      %v768 = vsel %vm750, %v385, 0
      %v769 = vsel %vm751, %v386, 0
      %v770 = vsel %vm752, %v387, 0
      %v771 = vsel %vm753, %v388, 0
      %v772 = vsel %vm754, %v389, 0
      %v773 = vsel %vm755, %v416, 0
      %774 = vrot.lane.b32.xlu0 %v541, 66
      %v775 = vpop.permute.xlu0 %774
      %776 = vrot.lane.b32.xlu0 %v545, 66
      %v777 = vpop.permute.xlu0 %776
      %778 = vrot.lane.b32.xlu0 %v549, 66
      %v779 = vpop.permute.xlu0 %778
      %780 = vrot.lane.b32.xlu0 %v553, 66
      %v781 = vpop.permute.xlu0 %780
      %782 = vrot.lane.b32.xlu0 %v557, 66
      %v783 = vpop.permute.xlu0 %782
      %784 = vrot.lane.b32.xlu0 %v561, 66
      %v785 = vpop.permute.xlu0 %784
      %786 = vrot.lane.b32.xlu0 %v565, 66
      %v787 = vpop.permute.xlu0 %786
      %788 = vrot.lane.b32.xlu0 %v569, 66
      %v789 = vpop.permute.xlu0 %788
      %vm790 = vcmask 539648
      %v791 = vsel %vm790, %v775, %v777
      %v792 = vsel %vm790, %v777, %v779
      %v793 = vsel %vm790, %v779, %v781
      %v794 = vsel %vm790, %v781, %v783
      %v795 = vsel %vm790, %v783, %v785
      %v796 = vsel %vm790, %v785, %v787
      %v797 = vsel %vm790, %v787, %v789
      %vm798 = vcmp.ne.s16.totalorder %v775, 0
      %vm799 = vcmp.ne.s16.totalorder %v791, 0
      %vm800 = vcmp.ne.s16.totalorder %v792, 0
      %vm801 = vcmp.ne.s16.totalorder %v793, 0
      %vm802 = vcmp.ne.s16.totalorder %v794, 0
      %vm803 = vcmp.ne.s16.totalorder %v795, 0
      %vm804 = vcmp.ne.s16.totalorder %v796, 0
      %vm805 = vcmp.ne.s16.totalorder %v797, 0
      %vm806 = vcmp.ne.s16.totalorder %v789, 0
      %v807 = vsel %vm798, %v407, 0
      %v808 = vsel %vm799, %v376, 0
      %v809 = vsel %vm800, %v377, 0
      %v810 = vsel %vm801, %v378, 0
      %v811 = vsel %vm802, %v379, 0
      %v812 = vsel %vm803, %v380, 0
      %v813 = vsel %vm804, %v381, 0
      %v814 = vsel %vm805, %v382, 0
      %v815 = vsel %vm806, %v413, 0
      %v816 = vsel %vm798, %v410, 0
      %v817 = vsel %vm799, %v383, 0
      %v818 = vsel %vm800, %v384, 0
      %v819 = vsel %vm801, %v385, 0
      %v820 = vsel %vm802, %v386, 0
      %v821 = vsel %vm803, %v387, 0
      %v822 = vsel %vm804, %v388, 0
      %v823 = vsel %vm805, %v389, 0
      %v824 = vsel %vm806, %v416, 0
      %829 = vrot.lane.b32.xlu0 %v407, 127
      %v830 = vpop.permute.xlu0 %829
      %831 = vrot.lane.b32.xlu0 %v376, 127
      %v832 = vpop.permute.xlu0 %831
      %833 = vrot.lane.b32.xlu0 %v377, 127
      %v834 = vpop.permute.xlu0 %833
      %835 = vrot.lane.b32.xlu0 %v378, 127
      %v836 = vpop.permute.xlu0 %835
      %837 = vrot.lane.b32.xlu0 %v379, 127
      %v838 = vpop.permute.xlu0 %837
      %839 = vrot.lane.b32.xlu0 %v380, 127
      %v840 = vpop.permute.xlu0 %839
      %841 = vrot.lane.b32.xlu0 %v381, 127
      %v842 = vpop.permute.xlu0 %841
      %843 = vrot.lane.b32.xlu0 %v382, 127
      %v844 = vpop.permute.xlu0 %843
      %845 = vrot.lane.b32.xlu0 %v413, 127
      %v846 = vpop.permute.xlu0 %845
      %847 = vrot.lane.b32.xlu0 %v410, 127
      %v848 = vpop.permute.xlu0 %847
      %849 = vrot.lane.b32.xlu0 %v383, 127
      %v850 = vpop.permute.xlu0 %849
      %851 = vrot.lane.b32.xlu0 %v384, 127
      %v852 = vpop.permute.xlu0 %851
      %853 = vrot.lane.b32.xlu0 %v385, 127
      %v854 = vpop.permute.xlu0 %853
      %855 = vrot.lane.b32.xlu0 %v386, 127
      %v856 = vpop.permute.xlu0 %855
      %857 = vrot.lane.b32.xlu0 %v387, 127
      %v858 = vpop.permute.xlu0 %857
      %859 = vrot.lane.b32.xlu0 %v388, 127
      %v860 = vpop.permute.xlu0 %859
      %861 = vrot.lane.b32.xlu0 %v389, 127
      %v862 = vpop.permute.xlu0 %861
      %863 = vrot.lane.b32.xlu0 %v416, 127
      %v864 = vpop.permute.xlu0 %863
      %vm865 = vcmask 1039360
      %v866 = vsel %vm865, %v830, %v832
      %v867 = vsel %vm865, %v832, %v834
      %v868 = vsel %vm865, %v834, %v836
      %v869 = vsel %vm865, %v836, %v838
      %v870 = vsel %vm865, %v838, %v840
      %v871 = vsel %vm865, %v840, %v842
      %v872 = vsel %vm865, %v842, %v844
      %v873 = vsel %vm865, %v844, %v846
      %v874 = vsel %vm865, %v848, %v850
      %v875 = vsel %vm865, %v850, %v852
      %v876 = vsel %vm865, %v852, %v854
      %v877 = vsel %vm865, %v854, %v856
      %v878 = vsel %vm865, %v856, %v858
      %v879 = vsel %vm865, %v858, %v860
      %v880 = vsel %vm865, %v860, %v862
      %v881 = vsel %vm865, %v862, %v864
      %916 = vrot.lane.b32.xlu0 %v603, 126
      %v917 = vpop.permute.xlu0 %916
      %918 = vrot.lane.b32.xlu0 %v604, 126
      %v919 = vpop.permute.xlu0 %918
      %920 = vrot.lane.b32.xlu0 %v605, 126
      %v921 = vpop.permute.xlu0 %920
      %922 = vrot.lane.b32.xlu0 %v606, 126
      %v923 = vpop.permute.xlu0 %922
      %924 = vrot.lane.b32.xlu0 %v607, 126
      %v925 = vpop.permute.xlu0 %924
      %926 = vrot.lane.b32.xlu0 %v608, 126
      %v927 = vpop.permute.xlu0 %926
      %928 = vrot.lane.b32.xlu0 %v609, 126
      %v929 = vpop.permute.xlu0 %928
      %930 = vrot.lane.b32.xlu0 %v610, 126
      %v931 = vpop.permute.xlu0 %930
      %932 = vrot.lane.b32.xlu0 %v611, 126
      %v933 = vpop.permute.xlu0 %932
      %934 = vrot.lane.b32.xlu0 %v612, 126
      %v935 = vpop.permute.xlu0 %934
      %936 = vrot.lane.b32.xlu0 %v613, 126
      %v937 = vpop.permute.xlu0 %936
      %938 = vrot.lane.b32.xlu0 %v614, 126
      %v939 = vpop.permute.xlu0 %938
      %940 = vrot.lane.b32.xlu0 %v615, 126
      %v941 = vpop.permute.xlu0 %940
      %942 = vrot.lane.b32.xlu0 %v616, 126
      %v943 = vpop.permute.xlu0 %942
      %944 = vrot.lane.b32.xlu0 %v617, 126
      %v945 = vpop.permute.xlu0 %944
      %946 = vrot.lane.b32.xlu0 %v618, 126
      %v947 = vpop.permute.xlu0 %946
      %948 = vrot.lane.b32.xlu0 %v619, 126
      %v949 = vpop.permute.xlu0 %948
      %950 = vrot.lane.b32.xlu0 %v620, 126
      %v951 = vpop.permute.xlu0 %950
      %vm952 = vcmask 1031168
      %v953 = vsel %vm952, %v917, %v919
      %v954 = vsel %vm952, %v919, %v921
      %v955 = vsel %vm952, %v921, %v923
      %v956 = vsel %vm952, %v923, %v925
      %v957 = vsel %vm952, %v925, %v927
      %v958 = vsel %vm952, %v927, %v929
      %v959 = vsel %vm952, %v929, %v931
      %v960 = vsel %vm952, %v931, %v933
      %v961 = vsel %vm952, %v935, %v937
      %v962 = vsel %vm952, %v937, %v939
      %v963 = vsel %vm952, %v939, %v941
      %v964 = vsel %vm952, %v941, %v943
      %v965 = vsel %vm952, %v943, %v945
      %v966 = vsel %vm952, %v945, %v947
      %v967 = vsel %vm952, %v947, %v949
      %v968 = vsel %vm952, %v949, %v951
      %1003 = vrot.lane.b32.xlu0 %v654, 96
      %v1004 = vpop.permute.xlu0 %1003
      %1005 = vrot.lane.b32.xlu0 %v655, 96
      %v1006 = vpop.permute.xlu0 %1005
      %1007 = vrot.lane.b32.xlu0 %v656, 96
      %v1008 = vpop.permute.xlu0 %1007
      %1009 = vrot.lane.b32.xlu0 %v657, 96
      %v1010 = vpop.permute.xlu0 %1009
      %1011 = vrot.lane.b32.xlu0 %v658, 96
      %v1012 = vpop.permute.xlu0 %1011
      %1013 = vrot.lane.b32.xlu0 %v659, 96
      %v1014 = vpop.permute.xlu0 %1013
      %1015 = vrot.lane.b32.xlu0 %v660, 96
      %v1016 = vpop.permute.xlu0 %1015
      %1017 = vrot.lane.b32.xlu0 %v661, 96
      %v1018 = vpop.permute.xlu0 %1017
      %1019 = vrot.lane.b32.xlu0 %v662, 96
      %v1020 = vpop.permute.xlu0 %1019
      %1021 = vrot.lane.b32.xlu0 %v663, 96
      %v1022 = vpop.permute.xlu0 %1021
      %1023 = vrot.lane.b32.xlu0 %v664, 96
      %v1024 = vpop.permute.xlu0 %1023
      %1025 = vrot.lane.b32.xlu0 %v665, 96
      %v1026 = vpop.permute.xlu0 %1025
      %1027 = vrot.lane.b32.xlu0 %v666, 96
      %v1028 = vpop.permute.xlu0 %1027
      %1029 = vrot.lane.b32.xlu0 %v667, 96
      %v1030 = vpop.permute.xlu0 %1029
      %1031 = vrot.lane.b32.xlu0 %v668, 96
      %v1032 = vpop.permute.xlu0 %1031
      %1033 = vrot.lane.b32.xlu0 %v669, 96
      %v1034 = vpop.permute.xlu0 %1033
      %1035 = vrot.lane.b32.xlu0 %v670, 96
      %v1036 = vpop.permute.xlu0 %1035
      %1037 = vrot.lane.b32.xlu0 %v671, 96
      %v1038 = vpop.permute.xlu0 %1037
      %vm1039 = vcmask 785408
      %v1040 = vsel %vm1039, %v1004, %v1006
      %v1041 = vsel %vm1039, %v1006, %v1008
      %v1042 = vsel %vm1039, %v1008, %v1010
      %v1043 = vsel %vm1039, %v1010, %v1012
      %v1044 = vsel %vm1039, %v1012, %v1014
      %v1045 = vsel %vm1039, %v1014, %v1016
      %v1046 = vsel %vm1039, %v1016, %v1018
      %v1047 = vsel %vm1039, %v1018, %v1020
      %v1048 = vsel %vm1039, %v1022, %v1024
      %v1049 = vsel %vm1039, %v1024, %v1026
      %v1050 = vsel %vm1039, %v1026, %v1028
      %v1051 = vsel %vm1039, %v1028, %v1030
      %v1052 = vsel %vm1039, %v1030, %v1032
      %v1053 = vsel %vm1039, %v1032, %v1034
      %v1054 = vsel %vm1039, %v1034, %v1036
      %v1055 = vsel %vm1039, %v1036, %v1038
      %1072 = vrot.lane.b32.xlu0 %v407, 95
      %v1073 = vpop.permute.xlu0 %1072
      %1074 = vrot.lane.b32.xlu0 %v376, 95
      %v1075 = vpop.permute.xlu0 %1074
      %1076 = vrot.lane.b32.xlu0 %v377, 95
      %v1077 = vpop.permute.xlu0 %1076
      %1078 = vrot.lane.b32.xlu0 %v378, 95
      %v1079 = vpop.permute.xlu0 %1078
      %1080 = vrot.lane.b32.xlu0 %v379, 95
      %v1081 = vpop.permute.xlu0 %1080
      %1082 = vrot.lane.b32.xlu0 %v380, 95
      %v1083 = vpop.permute.xlu0 %1082
      %1084 = vrot.lane.b32.xlu0 %v381, 95
      %v1085 = vpop.permute.xlu0 %1084
      %1086 = vrot.lane.b32.xlu0 %v382, 95
      %v1087 = vpop.permute.xlu0 %1086
      %1088 = vrot.lane.b32.xlu0 %v413, 95
      %v1089 = vpop.permute.xlu0 %1088
      %1090 = vrot.lane.b32.xlu0 %v410, 95
      %v1091 = vpop.permute.xlu0 %1090
      %1092 = vrot.lane.b32.xlu0 %v383, 95
      %v1093 = vpop.permute.xlu0 %1092
      %1094 = vrot.lane.b32.xlu0 %v384, 95
      %v1095 = vpop.permute.xlu0 %1094
      %1096 = vrot.lane.b32.xlu0 %v385, 95
      %v1097 = vpop.permute.xlu0 %1096
      %1098 = vrot.lane.b32.xlu0 %v386, 95
      %v1099 = vpop.permute.xlu0 %1098
      %1100 = vrot.lane.b32.xlu0 %v387, 95
      %v1101 = vpop.permute.xlu0 %1100
      %1102 = vrot.lane.b32.xlu0 %v388, 95
      %v1103 = vpop.permute.xlu0 %1102
      %1104 = vrot.lane.b32.xlu0 %v389, 95
      %v1105 = vpop.permute.xlu0 %1104
      %1106 = vrot.lane.b32.xlu0 %v416, 95
      %v1107 = vpop.permute.xlu0 %1106
      %vm1108 = vcmask 777216
      %v1109 = vsel %vm1108, %v1073, %v1075
      %v1110 = vsel %vm1108, %v1075, %v1077
      %v1111 = vsel %vm1108, %v1077, %v1079
      %v1112 = vsel %vm1108, %v1079, %v1081
      %v1113 = vsel %vm1108, %v1081, %v1083
      %v1114 = vsel %vm1108, %v1083, %v1085
      %v1115 = vsel %vm1108, %v1085, %v1087
      %v1116 = vsel %vm1108, %v1087, %v1089
      %v1117 = vsel %vm1108, %v1091, %v1093
      %v1118 = vsel %vm1108, %v1093, %v1095
      %v1119 = vsel %vm1108, %v1095, %v1097
      %v1120 = vsel %vm1108, %v1097, %v1099
      %v1121 = vsel %vm1108, %v1099, %v1101
      %v1122 = vsel %vm1108, %v1101, %v1103
      %v1123 = vsel %vm1108, %v1103, %v1105
      %v1124 = vsel %vm1108, %v1105, %v1107
      %1159 = vrot.lane.b32.xlu0 %v705, 94
      %v1160 = vpop.permute.xlu0 %1159
      %1161 = vrot.lane.b32.xlu0 %v706, 94
      %v1162 = vpop.permute.xlu0 %1161
      %1163 = vrot.lane.b32.xlu0 %v707, 94
      %v1164 = vpop.permute.xlu0 %1163
      %1165 = vrot.lane.b32.xlu0 %v708, 94
      %v1166 = vpop.permute.xlu0 %1165
      %1167 = vrot.lane.b32.xlu0 %v709, 94
      %v1168 = vpop.permute.xlu0 %1167
      %1169 = vrot.lane.b32.xlu0 %v710, 94
      %v1170 = vpop.permute.xlu0 %1169
      %1171 = vrot.lane.b32.xlu0 %v711, 94
      %v1172 = vpop.permute.xlu0 %1171
      %1173 = vrot.lane.b32.xlu0 %v712, 94
      %v1174 = vpop.permute.xlu0 %1173
      %1175 = vrot.lane.b32.xlu0 %v713, 94
      %v1176 = vpop.permute.xlu0 %1175
      %1177 = vrot.lane.b32.xlu0 %v714, 94
      %v1178 = vpop.permute.xlu0 %1177
      %1179 = vrot.lane.b32.xlu0 %v715, 94
      %v1180 = vpop.permute.xlu0 %1179
      %1181 = vrot.lane.b32.xlu0 %v716, 94
      %v1182 = vpop.permute.xlu0 %1181
      %1183 = vrot.lane.b32.xlu0 %v717, 94
      %v1184 = vpop.permute.xlu0 %1183
      %1185 = vrot.lane.b32.xlu0 %v718, 94
      %v1186 = vpop.permute.xlu0 %1185
      %1187 = vrot.lane.b32.xlu0 %v719, 94
      %v1188 = vpop.permute.xlu0 %1187
      %1189 = vrot.lane.b32.xlu0 %v720, 94
      %v1190 = vpop.permute.xlu0 %1189
      %1191 = vrot.lane.b32.xlu0 %v721, 94
      %v1192 = vpop.permute.xlu0 %1191
      %1193 = vrot.lane.b32.xlu0 %v722, 94
      %v1194 = vpop.permute.xlu0 %1193
      %vm1195 = vcmask 769024
      %v1196 = vsel %vm1195, %v1160, %v1162
      %v1197 = vsel %vm1195, %v1162, %v1164
      %v1198 = vsel %vm1195, %v1164, %v1166
      %v1199 = vsel %vm1195, %v1166, %v1168
      %v1200 = vsel %vm1195, %v1168, %v1170
      %v1201 = vsel %vm1195, %v1170, %v1172
      %v1202 = vsel %vm1195, %v1172, %v1174
      %v1203 = vsel %vm1195, %v1174, %v1176
      %v1204 = vsel %vm1195, %v1178, %v1180
      %v1205 = vsel %vm1195, %v1180, %v1182
      %v1206 = vsel %vm1195, %v1182, %v1184
      %v1207 = vsel %vm1195, %v1184, %v1186
      %v1208 = vsel %vm1195, %v1186, %v1188
      %v1209 = vsel %vm1195, %v1188, %v1190
      %v1210 = vsel %vm1195, %v1190, %v1192
      %v1211 = vsel %vm1195, %v1192, %v1194
      %1246 = vrot.lane.b32.xlu0 %v756, 64
      %v1247 = vpop.permute.xlu0 %1246
      %1248 = vrot.lane.b32.xlu0 %v757, 64
      %v1249 = vpop.permute.xlu0 %1248
      %1250 = vrot.lane.b32.xlu0 %v758, 64
      %v1251 = vpop.permute.xlu0 %1250
      %1252 = vrot.lane.b32.xlu0 %v759, 64
      %v1253 = vpop.permute.xlu0 %1252
      %1254 = vrot.lane.b32.xlu0 %v760, 64
      %v1255 = vpop.permute.xlu0 %1254
      %1256 = vrot.lane.b32.xlu0 %v761, 64
      %v1257 = vpop.permute.xlu0 %1256
      %1258 = vrot.lane.b32.xlu0 %v762, 64
      %v1259 = vpop.permute.xlu0 %1258
      %1260 = vrot.lane.b32.xlu0 %v763, 64
      %v1261 = vpop.permute.xlu0 %1260
      %1262 = vrot.lane.b32.xlu0 %v764, 64
      %v1263 = vpop.permute.xlu0 %1262
      %1264 = vrot.lane.b32.xlu0 %v765, 64
      %v1265 = vpop.permute.xlu0 %1264
      %1266 = vrot.lane.b32.xlu0 %v766, 64
      %v1267 = vpop.permute.xlu0 %1266
      %1268 = vrot.lane.b32.xlu0 %v767, 64
      %v1269 = vpop.permute.xlu0 %1268
      %1270 = vrot.lane.b32.xlu0 %v768, 64
      %v1271 = vpop.permute.xlu0 %1270
      %1272 = vrot.lane.b32.xlu0 %v769, 64
      %v1273 = vpop.permute.xlu0 %1272
      %1274 = vrot.lane.b32.xlu0 %v770, 64
      %v1275 = vpop.permute.xlu0 %1274
      %1276 = vrot.lane.b32.xlu0 %v771, 64
      %v1277 = vpop.permute.xlu0 %1276
      %1278 = vrot.lane.b32.xlu0 %v772, 64
      %v1279 = vpop.permute.xlu0 %1278
      %1280 = vrot.lane.b32.xlu0 %v773, 64
      %v1281 = vpop.permute.xlu0 %1280
      %v1282 = vsel %vm739, %v1247, %v1249
      %v1283 = vsel %vm739, %v1249, %v1251
      %v1284 = vsel %vm739, %v1251, %v1253
      %v1285 = vsel %vm739, %v1253, %v1255
      %v1286 = vsel %vm739, %v1255, %v1257
      %v1287 = vsel %vm739, %v1257, %v1259
      %v1288 = vsel %vm739, %v1259, %v1261
      %v1289 = vsel %vm739, %v1261, %v1263
      %v1290 = vsel %vm739, %v1265, %v1267
      %v1291 = vsel %vm739, %v1267, %v1269
      %v1292 = vsel %vm739, %v1269, %v1271
      %v1293 = vsel %vm739, %v1271, %v1273
      %v1294 = vsel %vm739, %v1273, %v1275
      %v1295 = vsel %vm739, %v1275, %v1277
      %v1296 = vsel %vm739, %v1277, %v1279
      %v1297 = vsel %vm739, %v1279, %v1281
      %1314 = vrot.lane.b32.xlu0 %v407, 63
      %v1315 = vpop.permute.xlu0 %1314
      %1316 = vrot.lane.b32.xlu0 %v376, 63
      %v1317 = vpop.permute.xlu0 %1316
      %1318 = vrot.lane.b32.xlu0 %v377, 63
      %v1319 = vpop.permute.xlu0 %1318
      %1320 = vrot.lane.b32.xlu0 %v378, 63
      %v1321 = vpop.permute.xlu0 %1320
      %1322 = vrot.lane.b32.xlu0 %v379, 63
      %v1323 = vpop.permute.xlu0 %1322
      %1324 = vrot.lane.b32.xlu0 %v380, 63
      %v1325 = vpop.permute.xlu0 %1324
      %1326 = vrot.lane.b32.xlu0 %v381, 63
      %v1327 = vpop.permute.xlu0 %1326
      %1328 = vrot.lane.b32.xlu0 %v382, 63
      %v1329 = vpop.permute.xlu0 %1328
      %1330 = vrot.lane.b32.xlu0 %v413, 63
      %v1331 = vpop.permute.xlu0 %1330
      %1332 = vrot.lane.b32.xlu0 %v410, 63
      %v1333 = vpop.permute.xlu0 %1332
      %1334 = vrot.lane.b32.xlu0 %v383, 63
      %v1335 = vpop.permute.xlu0 %1334
      %1336 = vrot.lane.b32.xlu0 %v384, 63
      %v1337 = vpop.permute.xlu0 %1336
      %1338 = vrot.lane.b32.xlu0 %v385, 63
      %v1339 = vpop.permute.xlu0 %1338
      %1340 = vrot.lane.b32.xlu0 %v386, 63
      %v1341 = vpop.permute.xlu0 %1340
      %1342 = vrot.lane.b32.xlu0 %v387, 63
      %v1343 = vpop.permute.xlu0 %1342
      %1344 = vrot.lane.b32.xlu0 %v388, 63
      %v1345 = vpop.permute.xlu0 %1344
      %1346 = vrot.lane.b32.xlu0 %v389, 63
      %v1347 = vpop.permute.xlu0 %1346
      %1348 = vrot.lane.b32.xlu0 %v416, 63
      %v1349 = vpop.permute.xlu0 %1348
      %vm1350 = vcmask 515072
      %v1351 = vsel %vm1350, %v1315, %v1317
      %v1352 = vsel %vm1350, %v1317, %v1319
      %v1353 = vsel %vm1350, %v1319, %v1321
      %v1354 = vsel %vm1350, %v1321, %v1323
      %v1355 = vsel %vm1350, %v1323, %v1325
      %v1356 = vsel %vm1350, %v1325, %v1327
      %v1357 = vsel %vm1350, %v1327, %v1329
      %v1358 = vsel %vm1350, %v1329, %v1331
      %v1359 = vsel %vm1350, %v1333, %v1335
      %v1360 = vsel %vm1350, %v1335, %v1337
      %v1361 = vsel %vm1350, %v1337, %v1339
      %v1362 = vsel %vm1350, %v1339, %v1341
      %v1363 = vsel %vm1350, %v1341, %v1343
      %v1364 = vsel %vm1350, %v1343, %v1345
      %v1365 = vsel %vm1350, %v1345, %v1347
      %v1366 = vsel %vm1350, %v1347, %v1349
      %1401 = vrot.lane.b32.xlu0 %v807, 62
      %v1402 = vpop.permute.xlu0 %1401
      %1403 = vrot.lane.b32.xlu0 %v808, 62
      %v1404 = vpop.permute.xlu0 %1403
      %1405 = vrot.lane.b32.xlu0 %v809, 62
      %v1406 = vpop.permute.xlu0 %1405
      %1407 = vrot.lane.b32.xlu0 %v810, 62
      %v1408 = vpop.permute.xlu0 %1407
      %1409 = vrot.lane.b32.xlu0 %v811, 62
      %v1410 = vpop.permute.xlu0 %1409
      %1411 = vrot.lane.b32.xlu0 %v812, 62
      %v1412 = vpop.permute.xlu0 %1411
      %1413 = vrot.lane.b32.xlu0 %v813, 62
      %v1414 = vpop.permute.xlu0 %1413
      %1415 = vrot.lane.b32.xlu0 %v814, 62
      %v1416 = vpop.permute.xlu0 %1415
      %1417 = vrot.lane.b32.xlu0 %v815, 62
      %v1418 = vpop.permute.xlu0 %1417
      %1419 = vrot.lane.b32.xlu0 %v816, 62
      %v1420 = vpop.permute.xlu0 %1419
      %1421 = vrot.lane.b32.xlu0 %v817, 62
      %v1422 = vpop.permute.xlu0 %1421
      %1423 = vrot.lane.b32.xlu0 %v818, 62
      %v1424 = vpop.permute.xlu0 %1423
      %1425 = vrot.lane.b32.xlu0 %v819, 62
      %v1426 = vpop.permute.xlu0 %1425
      %1427 = vrot.lane.b32.xlu0 %v820, 62
      %v1428 = vpop.permute.xlu0 %1427
      %1429 = vrot.lane.b32.xlu0 %v821, 62
      %v1430 = vpop.permute.xlu0 %1429
      %1431 = vrot.lane.b32.xlu0 %v822, 62
      %v1432 = vpop.permute.xlu0 %1431
      %1433 = vrot.lane.b32.xlu0 %v823, 62
      %v1434 = vpop.permute.xlu0 %1433
      %1435 = vrot.lane.b32.xlu0 %v824, 62
      %v1436 = vpop.permute.xlu0 %1435
      %vm1437 = vcmask 506880
      %v1438 = vsel %vm1437, %v1402, %v1404
      %v1439 = vsel %vm1437, %v1404, %v1406
      %v1440 = vsel %vm1437, %v1406, %v1408
      %v1441 = vsel %vm1437, %v1408, %v1410
      %v1442 = vsel %vm1437, %v1410, %v1412
      %v1443 = vsel %vm1437, %v1412, %v1414
      %v1444 = vsel %vm1437, %v1414, %v1416
      %v1445 = vsel %vm1437, %v1416, %v1418
      %v1446 = vsel %vm1437, %v1420, %v1422
      %v1447 = vsel %vm1437, %v1422, %v1424
      %v1448 = vsel %vm1437, %v1424, %v1426
      %v1449 = vsel %vm1437, %v1426, %v1428
      %v1450 = vsel %vm1437, %v1428, %v1430
      %v1451 = vsel %vm1437, %v1430, %v1432
      %v1452 = vsel %vm1437, %v1432, %v1434
      %v1453 = vsel %vm1437, %v1434, %v1436
      %v1470 = vld [vmem:[%s1] sm:$0xff]
      %v1471 = vld [vmem:[%s1 + $0x8] sm:$0xf]
      %v1472 = vld [vmem:[%s1 + $0xc] sm:$0xff]
      %v1473 = vld [vmem:[%s1 + $0x14] sm:$0xf]
      %v1474 = vld [vmem:[%s1 + $0x18] sm:$0xff]
      %v1475 = vld [vmem:[%s1 + $0x20] sm:$0xf]
      %v1476 = vld [vmem:[%s1 + $0x24] sm:$0xff]
      %v1477 = vld [vmem:[%s1 + $0x2c] sm:$0xf]
      %v1486 = vunpack.c.l.b16 %v1470
      %v1487 = vunpack.c.h.b16 %v1470
      %v1488 = vunpack.c.l.b16 %v1471
      %v1489 = vunpack.c.l.b16 %v1472
      %v1490 = vunpack.c.h.b16 %v1472
      %v1491 = vunpack.c.l.b16 %v1473
      %v1492 = vunpack.c.l.b16 %v1474
      %v1493 = vunpack.c.h.b16 %v1474
      %v1494 = vunpack.c.l.b16 %v1475
      %v1495 = vunpack.c.l.b16 %v1476
      %v1496 = vunpack.c.h.b16 %v1476
      %v1497 = vunpack.c.l.b16 %v1477
      %v1498 = vpack.c.b16 %v1489, %v1486
      %v1499 = vpack.c.b16 %v1490, %v1487
      %v1500 = vpack.c.b16 %v1491, %v1488
      %v1501 = vpack.c.b16 %v1495, %v1492
      %v1502 = vpack.c.b16 %v1496, %v1493
      %v1503 = vpack.c.b16 %v1497, %v1494
      %vm1508 = vcmask 261120
      %v1510 = vsel %vm1508, %v1500, 0
      %v1513 = vsel %vm1508, %v1503, 0
      %1515 = vmatprep.subr.bf16.mxu0 %v1049
      %1516 = vmatpush1.bf16.msra.mxu0 %v1048
      %1517 = vmatprep.subr.bf16.mxu0 %v1041
      %1518 = vmatpush1.bf16.msra.mxu0 %v1040
      %1519 = vmatprep.subr.bf16.mxu0 %v962
      %1520 = vmatpush1.bf16.msra.mxu0 %v961
      %1521 = vmatprep.subr.bf16.mxu0 %v954
      %1522 = vmatpush1.bf16.msra.mxu0 %v953
      %1523 = vmatprep.subr.bf16.mxu0 %v875
      %1524 = vmatpush1.bf16.msra.mxu0 %v874
      %1525 = vmatprep.subr.bf16.mxu0 %v867
      %1526 = vmatpush1.bf16.msra.mxu0 %v866
      %1527 = vmatprep.subr.bf16.mxu0 %v499
      %1528 = vmatpush1.bf16.msra.mxu0 %v498
      %1529 = vmatprep.subr.bf16.mxu0 %v491
      %1530 = vmatpush1.bf16.msra.mxu0 %v490
      %1531 = vmatprep.subr.bf16.mxu0 %v1360
      %1532 = vmatpush2.bf16.msra.mxu0 %v1359
      %1533 = vmatprep.subr.bf16.mxu0 %v1352
      %1534 = vmatpush2.bf16.msra.mxu0 %v1351
      %1535 = vmatprep.subr.bf16.mxu0 %v1291
      %1536 = vmatpush2.bf16.msra.mxu0 %v1290
      %1537 = vmatprep.subr.bf16.mxu0 %v1283
      %1538 = vmatpush2.bf16.msra.mxu0 %v1282
      %1539 = vmatprep.subr.bf16.mxu0 %v1205
      %1540 = vmatpush2.bf16.msra.mxu0 %v1204
      %1541 = vmatprep.subr.bf16.mxu0 %v1197
      %1542 = vmatpush2.bf16.msra.mxu0 %v1196
      %1543 = vmatprep.subr.bf16.mxu0 %v1118
      %1544 = vmatpush2.bf16.msra.mxu0 %v1117
      %1545 = vmatprep.subr.bf16.mxu0 %v1110
      %1546 = vmatpush2.bf16.msra.mxu0 %v1109
      %1547 = vmatprep.mubr.bf16.mxu0 %v1499
      %1548 = vmatmul.mubr.bf16.gmra.mxu0 %v1498
      %v1549 = vpop.f32.mrf.mxu0
      %v1550 = vadd.f32 0.0, %v1549
      %v1551 = vpop.f32.mrf.mxu0
      %v1552 = vadd.f32 0.0, %v1551
      %v1553 = vpop.f32.mrf.mxu0
      %v1554 = vadd.f32 0.0, %v1553
      %v1555 = vpop.f32.mrf.mxu0
      %v1556 = vadd.f32 0.0, %v1555
      %1557 = vmatprep.mubr.bf16.mxu0 %v1502
      %1558 = vmatmul.mubr.bf16.gmra.mxu0 %v1501
      %v1559 = vpop.f32.mrf.mxu0
      %v1560 = vadd.f32 0.0, %v1559
      %v1561 = vpop.f32.mrf.mxu0
      %v1562 = vadd.f32 0.0, %v1561
      %v1563 = vpop.f32.mrf.mxu0
      %v1564 = vadd.f32 0.0, %v1563
      %v1565 = vpop.f32.mrf.mxu0
      %v1566 = vadd.f32 0.0, %v1565
      %1567 = vdwg.mxu0
      %1568 = vmatprep.subr.bf16.mxu0 0
      %1569 = vmatpush1.bf16.msra.mxu0 0
      %1570 = vmatprep.subr.bf16.mxu0 0
      %1571 = vmatpush1.bf16.msra.mxu0 0
      %1572 = vmatprep.subr.bf16.mxu0 0
      %1573 = vmatpush1.bf16.msra.mxu0 0
      %1574 = vmatprep.subr.bf16.mxu0 0
      %1575 = vmatpush1.bf16.msra.mxu0 0
      %1576 = vmatprep.subr.bf16.mxu0 0
      %1577 = vmatpush1.bf16.msra.mxu0 0
      %1578 = vmatprep.subr.bf16.mxu0 0
      %1579 = vmatpush1.bf16.msra.mxu0 0
      %1580 = vmatprep.subr.bf16.mxu0 %v1447
      %1581 = vmatpush1.bf16.msra.mxu0 %v1446
      %1582 = vmatprep.subr.bf16.mxu0 %v1439
      %1583 = vmatpush1.bf16.msra.mxu0 %v1438
      %1584 = vmatprep.subr.bf16.mxu0 0
      %1585 = vmatpush2.bf16.msra.mxu0 0
      %1586 = vmatprep.subr.bf16.mxu0 0
      %1587 = vmatpush2.bf16.msra.mxu0 0
      %1588 = vmatprep.subr.bf16.mxu0 0
      %1589 = vmatpush2.bf16.msra.mxu0 0
      %1590 = vmatprep.subr.bf16.mxu0 0
      %1591 = vmatpush2.bf16.msra.mxu0 0
      %1592 = vmatprep.subr.bf16.mxu0 0
      %1593 = vmatpush2.bf16.msra.mxu0 0
      %1594 = vmatprep.subr.bf16.mxu0 0
      %1595 = vmatpush2.bf16.msra.mxu0 0
      %1596 = vmatprep.subr.bf16.mxu0 0
      %1597 = vmatpush2.bf16.msra.mxu0 0
      %1598 = vmatprep.subr.bf16.mxu0 0
      %1599 = vmatpush2.bf16.msra.mxu0 0
      %1600 = vmatprep.mubr.bf16.mxu0 0
      %1601 = vmatmul.mubr.bf16.gmra.mxu0 %v1510
      %v1602 = vpop.f32.mrf.mxu0
      %v1603 = vadd.f32 %v1550, %v1602
      %v1604 = vpop.f32.mrf.mxu0
      %v1605 = vadd.f32 %v1552, %v1604
      %v1606 = vpop.f32.mrf.mxu0
      %v1607 = vadd.f32 %v1554, %v1606
      %v1608 = vpop.f32.mrf.mxu0
      %v1609 = vadd.f32 %v1556, %v1608
      %1610 = vmatprep.mubr.bf16.mxu0 0
      %1611 = vmatmul.mubr.bf16.gmra.mxu0 %v1513
      %v1612 = vpop.f32.mrf.mxu0
      %v1613 = vadd.f32 %v1560, %v1612
      %v1614 = vpop.f32.mrf.mxu0
      %v1615 = vadd.f32 %v1562, %v1614
      %v1616 = vpop.f32.mrf.mxu0
      %v1617 = vadd.f32 %v1564, %v1616
      %v1618 = vpop.f32.mrf.mxu0
      %v1619 = vadd.f32 %v1566, %v1618
      %1620 = vdwg.mxu0
      %1621 = vmatprep.subr.bf16.mxu0 %v1051
      %1622 = vmatpush1.bf16.msra.mxu0 %v1050
      %1623 = vmatprep.subr.bf16.mxu0 %v1043
      %1624 = vmatpush1.bf16.msra.mxu0 %v1042
      %1625 = vmatprep.subr.bf16.mxu0 %v964
      %1626 = vmatpush1.bf16.msra.mxu0 %v963
      %1627 = vmatprep.subr.bf16.mxu0 %v956
      %1628 = vmatpush1.bf16.msra.mxu0 %v955
      %1629 = vmatprep.subr.bf16.mxu0 %v877
      %1630 = vmatpush1.bf16.msra.mxu0 %v876
      %1631 = vmatprep.subr.bf16.mxu0 %v869
      %1632 = vmatpush1.bf16.msra.mxu0 %v868
      %1633 = vmatprep.subr.bf16.mxu0 %v501
      %1634 = vmatpush1.bf16.msra.mxu0 %v500
      %1635 = vmatprep.subr.bf16.mxu0 %v493
      %1636 = vmatpush1.bf16.msra.mxu0 %v492
      %1637 = vmatprep.subr.bf16.mxu0 %v1362
      %1638 = vmatpush2.bf16.msra.mxu0 %v1361
      %1639 = vmatprep.subr.bf16.mxu0 %v1354
      %1640 = vmatpush2.bf16.msra.mxu0 %v1353
      %1641 = vmatprep.subr.bf16.mxu0 %v1293
      %1642 = vmatpush2.bf16.msra.mxu0 %v1292
      %1643 = vmatprep.subr.bf16.mxu0 %v1285
      %1644 = vmatpush2.bf16.msra.mxu0 %v1284
      %1645 = vmatprep.subr.bf16.mxu0 %v1207
      %1646 = vmatpush2.bf16.msra.mxu0 %v1206
      %1647 = vmatprep.subr.bf16.mxu0 %v1199
      %1648 = vmatpush2.bf16.msra.mxu0 %v1198
      %1649 = vmatprep.subr.bf16.mxu0 %v1120
      %1650 = vmatpush2.bf16.msra.mxu0 %v1119
      %1651 = vmatprep.subr.bf16.mxu0 %v1112
      %1652 = vmatpush2.bf16.msra.mxu0 %v1111
      %1653 = vmatprep.mubr.bf16.mxu0 %v1499
      %1654 = vmatmul.mubr.bf16.gmra.mxu0 %v1498
      %v1655 = vpop.f32.mrf.mxu0
      %v1656 = vadd.f32 0.0, %v1655
      %v1657 = vpop.f32.mrf.mxu0
      %v1658 = vadd.f32 0.0, %v1657
      %v1659 = vpop.f32.mrf.mxu0
      %v1660 = vadd.f32 0.0, %v1659
      %v1661 = vpop.f32.mrf.mxu0
      %v1662 = vadd.f32 0.0, %v1661
      %1663 = vmatprep.mubr.bf16.mxu0 %v1502
      %1664 = vmatmul.mubr.bf16.gmra.mxu0 %v1501
      %v1665 = vpop.f32.mrf.mxu0
      %v1666 = vadd.f32 0.0, %v1665
      %v1667 = vpop.f32.mrf.mxu0
      %v1668 = vadd.f32 0.0, %v1667
      %v1669 = vpop.f32.mrf.mxu0
      %v1670 = vadd.f32 0.0, %v1669
      %v1671 = vpop.f32.mrf.mxu0
      %v1672 = vadd.f32 0.0, %v1671
      %1673 = vdwg.mxu0
      %1674 = vmatprep.subr.bf16.mxu0 0
      %1675 = vmatpush1.bf16.msra.mxu0 0
      %1676 = vmatprep.subr.bf16.mxu0 0
      %1677 = vmatpush1.bf16.msra.mxu0 0
      %1678 = vmatprep.subr.bf16.mxu0 0
      %1679 = vmatpush1.bf16.msra.mxu0 0
      %1680 = vmatprep.subr.bf16.mxu0 0
      %1681 = vmatpush1.bf16.msra.mxu0 0
      %1682 = vmatprep.subr.bf16.mxu0 0
      %1683 = vmatpush1.bf16.msra.mxu0 0
      %1684 = vmatprep.subr.bf16.mxu0 0
      %1685 = vmatpush1.bf16.msra.mxu0 0
      %1686 = vmatprep.subr.bf16.mxu0 %v1449
      %1687 = vmatpush1.bf16.msra.mxu0 %v1448
      %1688 = vmatprep.subr.bf16.mxu0 %v1441
      %1689 = vmatpush1.bf16.msra.mxu0 %v1440
      %1690 = vmatprep.subr.bf16.mxu0 0
      %1691 = vmatpush2.bf16.msra.mxu0 0
      %1692 = vmatprep.subr.bf16.mxu0 0
      %1693 = vmatpush2.bf16.msra.mxu0 0
      %1694 = vmatprep.subr.bf16.mxu0 0
      %1695 = vmatpush2.bf16.msra.mxu0 0
      %1696 = vmatprep.subr.bf16.mxu0 0
      %1697 = vmatpush2.bf16.msra.mxu0 0
      %1698 = vmatprep.subr.bf16.mxu0 0
      %1699 = vmatpush2.bf16.msra.mxu0 0
      %1700 = vmatprep.subr.bf16.mxu0 0
      %1701 = vmatpush2.bf16.msra.mxu0 0
      %1702 = vmatprep.subr.bf16.mxu0 0
      %1703 = vmatpush2.bf16.msra.mxu0 0
      %1704 = vmatprep.subr.bf16.mxu0 0
      %1705 = vmatpush2.bf16.msra.mxu0 0
      %1706 = vmatprep.mubr.bf16.mxu0 0
      %1707 = vmatmul.mubr.bf16.gmra.mxu0 %v1510
      %v1708 = vpop.f32.mrf.mxu0
      %v1709 = vadd.f32 %v1656, %v1708
      %v1710 = vpop.f32.mrf.mxu0
      %v1711 = vadd.f32 %v1658, %v1710
      %v1712 = vpop.f32.mrf.mxu0
      %v1713 = vadd.f32 %v1660, %v1712
      %v1714 = vpop.f32.mrf.mxu0
      %v1715 = vadd.f32 %v1662, %v1714
      %1716 = vmatprep.mubr.bf16.mxu0 0
      %1717 = vmatmul.mubr.bf16.gmra.mxu0 %v1513
      %v1718 = vpop.f32.mrf.mxu0
      %v1719 = vadd.f32 %v1666, %v1718
      %v1720 = vpop.f32.mrf.mxu0
      %v1721 = vadd.f32 %v1668, %v1720
      %v1722 = vpop.f32.mrf.mxu0
      %v1723 = vadd.f32 %v1670, %v1722
      %v1724 = vpop.f32.mrf.mxu0
      %v1725 = vadd.f32 %v1672, %v1724
      %1726 = vdwg.mxu0
      %1727 = vmatprep.subr.bf16.mxu0 %v1053
      %1728 = vmatpush1.bf16.msra.mxu0 %v1052
      %1729 = vmatprep.subr.bf16.mxu0 %v1045
      %1730 = vmatpush1.bf16.msra.mxu0 %v1044
      %1731 = vmatprep.subr.bf16.mxu0 %v966
      %1732 = vmatpush1.bf16.msra.mxu0 %v965
      %1733 = vmatprep.subr.bf16.mxu0 %v958
      %1734 = vmatpush1.bf16.msra.mxu0 %v957
      %1735 = vmatprep.subr.bf16.mxu0 %v879
      %1736 = vmatpush1.bf16.msra.mxu0 %v878
      %1737 = vmatprep.subr.bf16.mxu0 %v871
      %1738 = vmatpush1.bf16.msra.mxu0 %v870
      %1739 = vmatprep.subr.bf16.mxu0 %v503
      %1740 = vmatpush1.bf16.msra.mxu0 %v502
      %1741 = vmatprep.subr.bf16.mxu0 %v495
      %1742 = vmatpush1.bf16.msra.mxu0 %v494
      %1743 = vmatprep.subr.bf16.mxu0 %v1364
      %1744 = vmatpush2.bf16.msra.mxu0 %v1363
      %1745 = vmatprep.subr.bf16.mxu0 %v1356
      %1746 = vmatpush2.bf16.msra.mxu0 %v1355
      %1747 = vmatprep.subr.bf16.mxu0 %v1295
      %1748 = vmatpush2.bf16.msra.mxu0 %v1294
      %1749 = vmatprep.subr.bf16.mxu0 %v1287
      %1750 = vmatpush2.bf16.msra.mxu0 %v1286
      %1751 = vmatprep.subr.bf16.mxu0 %v1209
      %1752 = vmatpush2.bf16.msra.mxu0 %v1208
      %1753 = vmatprep.subr.bf16.mxu0 %v1201
      %1754 = vmatpush2.bf16.msra.mxu0 %v1200
      %1755 = vmatprep.subr.bf16.mxu0 %v1122
      %1756 = vmatpush2.bf16.msra.mxu0 %v1121
      %1757 = vmatprep.subr.bf16.mxu0 %v1114
      %1758 = vmatpush2.bf16.msra.mxu0 %v1113
      %1759 = vmatprep.mubr.bf16.mxu0 %v1499
      %1760 = vmatmul.mubr.bf16.gmra.mxu0 %v1498
      %v1761 = vpop.f32.mrf.mxu0
      %v1762 = vadd.f32 0.0, %v1761
      %v1763 = vpop.f32.mrf.mxu0
      %v1764 = vadd.f32 0.0, %v1763
      %v1765 = vpop.f32.mrf.mxu0
      %v1766 = vadd.f32 0.0, %v1765
      %v1767 = vpop.f32.mrf.mxu0
      %v1768 = vadd.f32 0.0, %v1767
      %1769 = vmatprep.mubr.bf16.mxu0 %v1502
      %1770 = vmatmul.mubr.bf16.gmra.mxu0 %v1501
      %v1771 = vpop.f32.mrf.mxu0
      %v1772 = vadd.f32 0.0, %v1771
      %v1773 = vpop.f32.mrf.mxu0
      %v1774 = vadd.f32 0.0, %v1773
      %v1775 = vpop.f32.mrf.mxu0
      %v1776 = vadd.f32 0.0, %v1775
      %v1777 = vpop.f32.mrf.mxu0
      %v1778 = vadd.f32 0.0, %v1777
      %1779 = vdwg.mxu0
      %1780 = vmatprep.subr.bf16.mxu0 0
      %1781 = vmatpush1.bf16.msra.mxu0 0
      %1782 = vmatprep.subr.bf16.mxu0 0
      %1783 = vmatpush1.bf16.msra.mxu0 0
      %1784 = vmatprep.subr.bf16.mxu0 0
      %1785 = vmatpush1.bf16.msra.mxu0 0
      %1786 = vmatprep.subr.bf16.mxu0 0
      %1787 = vmatpush1.bf16.msra.mxu0 0
      %1788 = vmatprep.subr.bf16.mxu0 0
      %1789 = vmatpush1.bf16.msra.mxu0 0
      %1790 = vmatprep.subr.bf16.mxu0 0
      %1791 = vmatpush1.bf16.msra.mxu0 0
      %1792 = vmatprep.subr.bf16.mxu0 %v1451
      %1793 = vmatpush1.bf16.msra.mxu0 %v1450
      %1794 = vmatprep.subr.bf16.mxu0 %v1443
      %1795 = vmatpush1.bf16.msra.mxu0 %v1442
      %1796 = vmatprep.subr.bf16.mxu0 0
      %1797 = vmatpush2.bf16.msra.mxu0 0
      %1798 = vmatprep.subr.bf16.mxu0 0
      %1799 = vmatpush2.bf16.msra.mxu0 0
      %1800 = vmatprep.subr.bf16.mxu0 0
      %1801 = vmatpush2.bf16.msra.mxu0 0
      %1802 = vmatprep.subr.bf16.mxu0 0
      %1803 = vmatpush2.bf16.msra.mxu0 0
      %1804 = vmatprep.subr.bf16.mxu0 0
      %1805 = vmatpush2.bf16.msra.mxu0 0
      %1806 = vmatprep.subr.bf16.mxu0 0
      %1807 = vmatpush2.bf16.msra.mxu0 0
      %1808 = vmatprep.subr.bf16.mxu0 0
      %1809 = vmatpush2.bf16.msra.mxu0 0
      %1810 = vmatprep.subr.bf16.mxu0 0
      %1811 = vmatpush2.bf16.msra.mxu0 0
      %1812 = vmatprep.mubr.bf16.mxu0 0
      %1813 = vmatmul.mubr.bf16.gmra.mxu0 %v1510
      %v1814 = vpop.f32.mrf.mxu0
      %v1815 = vadd.f32 %v1762, %v1814
      %v1816 = vpop.f32.mrf.mxu0
      %v1817 = vadd.f32 %v1764, %v1816
      %v1818 = vpop.f32.mrf.mxu0
      %v1819 = vadd.f32 %v1766, %v1818
      %v1820 = vpop.f32.mrf.mxu0
      %v1821 = vadd.f32 %v1768, %v1820
      %1822 = vmatprep.mubr.bf16.mxu0 0
      %1823 = vmatmul.mubr.bf16.gmra.mxu0 %v1513
      %v1824 = vpop.f32.mrf.mxu0
      %v1825 = vadd.f32 %v1772, %v1824
      %v1826 = vpop.f32.mrf.mxu0
      %v1827 = vadd.f32 %v1774, %v1826
      %v1828 = vpop.f32.mrf.mxu0
      %v1829 = vadd.f32 %v1776, %v1828
      %v1830 = vpop.f32.mrf.mxu0
      %v1831 = vadd.f32 %v1778, %v1830
      %1832 = vdwg.mxu0
      %1833 = vmatprep.subr.bf16.mxu0 %v1055
      %1834 = vmatpush1.bf16.msra.mxu0 %v1054
      %1835 = vmatprep.subr.bf16.mxu0 %v1047
      %1836 = vmatpush1.bf16.msra.mxu0 %v1046
      %1837 = vmatprep.subr.bf16.mxu0 %v968
      %1838 = vmatpush1.bf16.msra.mxu0 %v967
      %1839 = vmatprep.subr.bf16.mxu0 %v960
      %1840 = vmatpush1.bf16.msra.mxu0 %v959
      %1841 = vmatprep.subr.bf16.mxu0 %v881
      %1842 = vmatpush1.bf16.msra.mxu0 %v880
      %1843 = vmatprep.subr.bf16.mxu0 %v873
      %1844 = vmatpush1.bf16.msra.mxu0 %v872
      %1845 = vmatprep.subr.bf16.mxu0 %v505
      %1846 = vmatpush1.bf16.msra.mxu0 %v504
      %1847 = vmatprep.subr.bf16.mxu0 %v497
      %1848 = vmatpush1.bf16.msra.mxu0 %v496
      %1849 = vmatprep.subr.bf16.mxu0 %v1366
      %1850 = vmatpush2.bf16.msra.mxu0 %v1365
      %1851 = vmatprep.subr.bf16.mxu0 %v1358
      %1852 = vmatpush2.bf16.msra.mxu0 %v1357
      %1853 = vmatprep.subr.bf16.mxu0 %v1297
      %1854 = vmatpush2.bf16.msra.mxu0 %v1296
      %1855 = vmatprep.subr.bf16.mxu0 %v1289
      %1856 = vmatpush2.bf16.msra.mxu0 %v1288
      %1857 = vmatprep.subr.bf16.mxu0 %v1211
      %1858 = vmatpush2.bf16.msra.mxu0 %v1210
      %1859 = vmatprep.subr.bf16.mxu0 %v1203
      %1860 = vmatpush2.bf16.msra.mxu0 %v1202
      %1861 = vmatprep.subr.bf16.mxu0 %v1124
      %1862 = vmatpush2.bf16.msra.mxu0 %v1123
      %1863 = vmatprep.subr.bf16.mxu0 %v1116
      %1864 = vmatpush2.bf16.msra.mxu0 %v1115
      %1865 = vmatprep.mubr.bf16.mxu0 %v1499
      %1866 = vmatmul.mubr.bf16.gmra.mxu0 %v1498
      %v1867 = vpop.f32.mrf.mxu0
      %v1868 = vadd.f32 0.0, %v1867
      %v1869 = vpop.f32.mrf.mxu0
      %v1870 = vadd.f32 0.0, %v1869
      %v1871 = vpop.f32.mrf.mxu0
      %v1872 = vadd.f32 0.0, %v1871
      %v1873 = vpop.f32.mrf.mxu0
      %v1874 = vadd.f32 0.0, %v1873
      %1875 = vmatprep.mubr.bf16.mxu0 %v1502
      %1876 = vmatmul.mubr.bf16.gmra.mxu0 %v1501
      %v1877 = vpop.f32.mrf.mxu0
      %v1878 = vadd.f32 0.0, %v1877
      %v1879 = vpop.f32.mrf.mxu0
      %v1880 = vadd.f32 0.0, %v1879
      %v1881 = vpop.f32.mrf.mxu0
      %v1882 = vadd.f32 0.0, %v1881
      %v1883 = vpop.f32.mrf.mxu0
      %v1884 = vadd.f32 0.0, %v1883
      %1885 = vdwg.mxu0
      %1886 = vmatprep.subr.bf16.mxu0 0
      %1887 = vmatpush1.bf16.msra.mxu0 0
      %1888 = vmatprep.subr.bf16.mxu0 0
      %1889 = vmatpush1.bf16.msra.mxu0 0
      %1890 = vmatprep.subr.bf16.mxu0 0
      %1891 = vmatpush1.bf16.msra.mxu0 0
      %1892 = vmatprep.subr.bf16.mxu0 0
      %1893 = vmatpush1.bf16.msra.mxu0 0
      %1894 = vmatprep.subr.bf16.mxu0 0
      %1895 = vmatpush1.bf16.msra.mxu0 0
      %1896 = vmatprep.subr.bf16.mxu0 0
      %1897 = vmatpush1.bf16.msra.mxu0 0
      %1898 = vmatprep.subr.bf16.mxu0 %v1453
      %1899 = vmatpush1.bf16.msra.mxu0 %v1452
      %1900 = vmatprep.subr.bf16.mxu0 %v1445
      %1901 = vmatpush1.bf16.msra.mxu0 %v1444
      %1902 = vmatprep.subr.bf16.mxu0 0
      %1903 = vmatpush2.bf16.msra.mxu0 0
      %1904 = vmatprep.subr.bf16.mxu0 0
      %1905 = vmatpush2.bf16.msra.mxu0 0
      %1906 = vmatprep.subr.bf16.mxu0 0
      %1907 = vmatpush2.bf16.msra.mxu0 0
      %1908 = vmatprep.subr.bf16.mxu0 0
      %1909 = vmatpush2.bf16.msra.mxu0 0
      %1910 = vmatprep.subr.bf16.mxu0 0
      %1911 = vmatpush2.bf16.msra.mxu0 0
      %1912 = vmatprep.subr.bf16.mxu0 0
      %1913 = vmatpush2.bf16.msra.mxu0 0
      %1914 = vmatprep.subr.bf16.mxu0 0
      %1915 = vmatpush2.bf16.msra.mxu0 0
      %1916 = vmatprep.subr.bf16.mxu0 0
      %1917 = vmatpush2.bf16.msra.mxu0 0
      %1918 = vmatprep.mubr.bf16.mxu0 0
      %1919 = vmatmul.mubr.bf16.gmra.mxu0 %v1510
      %v1920 = vpop.f32.mrf.mxu0
      %v1921 = vadd.f32 %v1868, %v1920
      %v1922 = vpop.f32.mrf.mxu0
      %v1923 = vadd.f32 %v1870, %v1922
      %v1924 = vpop.f32.mrf.mxu0
      %v1925 = vadd.f32 %v1872, %v1924
      %v1926 = vpop.f32.mrf.mxu0
      %v1927 = vadd.f32 %v1874, %v1926
      %1928 = vmatprep.mubr.bf16.mxu0 0
      %1929 = vmatmul.mubr.bf16.gmra.mxu0 %v1513
      %v1930 = vpop.f32.mrf.mxu0
      %v1931 = vadd.f32 %v1878, %v1930
      %v1932 = vpop.f32.mrf.mxu0
      %v1933 = vadd.f32 %v1880, %v1932
      %v1934 = vpop.f32.mrf.mxu0
      %v1935 = vadd.f32 %v1882, %v1934
      %v1936 = vpop.f32.mrf.mxu0
      %v1937 = vadd.f32 %v1884, %v1936
      %1938 = vdwg.mxu0
      %vm1939 = vcmp.ge.f32.partialorder %v1603, 0.0
      %vm1940 = vcmp.ge.f32.partialorder %v1605, 0.0
      %vm1941 = vcmp.ge.f32.partialorder %v1709, 0.0
      %vm1942 = vcmp.ge.f32.partialorder %v1711, 0.0
      %vm1943 = vcmp.ge.f32.partialorder %v1815, 0.0
      %vm1944 = vcmp.ge.f32.partialorder %v1817, 0.0
      %vm1945 = vcmp.ge.f32.partialorder %v1921, 0.0
      %vm1946 = vcmp.ge.f32.partialorder %v1923, 0.0
      %vm1947 = vcmp.ge.f32.partialorder %v1607, 0.0
      %vm1948 = vcmp.ge.f32.partialorder %v1609, 0.0
      %vm1949 = vcmp.ge.f32.partialorder %v1713, 0.0
      %vm1950 = vcmp.ge.f32.partialorder %v1715, 0.0
      %vm1951 = vcmp.ge.f32.partialorder %v1819, 0.0
      %vm1952 = vcmp.ge.f32.partialorder %v1821, 0.0
      %vm1953 = vcmp.ge.f32.partialorder %v1925, 0.0
      %vm1954 = vcmp.ge.f32.partialorder %v1927, 0.0
      %vm1955 = vcmp.ge.f32.partialorder %v1613, 0.0
      %vm1956 = vcmp.ge.f32.partialorder %v1615, 0.0
      %vm1957 = vcmp.ge.f32.partialorder %v1719, 0.0
      %vm1958 = vcmp.ge.f32.partialorder %v1721, 0.0
      %vm1959 = vcmp.ge.f32.partialorder %v1825, 0.0
      %vm1960 = vcmp.ge.f32.partialorder %v1827, 0.0
      %vm1961 = vcmp.ge.f32.partialorder %v1931, 0.0
      %vm1962 = vcmp.ge.f32.partialorder %v1933, 0.0
      %vm1963 = vcmp.ge.f32.partialorder %v1617, 0.0
      %vm1964 = vcmp.ge.f32.partialorder %v1619, 0.0
      %vm1965 = vcmp.ge.f32.partialorder %v1723, 0.0
      %vm1966 = vcmp.ge.f32.partialorder %v1725, 0.0
      %vm1967 = vcmp.ge.f32.partialorder %v1829, 0.0
      %vm1968 = vcmp.ge.f32.partialorder %v1831, 0.0
      %vm1969 = vcmp.ge.f32.partialorder %v1935, 0.0
      %vm1970 = vcmp.ge.f32.partialorder %v1937, 0.0
      %v1971 = vmul.f32 %v1603, 0.1
      %v1972 = vmul.f32 %v1605, 0.1
      %v1973 = vmul.f32 %v1709, 0.1
      %v1974 = vmul.f32 %v1711, 0.1
      %v1975 = vmul.f32 %v1815, 0.1
      %v1976 = vmul.f32 %v1817, 0.1
      %v1977 = vmul.f32 %v1921, 0.1
      %v1978 = vmul.f32 %v1923, 0.1
      %v1979 = vmul.f32 %v1607, 0.1
      %v1980 = vmul.f32 %v1609, 0.1
      %v1981 = vmul.f32 %v1713, 0.1
      %v1982 = vmul.f32 %v1715, 0.1
      %v1983 = vmul.f32 %v1819, 0.1
      %v1984 = vmul.f32 %v1821, 0.1
      %v1985 = vmul.f32 %v1925, 0.1
      %v1986 = vmul.f32 %v1927, 0.1
      %v1987 = vmul.f32 %v1613, 0.1
      %v1988 = vmul.f32 %v1615, 0.1
      %v1989 = vmul.f32 %v1719, 0.1
      %v1990 = vmul.f32 %v1721, 0.1
      %v1991 = vmul.f32 %v1825, 0.1
      %v1992 = vmul.f32 %v1827, 0.1
      %v1993 = vmul.f32 %v1931, 0.1
      %v1994 = vmul.f32 %v1933, 0.1
      %v1995 = vmul.f32 %v1617, 0.1
      %v1996 = vmul.f32 %v1619, 0.1
      %v1997 = vmul.f32 %v1723, 0.1
      %v1998 = vmul.f32 %v1725, 0.1
      %v1999 = vmul.f32 %v1829, 0.1
      %v2000 = vmul.f32 %v1831, 0.1
      %v2001 = vmul.f32 %v1935, 0.1
      %v2002 = vmul.f32 %v1937, 0.1
      %v2003 = vsel %vm1939, %v1603, %v1971
      %v2004 = vsel %vm1940, %v1605, %v1972
      %v2005 = vsel %vm1941, %v1709, %v1973
      %v2006 = vsel %vm1942, %v1711, %v1974
      %v2007 = vsel %vm1943, %v1815, %v1975
      %v2008 = vsel %vm1944, %v1817, %v1976
      %v2009 = vsel %vm1945, %v1921, %v1977
      %v2010 = vsel %vm1946, %v1923, %v1978
      %v2011 = vsel %vm1947, %v1607, %v1979
      %v2012 = vsel %vm1948, %v1609, %v1980
      %v2013 = vsel %vm1949, %v1713, %v1981
      %v2014 = vsel %vm1950, %v1715, %v1982
      %v2015 = vsel %vm1951, %v1819, %v1983
      %v2016 = vsel %vm1952, %v1821, %v1984
      %v2017 = vsel %vm1953, %v1925, %v1985
      %v2018 = vsel %vm1954, %v1927, %v1986
      %v2019 = vsel %vm1955, %v1613, %v1987
      %v2020 = vsel %vm1956, %v1615, %v1988
      %v2021 = vsel %vm1957, %v1719, %v1989
      %v2022 = vsel %vm1958, %v1721, %v1990
      %v2023 = vsel %vm1959, %v1825, %v1991
      %v2024 = vsel %vm1960, %v1827, %v1992
      %v2025 = vsel %vm1961, %v1931, %v1993
      %v2026 = vsel %vm1962, %v1933, %v1994
      %v2027 = vsel %vm1963, %v1617, %v1995
      %v2028 = vsel %vm1964, %v1619, %v1996
      %v2029 = vsel %vm1965, %v1723, %v1997
      %v2030 = vsel %vm1966, %v1725, %v1998
      %v2031 = vsel %vm1967, %v1829, %v1999
      %v2032 = vsel %vm1968, %v1831, %v2000
      %v2033 = vsel %vm1969, %v1935, %v2001
      %v2034 = vsel %vm1970, %v1937, %v2002
      %v2035 = vpack.c.bf16 %v2011, %v2003
      %v2036 = vpack.c.bf16 %v2012, %v2004
      %v2037 = vpack.c.bf16 %v2013, %v2005
      %v2038 = vpack.c.bf16 %v2014, %v2006
      %v2039 = vpack.c.bf16 %v2015, %v2007
      %v2040 = vpack.c.bf16 %v2016, %v2008
      %v2041 = vpack.c.bf16 %v2017, %v2009
      %v2042 = vpack.c.bf16 %v2018, %v2010
      %v2043 = vpack.c.bf16 %v2027, %v2019
      %v2044 = vpack.c.bf16 %v2028, %v2020
      %v2045 = vpack.c.bf16 %v2029, %v2021
      %v2046 = vpack.c.bf16 %v2030, %v2022
      %v2047 = vpack.c.bf16 %v2031, %v2023
      %v2048 = vpack.c.bf16 %v2032, %v2024
      %v2049 = vpack.c.bf16 %v2033, %v2025
      %v2050 = vpack.c.bf16 %v2034, %v2026
      %2067 = vrot.lane.b32.xlu0 %v2035, 33
      %v2068 = vpop.permute.xlu0 %2067
      %2069 = vrot.lane.b32.xlu0 %v2036, 33
      %v2070 = vpop.permute.xlu0 %2069
      %2071 = vrot.lane.b32.xlu0 %v2037, 33
      %v2072 = vpop.permute.xlu0 %2071
      %2073 = vrot.lane.b32.xlu0 %v2038, 33
      %v2074 = vpop.permute.xlu0 %2073
      %2075 = vrot.lane.b32.xlu0 %v2039, 33
      %v2076 = vpop.permute.xlu0 %2075
      %2077 = vrot.lane.b32.xlu0 %v2040, 33
      %v2078 = vpop.permute.xlu0 %2077
      %2079 = vrot.lane.b32.xlu0 %v2041, 33
      %v2080 = vpop.permute.xlu0 %2079
      %2081 = vrot.lane.b32.xlu0 %v2042, 33
      %v2082 = vpop.permute.xlu0 %2081
      %2083 = vrot.lane.b32.xlu0 %v2043, 33
      %v2084 = vpop.permute.xlu0 %2083
      %2085 = vrot.lane.b32.xlu0 %v2044, 33
      %v2086 = vpop.permute.xlu0 %2085
      %2087 = vrot.lane.b32.xlu0 %v2045, 33
      %v2088 = vpop.permute.xlu0 %2087
      %2089 = vrot.lane.b32.xlu0 %v2046, 33
      %v2090 = vpop.permute.xlu0 %2089
      %2091 = vrot.lane.b32.xlu0 %v2047, 33
      %v2092 = vpop.permute.xlu0 %2091
      %2093 = vrot.lane.b32.xlu0 %v2048, 33
      %v2094 = vpop.permute.xlu0 %2093
      %2095 = vrot.lane.b32.xlu0 %v2049, 33
      %v2096 = vpop.permute.xlu0 %2095
      %2097 = vrot.lane.b32.xlu0 %v2050, 33
      %v2098 = vpop.permute.xlu0 %2097
      %v2099 = vsel %vm375, %v2068, %v2070
      %v2100 = vsel %vm375, %v2070, %v2072
      %v2101 = vsel %vm375, %v2072, %v2074
      %v2102 = vsel %vm375, %v2074, %v2076
      %v2103 = vsel %vm375, %v2076, %v2078
      %v2104 = vsel %vm375, %v2078, %v2080
      %v2105 = vsel %vm375, %v2080, %v2082
      %v2106 = vsel %vm375, %v2084, %v2086
      %v2107 = vsel %vm375, %v2086, %v2088
      %v2108 = vsel %vm375, %v2088, %v2090
      %v2109 = vsel %vm375, %v2090, %v2092
      %v2110 = vsel %vm375, %v2092, %v2094
      %v2111 = vsel %vm375, %v2094, %v2096
      %v2112 = vsel %vm375, %v2096, %v2098
      %v2128 = vsel %vm404, 0, %v2068
      %v2131 = vsel %vm404, 0, %v2084
      %v2134 = vsel %vm404, %v2082, 0
      %v2137 = vsel %vm404, %v2098, 0
      %v2139 = vsel %vm482, %v2128, 0
      %v2140 = vsel %vm483, %v2099, 0
      %v2141 = vsel %vm484, %v2100, 0
      %v2142 = vsel %vm485, %v2101, 0
      %v2143 = vsel %vm486, %v2102, 0
      %v2144 = vsel %vm487, %v2103, 0
      %v2145 = vsel %vm488, %v2104, 0
      %v2146 = vsel %vm489, %v2105, 0
      %v2147 = vsel %vm482, %v2131, 0
      %v2148 = vsel %vm483, %v2106, 0
      %v2149 = vsel %vm484, %v2107, 0
      %v2150 = vsel %vm485, %v2108, 0
      %v2151 = vsel %vm486, %v2109, 0
      %v2152 = vsel %vm487, %v2110, 0
      %v2153 = vsel %vm488, %v2111, 0
      %v2154 = vsel %vm489, %v2112, 0
      %v2155 = vsel %vm594, %v2128, 0
      %v2156 = vsel %vm595, %v2099, 0
      %v2157 = vsel %vm596, %v2100, 0
      %v2158 = vsel %vm597, %v2101, 0
      %v2159 = vsel %vm598, %v2102, 0
      %v2160 = vsel %vm599, %v2103, 0
      %v2161 = vsel %vm600, %v2104, 0
      %v2162 = vsel %vm601, %v2105, 0
      %v2163 = vsel %vm602, %v2134, 0
      %v2164 = vsel %vm594, %v2131, 0
      %v2165 = vsel %vm595, %v2106, 0
      %v2166 = vsel %vm596, %v2107, 0
      %v2167 = vsel %vm597, %v2108, 0
      %v2168 = vsel %vm598, %v2109, 0
      %v2169 = vsel %vm599, %v2110, 0
      %v2170 = vsel %vm600, %v2111, 0
      %v2171 = vsel %vm601, %v2112, 0
      %v2172 = vsel %vm602, %v2137, 0
      %v2173 = vsel %vm645, %v2128, 0
      %v2174 = vsel %vm646, %v2099, 0
      %v2175 = vsel %vm647, %v2100, 0
      %v2176 = vsel %vm648, %v2101, 0
      %v2177 = vsel %vm649, %v2102, 0
      %v2178 = vsel %vm650, %v2103, 0
      %v2179 = vsel %vm651, %v2104, 0
      %v2180 = vsel %vm652, %v2105, 0
      %v2181 = vsel %vm653, %v2134, 0
      %v2182 = vsel %vm645, %v2131, 0
      %v2183 = vsel %vm646, %v2106, 0
      %v2184 = vsel %vm647, %v2107, 0
      %v2185 = vsel %vm648, %v2108, 0
      %v2186 = vsel %vm649, %v2109, 0
      %v2187 = vsel %vm650, %v2110, 0
      %v2188 = vsel %vm651, %v2111, 0
      %v2189 = vsel %vm652, %v2112, 0
      %v2190 = vsel %vm653, %v2137, 0
      %v2191 = vsel %vm696, %v2128, 0
      %v2192 = vsel %vm697, %v2099, 0
      %v2193 = vsel %vm698, %v2100, 0
      %v2194 = vsel %vm699, %v2101, 0
      %v2195 = vsel %vm700, %v2102, 0
      %v2196 = vsel %vm701, %v2103, 0
      %v2197 = vsel %vm702, %v2104, 0
      %v2198 = vsel %vm703, %v2105, 0
      %v2199 = vsel %vm704, %v2134, 0
      %v2200 = vsel %vm696, %v2131, 0
      %v2201 = vsel %vm697, %v2106, 0
      %v2202 = vsel %vm698, %v2107, 0
      %v2203 = vsel %vm699, %v2108, 0
      %v2204 = vsel %vm700, %v2109, 0
      %v2205 = vsel %vm701, %v2110, 0
      %v2206 = vsel %vm702, %v2111, 0
      %v2207 = vsel %vm703, %v2112, 0
      %v2208 = vsel %vm704, %v2137, 0
      %v2209 = vsel %vm747, %v2128, 0
      %v2210 = vsel %vm748, %v2099, 0
      %v2211 = vsel %vm749, %v2100, 0
      %v2212 = vsel %vm750, %v2101, 0
      %v2213 = vsel %vm751, %v2102, 0
      %v2214 = vsel %vm752, %v2103, 0
      %v2215 = vsel %vm753, %v2104, 0
      %v2216 = vsel %vm754, %v2105, 0
      %v2217 = vsel %vm755, %v2134, 0
      %v2218 = vsel %vm747, %v2131, 0
      %v2219 = vsel %vm748, %v2106, 0
      %v2220 = vsel %vm749, %v2107, 0
      %v2221 = vsel %vm750, %v2108, 0
      %v2222 = vsel %vm751, %v2109, 0
      %v2223 = vsel %vm752, %v2110, 0
      %v2224 = vsel %vm753, %v2111, 0
      %v2225 = vsel %vm754, %v2112, 0
      %v2226 = vsel %vm755, %v2137, 0
      %v2227 = vsel %vm798, %v2128, 0
      %v2228 = vsel %vm799, %v2099, 0
      %v2229 = vsel %vm800, %v2100, 0
      %v2230 = vsel %vm801, %v2101, 0
      %v2231 = vsel %vm802, %v2102, 0
      %v2232 = vsel %vm803, %v2103, 0
      %v2233 = vsel %vm804, %v2104, 0
      %v2234 = vsel %vm805, %v2105, 0
      %v2235 = vsel %vm806, %v2134, 0
      %v2236 = vsel %vm798, %v2131, 0
      %v2237 = vsel %vm799, %v2106, 0
      %v2238 = vsel %vm800, %v2107, 0
      %v2239 = vsel %vm801, %v2108, 0
      %v2240 = vsel %vm802, %v2109, 0
      %v2241 = vsel %vm803, %v2110, 0
      %v2242 = vsel %vm804, %v2111, 0
      %v2243 = vsel %vm805, %v2112, 0
      %v2244 = vsel %vm806, %v2137, 0
      %2249 = vrot.lane.b32.xlu0 %v2128, 127
      %v2250 = vpop.permute.xlu0 %2249
      %2251 = vrot.lane.b32.xlu0 %v2099, 127
      %v2252 = vpop.permute.xlu0 %2251
      %2253 = vrot.lane.b32.xlu0 %v2100, 127
      %v2254 = vpop.permute.xlu0 %2253
      %2255 = vrot.lane.b32.xlu0 %v2101, 127
      %v2256 = vpop.permute.xlu0 %2255
      %2257 = vrot.lane.b32.xlu0 %v2102, 127
      %v2258 = vpop.permute.xlu0 %2257
      %2259 = vrot.lane.b32.xlu0 %v2103, 127
      %v2260 = vpop.permute.xlu0 %2259
      %2261 = vrot.lane.b32.xlu0 %v2104, 127
      %v2262 = vpop.permute.xlu0 %2261
      %2263 = vrot.lane.b32.xlu0 %v2105, 127
      %v2264 = vpop.permute.xlu0 %2263
      %2265 = vrot.lane.b32.xlu0 %v2134, 127
      %v2266 = vpop.permute.xlu0 %2265
      %2267 = vrot.lane.b32.xlu0 %v2131, 127
      %v2268 = vpop.permute.xlu0 %2267
      %2269 = vrot.lane.b32.xlu0 %v2106, 127
      %v2270 = vpop.permute.xlu0 %2269
      %2271 = vrot.lane.b32.xlu0 %v2107, 127
      %v2272 = vpop.permute.xlu0 %2271
      %2273 = vrot.lane.b32.xlu0 %v2108, 127
      %v2274 = vpop.permute.xlu0 %2273
      %2275 = vrot.lane.b32.xlu0 %v2109, 127
      %v2276 = vpop.permute.xlu0 %2275
      %2277 = vrot.lane.b32.xlu0 %v2110, 127
      %v2278 = vpop.permute.xlu0 %2277
      %2279 = vrot.lane.b32.xlu0 %v2111, 127
      %v2280 = vpop.permute.xlu0 %2279
      %2281 = vrot.lane.b32.xlu0 %v2112, 127
      %v2282 = vpop.permute.xlu0 %2281
      %2283 = vrot.lane.b32.xlu0 %v2137, 127
      %v2284 = vpop.permute.xlu0 %2283
      %v2285 = vsel %vm865, %v2250, %v2252
      %v2286 = vsel %vm865, %v2252, %v2254
      %v2287 = vsel %vm865, %v2254, %v2256
      %v2288 = vsel %vm865, %v2256, %v2258
      %v2289 = vsel %vm865, %v2258, %v2260
      %v2290 = vsel %vm865, %v2260, %v2262
      %v2291 = vsel %vm865, %v2262, %v2264
      %v2292 = vsel %vm865, %v2264, %v2266
      %v2293 = vsel %vm865, %v2268, %v2270
      %v2294 = vsel %vm865, %v2270, %v2272
      %v2295 = vsel %vm865, %v2272, %v2274
      %v2296 = vsel %vm865, %v2274, %v2276
      %v2297 = vsel %vm865, %v2276, %v2278
      %v2298 = vsel %vm865, %v2278, %v2280
      %v2299 = vsel %vm865, %v2280, %v2282
      %v2300 = vsel %vm865, %v2282, %v2284
      %2335 = vrot.lane.b32.xlu0 %v2155, 126
      %v2336 = vpop.permute.xlu0 %2335
      %2337 = vrot.lane.b32.xlu0 %v2156, 126
      %v2338 = vpop.permute.xlu0 %2337
      %2339 = vrot.lane.b32.xlu0 %v2157, 126
      %v2340 = vpop.permute.xlu0 %2339
      %2341 = vrot.lane.b32.xlu0 %v2158, 126
      %v2342 = vpop.permute.xlu0 %2341
      %2343 = vrot.lane.b32.xlu0 %v2159, 126
      %v2344 = vpop.permute.xlu0 %2343
      %2345 = vrot.lane.b32.xlu0 %v2160, 126
      %v2346 = vpop.permute.xlu0 %2345
      %2347 = vrot.lane.b32.xlu0 %v2161, 126
      %v2348 = vpop.permute.xlu0 %2347
      %2349 = vrot.lane.b32.xlu0 %v2162, 126
      %v2350 = vpop.permute.xlu0 %2349
      %2351 = vrot.lane.b32.xlu0 %v2163, 126
      %v2352 = vpop.permute.xlu0 %2351
      %2353 = vrot.lane.b32.xlu0 %v2164, 126
      %v2354 = vpop.permute.xlu0 %2353
      %2355 = vrot.lane.b32.xlu0 %v2165, 126
      %v2356 = vpop.permute.xlu0 %2355
      %2357 = vrot.lane.b32.xlu0 %v2166, 126
      %v2358 = vpop.permute.xlu0 %2357
      %2359 = vrot.lane.b32.xlu0 %v2167, 126
      %v2360 = vpop.permute.xlu0 %2359
      %2361 = vrot.lane.b32.xlu0 %v2168, 126
      %v2362 = vpop.permute.xlu0 %2361
      %2363 = vrot.lane.b32.xlu0 %v2169, 126
      %v2364 = vpop.permute.xlu0 %2363
      %2365 = vrot.lane.b32.xlu0 %v2170, 126
      %v2366 = vpop.permute.xlu0 %2365
      %2367 = vrot.lane.b32.xlu0 %v2171, 126
      %v2368 = vpop.permute.xlu0 %2367
      %2369 = vrot.lane.b32.xlu0 %v2172, 126
      %v2370 = vpop.permute.xlu0 %2369
      %v2371 = vsel %vm952, %v2336, %v2338
      %v2372 = vsel %vm952, %v2338, %v2340
      %v2373 = vsel %vm952, %v2340, %v2342
      %v2374 = vsel %vm952, %v2342, %v2344
      %v2375 = vsel %vm952, %v2344, %v2346
      %v2376 = vsel %vm952, %v2346, %v2348
      %v2377 = vsel %vm952, %v2348, %v2350
      %v2378 = vsel %vm952, %v2350, %v2352
      %v2379 = vsel %vm952, %v2354, %v2356
      %v2380 = vsel %vm952, %v2356, %v2358
      %v2381 = vsel %vm952, %v2358, %v2360
      %v2382 = vsel %vm952, %v2360, %v2362
      %v2383 = vsel %vm952, %v2362, %v2364
      %v2384 = vsel %vm952, %v2364, %v2366
      %v2385 = vsel %vm952, %v2366, %v2368
      %v2386 = vsel %vm952, %v2368, %v2370
      %2421 = vrot.lane.b32.xlu0 %v2173, 96
      %v2422 = vpop.permute.xlu0 %2421
      %2423 = vrot.lane.b32.xlu0 %v2174, 96
      %v2424 = vpop.permute.xlu0 %2423
      %2425 = vrot.lane.b32.xlu0 %v2175, 96
      %v2426 = vpop.permute.xlu0 %2425
      %2427 = vrot.lane.b32.xlu0 %v2176, 96
      %v2428 = vpop.permute.xlu0 %2427
      %2429 = vrot.lane.b32.xlu0 %v2177, 96
      %v2430 = vpop.permute.xlu0 %2429
      %2431 = vrot.lane.b32.xlu0 %v2178, 96
      %v2432 = vpop.permute.xlu0 %2431
      %2433 = vrot.lane.b32.xlu0 %v2179, 96
      %v2434 = vpop.permute.xlu0 %2433
      %2435 = vrot.lane.b32.xlu0 %v2180, 96
      %v2436 = vpop.permute.xlu0 %2435
      %2437 = vrot.lane.b32.xlu0 %v2181, 96
      %v2438 = vpop.permute.xlu0 %2437
      %2439 = vrot.lane.b32.xlu0 %v2182, 96
      %v2440 = vpop.permute.xlu0 %2439
      %2441 = vrot.lane.b32.xlu0 %v2183, 96
      %v2442 = vpop.permute.xlu0 %2441
      %2443 = vrot.lane.b32.xlu0 %v2184, 96
      %v2444 = vpop.permute.xlu0 %2443
      %2445 = vrot.lane.b32.xlu0 %v2185, 96
      %v2446 = vpop.permute.xlu0 %2445
      %2447 = vrot.lane.b32.xlu0 %v2186, 96
      %v2448 = vpop.permute.xlu0 %2447
      %2449 = vrot.lane.b32.xlu0 %v2187, 96
      %v2450 = vpop.permute.xlu0 %2449
      %2451 = vrot.lane.b32.xlu0 %v2188, 96
      %v2452 = vpop.permute.xlu0 %2451
      %2453 = vrot.lane.b32.xlu0 %v2189, 96
      %v2454 = vpop.permute.xlu0 %2453
      %2455 = vrot.lane.b32.xlu0 %v2190, 96
      %v2456 = vpop.permute.xlu0 %2455
      %v2457 = vsel %vm1039, %v2422, %v2424
      %v2458 = vsel %vm1039, %v2424, %v2426
      %v2459 = vsel %vm1039, %v2426, %v2428
      %v2460 = vsel %vm1039, %v2428, %v2430
      %v2461 = vsel %vm1039, %v2430, %v2432
      %v2462 = vsel %vm1039, %v2432, %v2434
      %v2463 = vsel %vm1039, %v2434, %v2436
      %v2464 = vsel %vm1039, %v2436, %v2438
      %v2465 = vsel %vm1039, %v2440, %v2442
      %v2466 = vsel %vm1039, %v2442, %v2444
      %v2467 = vsel %vm1039, %v2444, %v2446
      %v2468 = vsel %vm1039, %v2446, %v2448
      %v2469 = vsel %vm1039, %v2448, %v2450
      %v2470 = vsel %vm1039, %v2450, %v2452
      %v2471 = vsel %vm1039, %v2452, %v2454
      %v2472 = vsel %vm1039, %v2454, %v2456
      %2489 = vrot.lane.b32.xlu0 %v2128, 95
      %v2490 = vpop.permute.xlu0 %2489
      %2491 = vrot.lane.b32.xlu0 %v2099, 95
      %v2492 = vpop.permute.xlu0 %2491
      %2493 = vrot.lane.b32.xlu0 %v2100, 95
      %v2494 = vpop.permute.xlu0 %2493
      %2495 = vrot.lane.b32.xlu0 %v2101, 95
      %v2496 = vpop.permute.xlu0 %2495
      %2497 = vrot.lane.b32.xlu0 %v2102, 95
      %v2498 = vpop.permute.xlu0 %2497
      %2499 = vrot.lane.b32.xlu0 %v2103, 95
      %v2500 = vpop.permute.xlu0 %2499
      %2501 = vrot.lane.b32.xlu0 %v2104, 95
      %v2502 = vpop.permute.xlu0 %2501
      %2503 = vrot.lane.b32.xlu0 %v2105, 95
      %v2504 = vpop.permute.xlu0 %2503
      %2505 = vrot.lane.b32.xlu0 %v2134, 95
      %v2506 = vpop.permute.xlu0 %2505
      %2507 = vrot.lane.b32.xlu0 %v2131, 95
      %v2508 = vpop.permute.xlu0 %2507
      %2509 = vrot.lane.b32.xlu0 %v2106, 95
      %v2510 = vpop.permute.xlu0 %2509
      %2511 = vrot.lane.b32.xlu0 %v2107, 95
      %v2512 = vpop.permute.xlu0 %2511
      %2513 = vrot.lane.b32.xlu0 %v2108, 95
      %v2514 = vpop.permute.xlu0 %2513
      %2515 = vrot.lane.b32.xlu0 %v2109, 95
      %v2516 = vpop.permute.xlu0 %2515
      %2517 = vrot.lane.b32.xlu0 %v2110, 95
      %v2518 = vpop.permute.xlu0 %2517
      %2519 = vrot.lane.b32.xlu0 %v2111, 95
      %v2520 = vpop.permute.xlu0 %2519
      %2521 = vrot.lane.b32.xlu0 %v2112, 95
      %v2522 = vpop.permute.xlu0 %2521
      %2523 = vrot.lane.b32.xlu0 %v2137, 95
      %v2524 = vpop.permute.xlu0 %2523
      %v2525 = vsel %vm1108, %v2490, %v2492
      %v2526 = vsel %vm1108, %v2492, %v2494
      %v2527 = vsel %vm1108, %v2494, %v2496
      %v2528 = vsel %vm1108, %v2496, %v2498
      %v2529 = vsel %vm1108, %v2498, %v2500
      %v2530 = vsel %vm1108, %v2500, %v2502
      %v2531 = vsel %vm1108, %v2502, %v2504
      %v2532 = vsel %vm1108, %v2504, %v2506
      %v2533 = vsel %vm1108, %v2508, %v2510
      %v2534 = vsel %vm1108, %v2510, %v2512
      %v2535 = vsel %vm1108, %v2512, %v2514
      %v2536 = vsel %vm1108, %v2514, %v2516
      %v2537 = vsel %vm1108, %v2516, %v2518
      %v2538 = vsel %vm1108, %v2518, %v2520
      %v2539 = vsel %vm1108, %v2520, %v2522
      %v2540 = vsel %vm1108, %v2522, %v2524
      %2575 = vrot.lane.b32.xlu0 %v2191, 94
      %v2576 = vpop.permute.xlu0 %2575
      %2577 = vrot.lane.b32.xlu0 %v2192, 94
      %v2578 = vpop.permute.xlu0 %2577
      %2579 = vrot.lane.b32.xlu0 %v2193, 94
      %v2580 = vpop.permute.xlu0 %2579
      %2581 = vrot.lane.b32.xlu0 %v2194, 94
      %v2582 = vpop.permute.xlu0 %2581
      %2583 = vrot.lane.b32.xlu0 %v2195, 94
      %v2584 = vpop.permute.xlu0 %2583
      %2585 = vrot.lane.b32.xlu0 %v2196, 94
      %v2586 = vpop.permute.xlu0 %2585
      %2587 = vrot.lane.b32.xlu0 %v2197, 94
      %v2588 = vpop.permute.xlu0 %2587
      %2589 = vrot.lane.b32.xlu0 %v2198, 94
      %v2590 = vpop.permute.xlu0 %2589
      %2591 = vrot.lane.b32.xlu0 %v2199, 94
      %v2592 = vpop.permute.xlu0 %2591
      %2593 = vrot.lane.b32.xlu0 %v2200, 94
      %v2594 = vpop.permute.xlu0 %2593
      %2595 = vrot.lane.b32.xlu0 %v2201, 94
      %v2596 = vpop.permute.xlu0 %2595
      %2597 = vrot.lane.b32.xlu0 %v2202, 94
      %v2598 = vpop.permute.xlu0 %2597
      %2599 = vrot.lane.b32.xlu0 %v2203, 94
      %v2600 = vpop.permute.xlu0 %2599
      %2601 = vrot.lane.b32.xlu0 %v2204, 94
      %v2602 = vpop.permute.xlu0 %2601
      %2603 = vrot.lane.b32.xlu0 %v2205, 94
      %v2604 = vpop.permute.xlu0 %2603
      %2605 = vrot.lane.b32.xlu0 %v2206, 94
      %v2606 = vpop.permute.xlu0 %2605
      %2607 = vrot.lane.b32.xlu0 %v2207, 94
      %v2608 = vpop.permute.xlu0 %2607
      %2609 = vrot.lane.b32.xlu0 %v2208, 94
      %v2610 = vpop.permute.xlu0 %2609
      %v2611 = vsel %vm1195, %v2576, %v2578
      %v2612 = vsel %vm1195, %v2578, %v2580
      %v2613 = vsel %vm1195, %v2580, %v2582
      %v2614 = vsel %vm1195, %v2582, %v2584
      %v2615 = vsel %vm1195, %v2584, %v2586
      %v2616 = vsel %vm1195, %v2586, %v2588
      %v2617 = vsel %vm1195, %v2588, %v2590
      %v2618 = vsel %vm1195, %v2590, %v2592
      %v2619 = vsel %vm1195, %v2594, %v2596
      %v2620 = vsel %vm1195, %v2596, %v2598
      %v2621 = vsel %vm1195, %v2598, %v2600
      %v2622 = vsel %vm1195, %v2600, %v2602
      %v2623 = vsel %vm1195, %v2602, %v2604
      %v2624 = vsel %vm1195, %v2604, %v2606
      %v2625 = vsel %vm1195, %v2606, %v2608
      %v2626 = vsel %vm1195, %v2608, %v2610
      %2661 = vrot.lane.b32.xlu0 %v2209, 64
      %v2662 = vpop.permute.xlu0 %2661
      %2663 = vrot.lane.b32.xlu0 %v2210, 64
      %v2664 = vpop.permute.xlu0 %2663
      %2665 = vrot.lane.b32.xlu0 %v2211, 64
      %v2666 = vpop.permute.xlu0 %2665
      %2667 = vrot.lane.b32.xlu0 %v2212, 64
      %v2668 = vpop.permute.xlu0 %2667
      %2669 = vrot.lane.b32.xlu0 %v2213, 64
      %v2670 = vpop.permute.xlu0 %2669
      %2671 = vrot.lane.b32.xlu0 %v2214, 64
      %v2672 = vpop.permute.xlu0 %2671
      %2673 = vrot.lane.b32.xlu0 %v2215, 64
      %v2674 = vpop.permute.xlu0 %2673
      %2675 = vrot.lane.b32.xlu0 %v2216, 64
      %v2676 = vpop.permute.xlu0 %2675
      %2677 = vrot.lane.b32.xlu0 %v2217, 64
      %v2678 = vpop.permute.xlu0 %2677
      %2679 = vrot.lane.b32.xlu0 %v2218, 64
      %v2680 = vpop.permute.xlu0 %2679
      %2681 = vrot.lane.b32.xlu0 %v2219, 64
      %v2682 = vpop.permute.xlu0 %2681
      %2683 = vrot.lane.b32.xlu0 %v2220, 64
      %v2684 = vpop.permute.xlu0 %2683
      %2685 = vrot.lane.b32.xlu0 %v2221, 64
      %v2686 = vpop.permute.xlu0 %2685
      %2687 = vrot.lane.b32.xlu0 %v2222, 64
      %v2688 = vpop.permute.xlu0 %2687
      %2689 = vrot.lane.b32.xlu0 %v2223, 64
      %v2690 = vpop.permute.xlu0 %2689
      %2691 = vrot.lane.b32.xlu0 %v2224, 64
      %v2692 = vpop.permute.xlu0 %2691
      %2693 = vrot.lane.b32.xlu0 %v2225, 64
      %v2694 = vpop.permute.xlu0 %2693
      %2695 = vrot.lane.b32.xlu0 %v2226, 64
      %v2696 = vpop.permute.xlu0 %2695
      %v2697 = vsel %vm739, %v2662, %v2664
      %v2698 = vsel %vm739, %v2664, %v2666
      %v2699 = vsel %vm739, %v2666, %v2668
      %v2700 = vsel %vm739, %v2668, %v2670
      %v2701 = vsel %vm739, %v2670, %v2672
      %v2702 = vsel %vm739, %v2672, %v2674
      %v2703 = vsel %vm739, %v2674, %v2676
      %v2704 = vsel %vm739, %v2676, %v2678
      %v2705 = vsel %vm739, %v2680, %v2682
      %v2706 = vsel %vm739, %v2682, %v2684
      %v2707 = vsel %vm739, %v2684, %v2686
      %v2708 = vsel %vm739, %v2686, %v2688
      %v2709 = vsel %vm739, %v2688, %v2690
      %v2710 = vsel %vm739, %v2690, %v2692
      %v2711 = vsel %vm739, %v2692, %v2694
      %v2712 = vsel %vm739, %v2694, %v2696
      %2729 = vrot.lane.b32.xlu0 %v2128, 63
      %v2730 = vpop.permute.xlu0 %2729
      %2731 = vrot.lane.b32.xlu0 %v2099, 63
      %v2732 = vpop.permute.xlu0 %2731
      %2733 = vrot.lane.b32.xlu0 %v2100, 63
      %v2734 = vpop.permute.xlu0 %2733
      %2735 = vrot.lane.b32.xlu0 %v2101, 63
      %v2736 = vpop.permute.xlu0 %2735
      %2737 = vrot.lane.b32.xlu0 %v2102, 63
      %v2738 = vpop.permute.xlu0 %2737
      %2739 = vrot.lane.b32.xlu0 %v2103, 63
      %v2740 = vpop.permute.xlu0 %2739
      %2741 = vrot.lane.b32.xlu0 %v2104, 63
      %v2742 = vpop.permute.xlu0 %2741
      %2743 = vrot.lane.b32.xlu0 %v2105, 63
      %v2744 = vpop.permute.xlu0 %2743
      %2745 = vrot.lane.b32.xlu0 %v2134, 63
      %v2746 = vpop.permute.xlu0 %2745
      %2747 = vrot.lane.b32.xlu0 %v2131, 63
      %v2748 = vpop.permute.xlu0 %2747
      %2749 = vrot.lane.b32.xlu0 %v2106, 63
      %v2750 = vpop.permute.xlu0 %2749
      %2751 = vrot.lane.b32.xlu0 %v2107, 63
      %v2752 = vpop.permute.xlu0 %2751
      %2753 = vrot.lane.b32.xlu0 %v2108, 63
      %v2754 = vpop.permute.xlu0 %2753
      %2755 = vrot.lane.b32.xlu0 %v2109, 63
      %v2756 = vpop.permute.xlu0 %2755
      %2757 = vrot.lane.b32.xlu0 %v2110, 63
      %v2758 = vpop.permute.xlu0 %2757
      %2759 = vrot.lane.b32.xlu0 %v2111, 63
      %v2760 = vpop.permute.xlu0 %2759
      %2761 = vrot.lane.b32.xlu0 %v2112, 63
      %v2762 = vpop.permute.xlu0 %2761
      %2763 = vrot.lane.b32.xlu0 %v2137, 63
      %v2764 = vpop.permute.xlu0 %2763
      %v2765 = vsel %vm1350, %v2730, %v2732
      %v2766 = vsel %vm1350, %v2732, %v2734
      %v2767 = vsel %vm1350, %v2734, %v2736
      %v2768 = vsel %vm1350, %v2736, %v2738
      %v2769 = vsel %vm1350, %v2738, %v2740
      %v2770 = vsel %vm1350, %v2740, %v2742
      %v2771 = vsel %vm1350, %v2742, %v2744
      %v2772 = vsel %vm1350, %v2744, %v2746
      %v2773 = vsel %vm1350, %v2748, %v2750
      %v2774 = vsel %vm1350, %v2750, %v2752
      %v2775 = vsel %vm1350, %v2752, %v2754
      %v2776 = vsel %vm1350, %v2754, %v2756
      %v2777 = vsel %vm1350, %v2756, %v2758
      %v2778 = vsel %vm1350, %v2758, %v2760
      %v2779 = vsel %vm1350, %v2760, %v2762
      %v2780 = vsel %vm1350, %v2762, %v2764
      %2815 = vrot.lane.b32.xlu0 %v2227, 62
      %v2816 = vpop.permute.xlu0 %2815
      %2817 = vrot.lane.b32.xlu0 %v2228, 62
      %v2818 = vpop.permute.xlu0 %2817
      %2819 = vrot.lane.b32.xlu0 %v2229, 62
      %v2820 = vpop.permute.xlu0 %2819
      %2821 = vrot.lane.b32.xlu0 %v2230, 62
      %v2822 = vpop.permute.xlu0 %2821
      %2823 = vrot.lane.b32.xlu0 %v2231, 62
      %v2824 = vpop.permute.xlu0 %2823
      %2825 = vrot.lane.b32.xlu0 %v2232, 62
      %v2826 = vpop.permute.xlu0 %2825
      %2827 = vrot.lane.b32.xlu0 %v2233, 62
      %v2828 = vpop.permute.xlu0 %2827
      %2829 = vrot.lane.b32.xlu0 %v2234, 62
      %v2830 = vpop.permute.xlu0 %2829
      %2831 = vrot.lane.b32.xlu0 %v2235, 62
      %v2832 = vpop.permute.xlu0 %2831
      %2833 = vrot.lane.b32.xlu0 %v2236, 62
      %v2834 = vpop.permute.xlu0 %2833
      %2835 = vrot.lane.b32.xlu0 %v2237, 62
      %v2836 = vpop.permute.xlu0 %2835
      %2837 = vrot.lane.b32.xlu0 %v2238, 62
      %v2838 = vpop.permute.xlu0 %2837
      %2839 = vrot.lane.b32.xlu0 %v2239, 62
      %v2840 = vpop.permute.xlu0 %2839
      %2841 = vrot.lane.b32.xlu0 %v2240, 62
      %v2842 = vpop.permute.xlu0 %2841
      %2843 = vrot.lane.b32.xlu0 %v2241, 62
      %v2844 = vpop.permute.xlu0 %2843
      %2845 = vrot.lane.b32.xlu0 %v2242, 62
      %v2846 = vpop.permute.xlu0 %2845
      %2847 = vrot.lane.b32.xlu0 %v2243, 62
      %v2848 = vpop.permute.xlu0 %2847
      %2849 = vrot.lane.b32.xlu0 %v2244, 62
      %v2850 = vpop.permute.xlu0 %2849
      %v2851 = vsel %vm1437, %v2816, %v2818
      %v2852 = vsel %vm1437, %v2818, %v2820
      %v2853 = vsel %vm1437, %v2820, %v2822
      %v2854 = vsel %vm1437, %v2822, %v2824
      %v2855 = vsel %vm1437, %v2824, %v2826
      %v2856 = vsel %vm1437, %v2826, %v2828
      %v2857 = vsel %vm1437, %v2828, %v2830
      %v2858 = vsel %vm1437, %v2830, %v2832
      %v2859 = vsel %vm1437, %v2834, %v2836
      %v2860 = vsel %vm1437, %v2836, %v2838
      %v2861 = vsel %vm1437, %v2838, %v2840
      %v2862 = vsel %vm1437, %v2840, %v2842
      %v2863 = vsel %vm1437, %v2842, %v2844
      %v2864 = vsel %vm1437, %v2844, %v2846
      %v2865 = vsel %vm1437, %v2846, %v2848
      %v2866 = vsel %vm1437, %v2848, %v2850
      %v2883 = vld [vmem:[%s2] sm:$0xff]
      %v2884 = vld [vmem:[%s2 + $0x8] sm:$0xf]
      %v2885 = vld [vmem:[%s2 + $0xc] sm:$0xff]
      %v2886 = vld [vmem:[%s2 + $0x14] sm:$0xf]
      %v2887 = vld [vmem:[%s2 + $0x18] sm:$0xff]
      %v2888 = vld [vmem:[%s2 + $0x20] sm:$0xf]
      %v2889 = vld [vmem:[%s2 + $0x24] sm:$0xff]
      %v2890 = vld [vmem:[%s2 + $0x2c] sm:$0xf]
      %v2899 = vunpack.c.l.b16 %v2883
      %v2900 = vunpack.c.h.b16 %v2883
      %v2901 = vunpack.c.l.b16 %v2884
      %v2902 = vunpack.c.l.b16 %v2885
      %v2903 = vunpack.c.h.b16 %v2885
      %v2904 = vunpack.c.l.b16 %v2886
      %v2905 = vunpack.c.l.b16 %v2887
      %v2906 = vunpack.c.h.b16 %v2887
      %v2907 = vunpack.c.l.b16 %v2888
      %v2908 = vunpack.c.l.b16 %v2889
      %v2909 = vunpack.c.h.b16 %v2889
      %v2910 = vunpack.c.l.b16 %v2890
      %v2911 = vpack.c.b16 %v2902, %v2899
      %v2912 = vpack.c.b16 %v2903, %v2900
      %v2913 = vpack.c.b16 %v2904, %v2901
      %v2914 = vpack.c.b16 %v2908, %v2905
      %v2915 = vpack.c.b16 %v2909, %v2906
      %v2916 = vpack.c.b16 %v2910, %v2907
      %v2922 = vsel %vm1508, %v2913, 0
      %v2925 = vsel %vm1508, %v2916, 0
      %2927 = vmatprep.subr.bf16.mxu0 %v2466
      %2928 = vmatpush1.bf16.msra.mxu0 %v2465
      %2929 = vmatprep.subr.bf16.mxu0 %v2458
      %2930 = vmatpush1.bf16.msra.mxu0 %v2457
      %2931 = vmatprep.subr.bf16.mxu0 %v2380
      %2932 = vmatpush1.bf16.msra.mxu0 %v2379
      %2933 = vmatprep.subr.bf16.mxu0 %v2372
      %2934 = vmatpush1.bf16.msra.mxu0 %v2371
      %2935 = vmatprep.subr.bf16.mxu0 %v2294
      %2936 = vmatpush1.bf16.msra.mxu0 %v2293
      %2937 = vmatprep.subr.bf16.mxu0 %v2286
      %2938 = vmatpush1.bf16.msra.mxu0 %v2285
      %2939 = vmatprep.subr.bf16.mxu0 %v2148
      %2940 = vmatpush1.bf16.msra.mxu0 %v2147
      %2941 = vmatprep.subr.bf16.mxu0 %v2140
      %2942 = vmatpush1.bf16.msra.mxu0 %v2139
      %2943 = vmatprep.subr.bf16.mxu0 %v2774
      %2944 = vmatpush2.bf16.msra.mxu0 %v2773
      %2945 = vmatprep.subr.bf16.mxu0 %v2766
      %2946 = vmatpush2.bf16.msra.mxu0 %v2765
      %2947 = vmatprep.subr.bf16.mxu0 %v2706
      %2948 = vmatpush2.bf16.msra.mxu0 %v2705
      %2949 = vmatprep.subr.bf16.mxu0 %v2698
      %2950 = vmatpush2.bf16.msra.mxu0 %v2697
      %2951 = vmatprep.subr.bf16.mxu0 %v2620
      %2952 = vmatpush2.bf16.msra.mxu0 %v2619
      %2953 = vmatprep.subr.bf16.mxu0 %v2612
      %2954 = vmatpush2.bf16.msra.mxu0 %v2611
      %2955 = vmatprep.subr.bf16.mxu0 %v2534
      %2956 = vmatpush2.bf16.msra.mxu0 %v2533
      %2957 = vmatprep.subr.bf16.mxu0 %v2526
      %2958 = vmatpush2.bf16.msra.mxu0 %v2525
      %2959 = vmatprep.mubr.bf16.mxu0 %v2912
      %2960 = vmatmul.mubr.bf16.gmra.mxu0 %v2911
      %v2961 = vpop.f32.mrf.mxu0
      %v2962 = vadd.f32 %v279, %v2961
      %v2963 = vpop.f32.mrf.mxu0
      %v2964 = vadd.f32 %v280, %v2963
      %v2965 = vpop.f32.mrf.mxu0
      %v2966 = vadd.f32 %v287, %v2965
      %v2967 = vpop.f32.mrf.mxu0
      %v2968 = vadd.f32 %v288, %v2967
      %2969 = vmatprep.mubr.bf16.mxu0 %v2915
      %2970 = vmatmul.mubr.bf16.gmra.mxu0 %v2914
      %v2971 = vpop.f32.mrf.mxu0
      %v2972 = vadd.f32 %v295, %v2971
      %v2973 = vpop.f32.mrf.mxu0
      %v2974 = vadd.f32 %v296, %v2973
      %v2975 = vpop.f32.mrf.mxu0
      %v2976 = vadd.f32 %v303, %v2975
      %v2977 = vpop.f32.mrf.mxu0
      %v2978 = vadd.f32 %v304, %v2977
      %2979 = vdwg.mxu0
      %2980 = vmatprep.subr.bf16.mxu0 0
      %2981 = vmatpush1.bf16.msra.mxu0 0
      %2982 = vmatprep.subr.bf16.mxu0 0
      %2983 = vmatpush1.bf16.msra.mxu0 0
      %2984 = vmatprep.subr.bf16.mxu0 0
      %2985 = vmatpush1.bf16.msra.mxu0 0
      %2986 = vmatprep.subr.bf16.mxu0 0
      %2987 = vmatpush1.bf16.msra.mxu0 0
      %2988 = vmatprep.subr.bf16.mxu0 0
      %2989 = vmatpush1.bf16.msra.mxu0 0
      %2990 = vmatprep.subr.bf16.mxu0 0
      %2991 = vmatpush1.bf16.msra.mxu0 0
      %2992 = vmatprep.subr.bf16.mxu0 %v2860
      %2993 = vmatpush1.bf16.msra.mxu0 %v2859
      %2994 = vmatprep.subr.bf16.mxu0 %v2852
      %2995 = vmatpush1.bf16.msra.mxu0 %v2851
      %2996 = vmatprep.subr.bf16.mxu0 0
      %2997 = vmatpush2.bf16.msra.mxu0 0
      %2998 = vmatprep.subr.bf16.mxu0 0
      %2999 = vmatpush2.bf16.msra.mxu0 0
      %3000 = vmatprep.subr.bf16.mxu0 0
      %3001 = vmatpush2.bf16.msra.mxu0 0
      %3002 = vmatprep.subr.bf16.mxu0 0
      %3003 = vmatpush2.bf16.msra.mxu0 0
      %3004 = vmatprep.subr.bf16.mxu0 0
      %3005 = vmatpush2.bf16.msra.mxu0 0
      %3006 = vmatprep.subr.bf16.mxu0 0
      %3007 = vmatpush2.bf16.msra.mxu0 0
      %3008 = vmatprep.subr.bf16.mxu0 0
      %3009 = vmatpush2.bf16.msra.mxu0 0
      %3010 = vmatprep.subr.bf16.mxu0 0
      %3011 = vmatpush2.bf16.msra.mxu0 0
      %3012 = vmatprep.mubr.bf16.mxu0 0
      %3013 = vmatmul.mubr.bf16.gmra.mxu0 %v2922
      %v3014 = vpop.f32.mrf.mxu0
      %v3015 = vadd.f32 %v2962, %v3014
      %v3016 = vpop.f32.mrf.mxu0
      %v3017 = vadd.f32 %v2964, %v3016
      %v3018 = vpop.f32.mrf.mxu0
      %v3019 = vadd.f32 %v2966, %v3018
      %v3020 = vpop.f32.mrf.mxu0
      %v3021 = vadd.f32 %v2968, %v3020
      %3022 = vmatprep.mubr.bf16.mxu0 0
      %3023 = vmatmul.mubr.bf16.gmra.mxu0 %v2925
      %v3024 = vpop.f32.mrf.mxu0
      %v3025 = vadd.f32 %v2972, %v3024
      %v3026 = vpop.f32.mrf.mxu0
      %v3027 = vadd.f32 %v2974, %v3026
      %v3028 = vpop.f32.mrf.mxu0
      %v3029 = vadd.f32 %v2976, %v3028
      %v3030 = vpop.f32.mrf.mxu0
      %v3031 = vadd.f32 %v2978, %v3030
      %3032 = vdwg.mxu0
      %3033 = vmatprep.subr.bf16.mxu0 %v2468
      %3034 = vmatpush1.bf16.msra.mxu0 %v2467
      %3035 = vmatprep.subr.bf16.mxu0 %v2460
      %3036 = vmatpush1.bf16.msra.mxu0 %v2459
      %3037 = vmatprep.subr.bf16.mxu0 %v2382
      %3038 = vmatpush1.bf16.msra.mxu0 %v2381
      %3039 = vmatprep.subr.bf16.mxu0 %v2374
      %3040 = vmatpush1.bf16.msra.mxu0 %v2373
      %3041 = vmatprep.subr.bf16.mxu0 %v2296
      %3042 = vmatpush1.bf16.msra.mxu0 %v2295
      %3043 = vmatprep.subr.bf16.mxu0 %v2288
      %3044 = vmatpush1.bf16.msra.mxu0 %v2287
      %3045 = vmatprep.subr.bf16.mxu0 %v2150
      %3046 = vmatpush1.bf16.msra.mxu0 %v2149
      %3047 = vmatprep.subr.bf16.mxu0 %v2142
      %3048 = vmatpush1.bf16.msra.mxu0 %v2141
      %3049 = vmatprep.subr.bf16.mxu0 %v2776
      %3050 = vmatpush2.bf16.msra.mxu0 %v2775
      %3051 = vmatprep.subr.bf16.mxu0 %v2768
      %3052 = vmatpush2.bf16.msra.mxu0 %v2767
      %3053 = vmatprep.subr.bf16.mxu0 %v2708
      %3054 = vmatpush2.bf16.msra.mxu0 %v2707
      %3055 = vmatprep.subr.bf16.mxu0 %v2700
      %3056 = vmatpush2.bf16.msra.mxu0 %v2699
      %3057 = vmatprep.subr.bf16.mxu0 %v2622
      %3058 = vmatpush2.bf16.msra.mxu0 %v2621
      %3059 = vmatprep.subr.bf16.mxu0 %v2614
      %3060 = vmatpush2.bf16.msra.mxu0 %v2613
      %3061 = vmatprep.subr.bf16.mxu0 %v2536
      %3062 = vmatpush2.bf16.msra.mxu0 %v2535
      %3063 = vmatprep.subr.bf16.mxu0 %v2528
      %3064 = vmatpush2.bf16.msra.mxu0 %v2527
      %3065 = vmatprep.mubr.bf16.mxu0 %v2912
      %3066 = vmatmul.mubr.bf16.gmra.mxu0 %v2911
      %v3067 = vpop.f32.mrf.mxu0
      %v3068 = vadd.f32 %v281, %v3067
      %v3069 = vpop.f32.mrf.mxu0
      %v3070 = vadd.f32 %v282, %v3069
      %v3071 = vpop.f32.mrf.mxu0
      %v3072 = vadd.f32 %v289, %v3071
      %v3073 = vpop.f32.mrf.mxu0
      %v3074 = vadd.f32 %v290, %v3073
      %3075 = vmatprep.mubr.bf16.mxu0 %v2915
      %3076 = vmatmul.mubr.bf16.gmra.mxu0 %v2914
      %v3077 = vpop.f32.mrf.mxu0
      %v3078 = vadd.f32 %v297, %v3077
      %v3079 = vpop.f32.mrf.mxu0
      %v3080 = vadd.f32 %v298, %v3079
      %v3081 = vpop.f32.mrf.mxu0
      %v3082 = vadd.f32 %v305, %v3081
      %v3083 = vpop.f32.mrf.mxu0
      %v3084 = vadd.f32 %v306, %v3083
      %3085 = vdwg.mxu0
      %3086 = vmatprep.subr.bf16.mxu0 0
      %3087 = vmatpush1.bf16.msra.mxu0 0
      %3088 = vmatprep.subr.bf16.mxu0 0
      %3089 = vmatpush1.bf16.msra.mxu0 0
      %3090 = vmatprep.subr.bf16.mxu0 0
      %3091 = vmatpush1.bf16.msra.mxu0 0
      %3092 = vmatprep.subr.bf16.mxu0 0
      %3093 = vmatpush1.bf16.msra.mxu0 0
      %3094 = vmatprep.subr.bf16.mxu0 0
      %3095 = vmatpush1.bf16.msra.mxu0 0
      %3096 = vmatprep.subr.bf16.mxu0 0
      %3097 = vmatpush1.bf16.msra.mxu0 0
      %3098 = vmatprep.subr.bf16.mxu0 %v2862
      %3099 = vmatpush1.bf16.msra.mxu0 %v2861
      %3100 = vmatprep.subr.bf16.mxu0 %v2854
      %3101 = vmatpush1.bf16.msra.mxu0 %v2853
      %3102 = vmatprep.subr.bf16.mxu0 0
      %3103 = vmatpush2.bf16.msra.mxu0 0
      %3104 = vmatprep.subr.bf16.mxu0 0
      %3105 = vmatpush2.bf16.msra.mxu0 0
      %3106 = vmatprep.subr.bf16.mxu0 0
      %3107 = vmatpush2.bf16.msra.mxu0 0
      %3108 = vmatprep.subr.bf16.mxu0 0
      %3109 = vmatpush2.bf16.msra.mxu0 0
      %3110 = vmatprep.subr.bf16.mxu0 0
      %3111 = vmatpush2.bf16.msra.mxu0 0
      %3112 = vmatprep.subr.bf16.mxu0 0
      %3113 = vmatpush2.bf16.msra.mxu0 0
      %3114 = vmatprep.subr.bf16.mxu0 0
      %3115 = vmatpush2.bf16.msra.mxu0 0
      %3116 = vmatprep.subr.bf16.mxu0 0
      %3117 = vmatpush2.bf16.msra.mxu0 0
      %3118 = vmatprep.mubr.bf16.mxu0 0
      %3119 = vmatmul.mubr.bf16.gmra.mxu0 %v2922
      %v3120 = vpop.f32.mrf.mxu0
      %v3121 = vadd.f32 %v3068, %v3120
      %v3122 = vpop.f32.mrf.mxu0
      %v3123 = vadd.f32 %v3070, %v3122
      %v3124 = vpop.f32.mrf.mxu0
      %v3125 = vadd.f32 %v3072, %v3124
      %v3126 = vpop.f32.mrf.mxu0
      %v3127 = vadd.f32 %v3074, %v3126
      %3128 = vmatprep.mubr.bf16.mxu0 0
      %3129 = vmatmul.mubr.bf16.gmra.mxu0 %v2925
      %v3130 = vpop.f32.mrf.mxu0
      %v3131 = vadd.f32 %v3078, %v3130
      %v3132 = vpop.f32.mrf.mxu0
      %v3133 = vadd.f32 %v3080, %v3132
      %v3134 = vpop.f32.mrf.mxu0
      %v3135 = vadd.f32 %v3082, %v3134
      %v3136 = vpop.f32.mrf.mxu0
      %v3137 = vadd.f32 %v3084, %v3136
      %3138 = vdwg.mxu0
      %3139 = vmatprep.subr.bf16.mxu0 %v2470
      %3140 = vmatpush1.bf16.msra.mxu0 %v2469
      %3141 = vmatprep.subr.bf16.mxu0 %v2462
      %3142 = vmatpush1.bf16.msra.mxu0 %v2461
      %3143 = vmatprep.subr.bf16.mxu0 %v2384
      %3144 = vmatpush1.bf16.msra.mxu0 %v2383
      %3145 = vmatprep.subr.bf16.mxu0 %v2376
      %3146 = vmatpush1.bf16.msra.mxu0 %v2375
      %3147 = vmatprep.subr.bf16.mxu0 %v2298
      %3148 = vmatpush1.bf16.msra.mxu0 %v2297
      %3149 = vmatprep.subr.bf16.mxu0 %v2290
      %3150 = vmatpush1.bf16.msra.mxu0 %v2289
      %3151 = vmatprep.subr.bf16.mxu0 %v2152
      %3152 = vmatpush1.bf16.msra.mxu0 %v2151
      %3153 = vmatprep.subr.bf16.mxu0 %v2144
      %3154 = vmatpush1.bf16.msra.mxu0 %v2143
      %3155 = vmatprep.subr.bf16.mxu0 %v2778
      %3156 = vmatpush2.bf16.msra.mxu0 %v2777
      %3157 = vmatprep.subr.bf16.mxu0 %v2770
      %3158 = vmatpush2.bf16.msra.mxu0 %v2769
      %3159 = vmatprep.subr.bf16.mxu0 %v2710
      %3160 = vmatpush2.bf16.msra.mxu0 %v2709
      %3161 = vmatprep.subr.bf16.mxu0 %v2702
      %3162 = vmatpush2.bf16.msra.mxu0 %v2701
      %3163 = vmatprep.subr.bf16.mxu0 %v2624
      %3164 = vmatpush2.bf16.msra.mxu0 %v2623
      %3165 = vmatprep.subr.bf16.mxu0 %v2616
      %3166 = vmatpush2.bf16.msra.mxu0 %v2615
      %3167 = vmatprep.subr.bf16.mxu0 %v2538
      %3168 = vmatpush2.bf16.msra.mxu0 %v2537
      %3169 = vmatprep.subr.bf16.mxu0 %v2530
      %3170 = vmatpush2.bf16.msra.mxu0 %v2529
      %3171 = vmatprep.mubr.bf16.mxu0 %v2912
      %3172 = vmatmul.mubr.bf16.gmra.mxu0 %v2911
      %v3173 = vpop.f32.mrf.mxu0
      %v3174 = vadd.f32 %v283, %v3173
      %v3175 = vpop.f32.mrf.mxu0
      %v3176 = vadd.f32 %v284, %v3175
      %v3177 = vpop.f32.mrf.mxu0
      %v3178 = vadd.f32 %v291, %v3177
      %v3179 = vpop.f32.mrf.mxu0
      %v3180 = vadd.f32 %v292, %v3179
      %3181 = vmatprep.mubr.bf16.mxu0 %v2915
      %3182 = vmatmul.mubr.bf16.gmra.mxu0 %v2914
      %v3183 = vpop.f32.mrf.mxu0
      %v3184 = vadd.f32 %v299, %v3183
      %v3185 = vpop.f32.mrf.mxu0
      %v3186 = vadd.f32 %v300, %v3185
      %v3187 = vpop.f32.mrf.mxu0
      %v3188 = vadd.f32 %v307, %v3187
      %v3189 = vpop.f32.mrf.mxu0
      %v3190 = vadd.f32 %v308, %v3189
      %3191 = vdwg.mxu0
      %3192 = vmatprep.subr.bf16.mxu0 0
      %3193 = vmatpush1.bf16.msra.mxu0 0
      %3194 = vmatprep.subr.bf16.mxu0 0
      %3195 = vmatpush1.bf16.msra.mxu0 0
      %3196 = vmatprep.subr.bf16.mxu0 0
      %3197 = vmatpush1.bf16.msra.mxu0 0
      %3198 = vmatprep.subr.bf16.mxu0 0
      %3199 = vmatpush1.bf16.msra.mxu0 0
      %3200 = vmatprep.subr.bf16.mxu0 0
      %3201 = vmatpush1.bf16.msra.mxu0 0
      %3202 = vmatprep.subr.bf16.mxu0 0
      %3203 = vmatpush1.bf16.msra.mxu0 0
      %3204 = vmatprep.subr.bf16.mxu0 %v2864
      %3205 = vmatpush1.bf16.msra.mxu0 %v2863
      %3206 = vmatprep.subr.bf16.mxu0 %v2856
      %3207 = vmatpush1.bf16.msra.mxu0 %v2855
      %3208 = vmatprep.subr.bf16.mxu0 0
      %3209 = vmatpush2.bf16.msra.mxu0 0
      %3210 = vmatprep.subr.bf16.mxu0 0
      %3211 = vmatpush2.bf16.msra.mxu0 0
      %3212 = vmatprep.subr.bf16.mxu0 0
      %3213 = vmatpush2.bf16.msra.mxu0 0
      %3214 = vmatprep.subr.bf16.mxu0 0
      %3215 = vmatpush2.bf16.msra.mxu0 0
      %3216 = vmatprep.subr.bf16.mxu0 0
      %3217 = vmatpush2.bf16.msra.mxu0 0
      %3218 = vmatprep.subr.bf16.mxu0 0
      %3219 = vmatpush2.bf16.msra.mxu0 0
      %3220 = vmatprep.subr.bf16.mxu0 0
      %3221 = vmatpush2.bf16.msra.mxu0 0
      %3222 = vmatprep.subr.bf16.mxu0 0
      %3223 = vmatpush2.bf16.msra.mxu0 0
      %3224 = vmatprep.mubr.bf16.mxu0 0
      %3225 = vmatmul.mubr.bf16.gmra.mxu0 %v2922
      %v3226 = vpop.f32.mrf.mxu0
      %v3227 = vadd.f32 %v3174, %v3226
      %v3228 = vpop.f32.mrf.mxu0
      %v3229 = vadd.f32 %v3176, %v3228
      %v3230 = vpop.f32.mrf.mxu0
      %v3231 = vadd.f32 %v3178, %v3230
      %v3232 = vpop.f32.mrf.mxu0
      %v3233 = vadd.f32 %v3180, %v3232
      %3234 = vmatprep.mubr.bf16.mxu0 0
      %3235 = vmatmul.mubr.bf16.gmra.mxu0 %v2925
      %v3236 = vpop.f32.mrf.mxu0
      %v3237 = vadd.f32 %v3184, %v3236
      %v3238 = vpop.f32.mrf.mxu0
      %v3239 = vadd.f32 %v3186, %v3238
      %v3240 = vpop.f32.mrf.mxu0
      %v3241 = vadd.f32 %v3188, %v3240
      %v3242 = vpop.f32.mrf.mxu0
      %v3243 = vadd.f32 %v3190, %v3242
      %3244 = vdwg.mxu0
      %3245 = vmatprep.subr.bf16.mxu0 %v2472
      %3246 = vmatpush1.bf16.msra.mxu0 %v2471
      %3247 = vmatprep.subr.bf16.mxu0 %v2464
      %3248 = vmatpush1.bf16.msra.mxu0 %v2463
      %3249 = vmatprep.subr.bf16.mxu0 %v2386
      %3250 = vmatpush1.bf16.msra.mxu0 %v2385
      %3251 = vmatprep.subr.bf16.mxu0 %v2378
      %3252 = vmatpush1.bf16.msra.mxu0 %v2377
      %3253 = vmatprep.subr.bf16.mxu0 %v2300
      %3254 = vmatpush1.bf16.msra.mxu0 %v2299
      %3255 = vmatprep.subr.bf16.mxu0 %v2292
      %3256 = vmatpush1.bf16.msra.mxu0 %v2291
      %3257 = vmatprep.subr.bf16.mxu0 %v2154
      %3258 = vmatpush1.bf16.msra.mxu0 %v2153
      %3259 = vmatprep.subr.bf16.mxu0 %v2146
      %3260 = vmatpush1.bf16.msra.mxu0 %v2145
      %3261 = vmatprep.subr.bf16.mxu0 %v2780
      %3262 = vmatpush2.bf16.msra.mxu0 %v2779
      %3263 = vmatprep.subr.bf16.mxu0 %v2772
      %3264 = vmatpush2.bf16.msra.mxu0 %v2771
      %3265 = vmatprep.subr.bf16.mxu0 %v2712
      %3266 = vmatpush2.bf16.msra.mxu0 %v2711
      %3267 = vmatprep.subr.bf16.mxu0 %v2704
      %3268 = vmatpush2.bf16.msra.mxu0 %v2703
      %3269 = vmatprep.subr.bf16.mxu0 %v2626
      %3270 = vmatpush2.bf16.msra.mxu0 %v2625
      %3271 = vmatprep.subr.bf16.mxu0 %v2618
      %3272 = vmatpush2.bf16.msra.mxu0 %v2617
      %3273 = vmatprep.subr.bf16.mxu0 %v2540
      %3274 = vmatpush2.bf16.msra.mxu0 %v2539
      %3275 = vmatprep.subr.bf16.mxu0 %v2532
      %3276 = vmatpush2.bf16.msra.mxu0 %v2531
      %3277 = vmatprep.mubr.bf16.mxu0 %v2912
      %3278 = vmatmul.mubr.bf16.gmra.mxu0 %v2911
      %v3279 = vpop.f32.mrf.mxu0
      %v3280 = vadd.f32 %v285, %v3279
      %v3281 = vpop.f32.mrf.mxu0
      %v3282 = vadd.f32 %v286, %v3281
      %v3283 = vpop.f32.mrf.mxu0
      %v3284 = vadd.f32 %v293, %v3283
      %v3285 = vpop.f32.mrf.mxu0
      %v3286 = vadd.f32 %v294, %v3285
      %3287 = vmatprep.mubr.bf16.mxu0 %v2915
      %3288 = vmatmul.mubr.bf16.gmra.mxu0 %v2914
      %v3289 = vpop.f32.mrf.mxu0
      %v3290 = vadd.f32 %v301, %v3289
      %v3291 = vpop.f32.mrf.mxu0
      %v3292 = vadd.f32 %v302, %v3291
      %v3293 = vpop.f32.mrf.mxu0
      %v3294 = vadd.f32 %v309, %v3293
      %v3295 = vpop.f32.mrf.mxu0
      %v3296 = vadd.f32 %v310, %v3295
      %3297 = vdwg.mxu0
      %3298 = vmatprep.subr.bf16.mxu0 0
      %3299 = vmatpush1.bf16.msra.mxu0 0
      %3300 = vmatprep.subr.bf16.mxu0 0
      %3301 = vmatpush1.bf16.msra.mxu0 0
      %3302 = vmatprep.subr.bf16.mxu0 0
      %3303 = vmatpush1.bf16.msra.mxu0 0
      %3304 = vmatprep.subr.bf16.mxu0 0
      %3305 = vmatpush1.bf16.msra.mxu0 0
      %3306 = vmatprep.subr.bf16.mxu0 0
      %3307 = vmatpush1.bf16.msra.mxu0 0
      %3308 = vmatprep.subr.bf16.mxu0 0
      %3309 = vmatpush1.bf16.msra.mxu0 0
      %3310 = vmatprep.subr.bf16.mxu0 %v2866
      %3311 = vmatpush1.bf16.msra.mxu0 %v2865
      %3312 = vmatprep.subr.bf16.mxu0 %v2858
      %3313 = vmatpush1.bf16.msra.mxu0 %v2857
      %3314 = vmatprep.subr.bf16.mxu0 0
      %3315 = vmatpush2.bf16.msra.mxu0 0
      %3316 = vmatprep.subr.bf16.mxu0 0
      %3317 = vmatpush2.bf16.msra.mxu0 0
      %3318 = vmatprep.subr.bf16.mxu0 0
      %3319 = vmatpush2.bf16.msra.mxu0 0
      %3320 = vmatprep.subr.bf16.mxu0 0
      %3321 = vmatpush2.bf16.msra.mxu0 0
      %3322 = vmatprep.subr.bf16.mxu0 0
      %3323 = vmatpush2.bf16.msra.mxu0 0
      %3324 = vmatprep.subr.bf16.mxu0 0
      %3325 = vmatpush2.bf16.msra.mxu0 0
      %3326 = vmatprep.subr.bf16.mxu0 0
      %3327 = vmatpush2.bf16.msra.mxu0 0
      %3328 = vmatprep.subr.bf16.mxu0 0
      %3329 = vmatpush2.bf16.msra.mxu0 0
      %3330 = vmatprep.mubr.bf16.mxu0 0
      %3331 = vmatmul.mubr.bf16.gmra.mxu0 %v2922
      %v3332 = vpop.f32.mrf.mxu0
      %v3333 = vadd.f32 %v3280, %v3332
      %v3334 = vpop.f32.mrf.mxu0
      %v3335 = vadd.f32 %v3282, %v3334
      %v3336 = vpop.f32.mrf.mxu0
      %v3337 = vadd.f32 %v3284, %v3336
      %v3338 = vpop.f32.mrf.mxu0
      %v3339 = vadd.f32 %v3286, %v3338
      %3340 = vmatprep.mubr.bf16.mxu0 0
      %3341 = vmatmul.mubr.bf16.gmra.mxu0 %v2925
      %v3342 = vpop.f32.mrf.mxu0
      %v3343 = vadd.f32 %v3290, %v3342
      %v3344 = vpop.f32.mrf.mxu0
      %v3345 = vadd.f32 %v3292, %v3344
      %v3346 = vpop.f32.mrf.mxu0
      %v3347 = vadd.f32 %v3294, %v3346
      %v3348 = vpop.f32.mrf.mxu0
      %v3349 = vadd.f32 %v3296, %v3348
      %3350 = vdwg.mxu0
      %vm3351 = vcmp.ge.f32.partialorder %v3015, 0.0
      %vm3352 = vcmp.ge.f32.partialorder %v3017, 0.0
      %vm3353 = vcmp.ge.f32.partialorder %v3121, 0.0
      %vm3354 = vcmp.ge.f32.partialorder %v3123, 0.0
      %vm3355 = vcmp.ge.f32.partialorder %v3227, 0.0
      %vm3356 = vcmp.ge.f32.partialorder %v3229, 0.0
      %vm3357 = vcmp.ge.f32.partialorder %v3333, 0.0
      %vm3358 = vcmp.ge.f32.partialorder %v3335, 0.0
      %vm3359 = vcmp.ge.f32.partialorder %v3019, 0.0
      %vm3360 = vcmp.ge.f32.partialorder %v3021, 0.0
      %vm3361 = vcmp.ge.f32.partialorder %v3125, 0.0
      %vm3362 = vcmp.ge.f32.partialorder %v3127, 0.0
      %vm3363 = vcmp.ge.f32.partialorder %v3231, 0.0
      %vm3364 = vcmp.ge.f32.partialorder %v3233, 0.0
      %vm3365 = vcmp.ge.f32.partialorder %v3337, 0.0
      %vm3366 = vcmp.ge.f32.partialorder %v3339, 0.0
      %vm3367 = vcmp.ge.f32.partialorder %v3025, 0.0
      %vm3368 = vcmp.ge.f32.partialorder %v3027, 0.0
      %vm3369 = vcmp.ge.f32.partialorder %v3131, 0.0
      %vm3370 = vcmp.ge.f32.partialorder %v3133, 0.0
      %vm3371 = vcmp.ge.f32.partialorder %v3237, 0.0
      %vm3372 = vcmp.ge.f32.partialorder %v3239, 0.0
      %vm3373 = vcmp.ge.f32.partialorder %v3343, 0.0
      %vm3374 = vcmp.ge.f32.partialorder %v3345, 0.0
      %vm3375 = vcmp.ge.f32.partialorder %v3029, 0.0
      %vm3376 = vcmp.ge.f32.partialorder %v3031, 0.0
      %vm3377 = vcmp.ge.f32.partialorder %v3135, 0.0
      %vm3378 = vcmp.ge.f32.partialorder %v3137, 0.0
      %vm3379 = vcmp.ge.f32.partialorder %v3241, 0.0
      %vm3380 = vcmp.ge.f32.partialorder %v3243, 0.0
      %vm3381 = vcmp.ge.f32.partialorder %v3347, 0.0
      %vm3382 = vcmp.ge.f32.partialorder %v3349, 0.0
      %v3383 = vmul.f32 %v3015, 0.1
      %v3384 = vmul.f32 %v3017, 0.1
      %v3385 = vmul.f32 %v3121, 0.1
      %v3386 = vmul.f32 %v3123, 0.1
      %v3387 = vmul.f32 %v3227, 0.1
      %v3388 = vmul.f32 %v3229, 0.1
      %v3389 = vmul.f32 %v3333, 0.1
      %v3390 = vmul.f32 %v3335, 0.1
      %v3391 = vmul.f32 %v3019, 0.1
      %v3392 = vmul.f32 %v3021, 0.1
      %v3393 = vmul.f32 %v3125, 0.1
      %v3394 = vmul.f32 %v3127, 0.1
      %v3395 = vmul.f32 %v3231, 0.1
      %v3396 = vmul.f32 %v3233, 0.1
      %v3397 = vmul.f32 %v3337, 0.1
      %v3398 = vmul.f32 %v3339, 0.1
      %v3399 = vmul.f32 %v3025, 0.1
      %v3400 = vmul.f32 %v3027, 0.1
      %v3401 = vmul.f32 %v3131, 0.1
      %v3402 = vmul.f32 %v3133, 0.1
      %v3403 = vmul.f32 %v3237, 0.1
      %v3404 = vmul.f32 %v3239, 0.1
      %v3405 = vmul.f32 %v3343, 0.1
      %v3406 = vmul.f32 %v3345, 0.1
      %v3407 = vmul.f32 %v3029, 0.1
      %v3408 = vmul.f32 %v3031, 0.1
      %v3409 = vmul.f32 %v3135, 0.1
      %v3410 = vmul.f32 %v3137, 0.1
      %v3411 = vmul.f32 %v3241, 0.1
      %v3412 = vmul.f32 %v3243, 0.1
      %v3413 = vmul.f32 %v3347, 0.1
      %v3414 = vmul.f32 %v3349, 0.1
      %v3415 = vsel %vm3351, %v3015, %v3383
      %v3416 = vsel %vm3352, %v3017, %v3384
      %v3417 = vsel %vm3353, %v3121, %v3385
      %v3418 = vsel %vm3354, %v3123, %v3386
      %v3419 = vsel %vm3355, %v3227, %v3387
      %v3420 = vsel %vm3356, %v3229, %v3388
      %v3421 = vsel %vm3357, %v3333, %v3389
      %v3422 = vsel %vm3358, %v3335, %v3390
      %v3423 = vsel %vm3359, %v3019, %v3391
      %v3424 = vsel %vm3360, %v3021, %v3392
      %v3425 = vsel %vm3361, %v3125, %v3393
      %v3426 = vsel %vm3362, %v3127, %v3394
      %v3427 = vsel %vm3363, %v3231, %v3395
      %v3428 = vsel %vm3364, %v3233, %v3396
      %v3429 = vsel %vm3365, %v3337, %v3397
      %v3430 = vsel %vm3366, %v3339, %v3398
      %v3431 = vsel %vm3367, %v3025, %v3399
      %v3432 = vsel %vm3368, %v3027, %v3400
      %v3433 = vsel %vm3369, %v3131, %v3401
      %v3434 = vsel %vm3370, %v3133, %v3402
      %v3435 = vsel %vm3371, %v3237, %v3403
      %v3436 = vsel %vm3372, %v3239, %v3404
      %v3437 = vsel %vm3373, %v3343, %v3405
      %v3438 = vsel %vm3374, %v3345, %v3406
      %v3439 = vsel %vm3375, %v3029, %v3407
      %v3440 = vsel %vm3376, %v3031, %v3408
      %v3441 = vsel %vm3377, %v3135, %v3409
      %v3442 = vsel %vm3378, %v3137, %v3410
      %v3443 = vsel %vm3379, %v3241, %v3411
      %v3444 = vsel %vm3380, %v3243, %v3412
      %v3445 = vsel %vm3381, %v3347, %v3413
      %v3446 = vsel %vm3382, %v3349, %v3414
      %3447 = vst [vmem:[%s170] sm:$0xff] %v3415
      %3448 = vst [vmem:[%s170 + $0x8] sm:$0xff] %v3416
      %3449 = vst [vmem:[%s170 + $0x10] sm:$0xff] %v3417
      %3450 = vst [vmem:[%s170 + $0x18] sm:$0xff] %v3418
      %3451 = vst [vmem:[%s170 + $0x20] sm:$0xff] %v3419
      %3452 = vst [vmem:[%s170 + $0x28] sm:$0xff] %v3420
      %3453 = vst [vmem:[%s170 + $0x30] sm:$0xff] %v3421
      %3454 = vst [vmem:[%s170 + $0x38] sm:$0xff] %v3422
      %3455 = vst [vmem:[%s170 + $0x40] sm:$0xff] %v3423
      %3456 = vst [vmem:[%s170 + $0x48] sm:$0xff] %v3424
      %3457 = vst [vmem:[%s170 + $0x50] sm:$0xff] %v3425
      %3458 = vst [vmem:[%s170 + $0x58] sm:$0xff] %v3426
      %3459 = vst [vmem:[%s170 + $0x60] sm:$0xff] %v3427
      %3460 = vst [vmem:[%s170 + $0x68] sm:$0xff] %v3428
      %3461 = vst [vmem:[%s170 + $0x70] sm:$0xff] %v3429
      %3462 = vst [vmem:[%s170 + $0x78] sm:$0xff] %v3430
      %3463 = vst [vmem:[%s170 + $0x80] sm:$0xff] %v3431
      %3464 = vst [vmem:[%s170 + $0x88] sm:$0xff] %v3432
      %3465 = vst [vmem:[%s170 + $0x90] sm:$0xff] %v3433
      %3466 = vst [vmem:[%s170 + $0x98] sm:$0xff] %v3434
      %3467 = vst [vmem:[%s170 + $0xa0] sm:$0xff] %v3435
      %3468 = vst [vmem:[%s170 + $0xa8] sm:$0xff] %v3436
      %3469 = vst [vmem:[%s170 + $0xb0] sm:$0xff] %v3437
      %3470 = vst [vmem:[%s170 + $0xb8] sm:$0xff] %v3438
      %3471 = vst [vmem:[%s170 + $0xc0] sm:$0xff] %v3439
      %3472 = vst [vmem:[%s170 + $0xc8] sm:$0xff] %v3440
      %3473 = vst [vmem:[%s170 + $0xd0] sm:$0xff] %v3441
      %3474 = vst [vmem:[%s170 + $0xd8] sm:$0xff] %v3442
      %3475 = vst [vmem:[%s170 + $0xe0] sm:$0xff] %v3443
      %3476 = vst [vmem:[%s170 + $0xe8] sm:$0xff] %v3444
      %3477 = vst [vmem:[%s170 + $0xf0] sm:$0xff] %v3445
      %3478 = vst [vmem:[%s170 + $0xf8] sm:$0xff] %v3446
      %p3479 = scmp.lt.s32.totalorder %s14, 1
      %s3480 = scalar_select %p3479, %s14, 1
      %s3481 = smul.addr %s3480, 32
      %s3482 = smul.addr %s3481, 8
      %s3483 = scalar_lea.vmem %s3, %s3482
      // Predicated region
      $region33: #{resblock_forward.1} parent=31 // pred_check
        %p3484 = pneg %p100
      $region34: #{resblock_forward.1} parent=31 // pred_check_branch
        %3486 = sbr.rel (%p3484) target = $region36
      $region35: #{resblock_forward.1} parent=31 // pred_region
        _
      $region36: #{resblock_forward.1} parent=31 // pred_fallthru
        _
    $region32: #{resblock_forward.1} parent=5 // pred_fallthru
      _
    %p3487 = scmp.le.s32.totalorder 2, %s9
    // Predicated region
    $region37: #{resblock_forward.1} parent=5 // pred_check
      %p3488 = pneg %p3487
    $region38: #{resblock_forward.1} parent=5 // pred_check_branch
      %3490 = sbr.rel (%p3488) target = $region40
    $region39: #{resblock_forward.1} parent=5 // pred_region
      %s3491 = ssub.s32 %s9, 2
      // Predicated region
      $region41: #{resblock_forward.1} parent=39 // pred_check
        %p3492 = pneg %p106
      $region42: #{resblock_forward.1} parent=39 // pred_check_branch
        %3494 = sbr.rel (%p3492) target = $region44
      $region43: #{resblock_forward.1} parent=39 // pred_region
        %p3495 = scmp.lt.s32.totalorder %s15, 1
        %s3496 = scalar_select %p3495, %s15, 1
        %s3497 = smul.addr %s3496, 32
        %s3498 = smul.addr %s3497, 8
        %s3499 = scalar_lea.vmem %s3, %s3498
      $region44: #{resblock_forward.1} parent=39 // pred_fallthru
        _
    $region40: #{resblock_forward.1} parent=5 // pred_fallthru
      _
  $region6: #{resblock_forward.1} parent=0 // loop_footer
    %s13 = sadd.s32 1, %s9
  $region7: #{resblock_forward.1} parent=0 // loop_footer_branch
    %8 = sbr.rel target = $region3
  $region8: #{resblock_forward.1} parent=0 // loop_exit
    _

</llo_original>
